<compile_context>
chip_gen: v5e
topology: v5e:2x2
jax: 0.10.0
libtpu: 0.0.40
codegen_flags: <defaults>
</compile_context>

<pallas_src>
from functools import partial

import jax
import jax.numpy as jnp
from jax import lax
from jax.experimental import pallas as pl
from jax.experimental.pallas import tpu as pltpu


# ---------------------------------------------------------------------------
# Fused kernel
# ---------------------------------------------------------------------------
def _dense_layer_kernel(x_ref, s1_ref, b1_ref, w1_ref, s2_ref, b2_ref, w2_ref,
                        o_ref, acc_ref, zpad_ref, wide_ref, oacc_ref,
                        *, H, W, Cmid, Cout):
    """BN1+ReLU+conv1x1 (Cin-blocked) fused with BN2+ReLU+conv3x3(pad=1)."""
    k = pl.program_id(1)
    nk = pl.num_programs(1)

    # ---------------- stage 1: BN1 + ReLU + 1x1 conv, accumulate over Cin ----
    @pl.when(k == 0)
    def _init():
        acc_ref[...] = jnp.zeros_like(acc_ref)

    ck = x_ref.shape[-1]                          # current Cin block width
    x = x_ref[...].reshape(H * W, ck)
    y = jnp.maximum(x * s1_ref[...] + b1_ref[...], 0.0)          # f32 elementwise
    acc_ref[...] += jnp.dot(y.astype(jnp.bfloat16), w1_ref[...],
                            preferred_element_type=jnp.float32)

    # ---------------- stage 2 (last Cin block): BN2 + ReLU + 3x3 conv --------
    @pl.when(k == nk - 1)
    def _finalize():
        z = jnp.maximum(acc_ref[...] * s2_ref[...] + b2_ref[...], 0.0)
        z3 = z.astype(jnp.bfloat16).reshape(H, W, Cmid)

        # W-padded activation; only the 2 halo columns are zeroed.
        zcol = jnp.zeros((H, 1, Cmid), jnp.bfloat16)
        zpad_ref[:, 1:W + 1, :] = z3
        zpad_ref[:, 0:1, :] = zcol
        zpad_ref[:, W + 1:W + 2, :] = zcol

        # dx-concatenated patch: wide[h, w, d*Cmid + c] = z[h, w + d - 1, c]
        wide = jnp.concatenate(
            [zpad_ref[:, 0:W, :], z3, zpad_ref[:, 2:W + 2, :]], axis=-1)

        # H-padded wide buffer; only the 2 halo rows are zeroed.
        zrow = jnp.zeros((1, W, 3 * Cmid), jnp.bfloat16)
        wide_ref[1:H + 1] = wide
        wide_ref[0:1] = zrow
        wide_ref[H + 1:H + 2] = zrow

        # 3 wide-K matmuls (K = 3*Cmid), one per dy tap row; each dy patch is a
        # leading-axis offset read of the resident wide buffer (no per-tap
        # misaligned slice copies).  Explicit f32 accumulator scratch.
        for dy in range(3):                       # static unroll
            patch = wide_ref[dy:dy + H].reshape(H * W, 3 * Cmid)
            part = jnp.dot(patch, w2_ref[dy], preferred_element_type=jnp.float32)
            if dy == 0:
                oacc_ref[...] = part
            else:
                oacc_ref[...] += part

        o_ref[...] = oacc_ref[...].reshape(1, H, W, Cout).astype(o_ref.dtype)


# ---------------------------------------------------------------------------
# Wrapper
# ---------------------------------------------------------------------------
def _choose_cin_block(cin, max_block=512):
    """Bound the stage-1 K block as Cin grows across DenseNet layers."""
    if cin <= max_block:
        return cin
    for blk in range(max_block, 127, -128):       # multiples of 128
        if cin % blk == 0:
            return blk
    return cin


def dense_layer_forward(inputs, params):
    """Matches _DenseLayer.forward: accepts a Tensor or a list of Tensors (NCHW)."""
    if not isinstance(inputs, (list, tuple)):
        inputs = [inputs]
    x = jnp.concatenate(inputs, axis=1)            # torch.cat(inputs, 1), NCHW
    N, Cin, H, W = x.shape
    Cmid = params["w1"].shape[1]
    Cout = params["w2_taps"].shape[-1]

    x_nhwc = jnp.transpose(x, (0, 2, 3, 1))        # NCHW -> NHWC

    ck = _choose_cin_block(Cin)
    nk = Cin // ck

    grid_spec = pltpu.PrefetchScalarGridSpec(
        num_scalar_prefetch=0,
        grid=(N, nk),                              # batch parallel, Cin reduction last
        in_specs=[
            pl.BlockSpec((1, H, W, ck), lambda n, k: (n, 0, 0, k)),     # x
            pl.BlockSpec((1, ck), lambda n, k: (0, k)),                 # scale1
            pl.BlockSpec((1, ck), lambda n, k: (0, k)),                 # bias1
            pl.BlockSpec((ck, Cmid), lambda n, k: (k, 0)),              # w1
            pl.BlockSpec((1, Cmid), lambda n, k: (0, 0)),               # scale2
            pl.BlockSpec((1, Cmid), lambda n, k: (0, 0)),               # bias2
            pl.BlockSpec((3, 3 * Cmid, Cout), lambda n, k: (0, 0, 0)),  # w2 taps
        ],
        out_specs=pl.BlockSpec((1, H, W, Cout), lambda n, k: (n, 0, 0, 0)),
        scratch_shapes=[
            pltpu.VMEM((H * W, Cmid), jnp.float32),            # bottleneck accumulator
            pltpu.VMEM((H, W + 2, Cmid), jnp.bfloat16),        # W-padded activation
            pltpu.VMEM((H + 2, W, 3 * Cmid), jnp.bfloat16),    # H-padded dx-concat patch
            pltpu.VMEM((H * W, Cout), jnp.float32),            # output accumulator
        ],
    )

    out_nhwc = pl.pallas_call(
        partial(_dense_layer_kernel, H=H, W=W, Cmid=Cmid, Cout=Cout),
        out_shape=jax.ShapeDtypeStruct((N, H, W, Cout), jnp.float32),
        grid_spec=grid_spec,
        compiler_params=pltpu.CompilerParams(
            dimension_semantics=("parallel", "arbitrary"),
            vmem_limit_bytes=64 * 1024 * 1024,
        ),
    )(x_nhwc,
      params["scale1"].reshape(1, Cin),
      params["bias1"].reshape(1, Cin),
      params["w1"],
      params["scale2"].reshape(1, Cmid),
      params["bias2"].reshape(1, Cmid),
      params["w2_taps"])

    return jnp.transpose(out_nhwc, (0, 3, 1, 2))   # NHWC -> NCHW


# ---------------------------------------------------------------------------
# Deterministic parameter construction (synthetic, mirrors __init__ shapes)
# ---------------------------------------------------------------------------
def init_params(key, num_input_features, growth_rate, bn_size, eps=1e-5):
    Cin = num_input_features
    Cmid = bn_size * growth_rate
    Cout = growth_rate
    ks = jax.random.split(key, 10)

    # BatchNorm2d(num_input_features), eval-mode folded scale/bias
    gamma1 = jax.random.uniform(ks[0], (Cin,), jnp.float32, 0.5, 1.5)
    beta1 = 0.1 * jax.random.normal(ks[1], (Cin,), jnp.float32)
    mean1 = 0.1 * jax.random.normal(ks[2], (Cin,), jnp.float32)
    var1 = jax.random.uniform(ks[3], (Cin,), jnp.float32, 0.5, 1.5)
    scale1 = gamma1 / jnp.sqrt(var1 + eps)
    bias1 = beta1 - mean1 * scale1

    # BatchNorm2d(bn_size * growth_rate)
    gamma2 = jax.random.uniform(ks[4], (Cmid,), jnp.float32, 0.5, 1.5)
    beta2 = 0.1 * jax.random.normal(ks[5], (Cmid,), jnp.float32)
    mean2 = 0.1 * jax.random.normal(ks[6], (Cmid,), jnp.float32)
    var2 = jax.random.uniform(ks[7], (Cmid,), jnp.float32, 0.5, 1.5)
    scale2 = gamma2 / jnp.sqrt(var2 + eps)
    bias2 = beta2 - mean2 * scale2

    # conv1: PyTorch weight (Cmid, Cin, 1, 1), no bias -> stored (Cin, Cmid), bf16 for MXU
    w1 = (0.1 * jax.random.normal(ks[8], (Cin, Cmid), jnp.float32)).astype(jnp.bfloat16)
    # conv2: PyTorch weight (Cout, Cmid, 3, 3), no bias -> HWIO (3,3,Cmid,Cout), bf16
    w2_hwio_bf16 = (0.1 * jax.random.normal(ks[9], (3, 3, Cmid, Cout), jnp.float32)
                    ).astype(jnp.bfloat16)

    return dict(
        scale1=scale1, bias1=bias1, w1=w1,
        scale2=scale2, bias2=bias2,
        # f32 copy of the (bf16-rounded) 3x3 weight, used by the reference conv.
        w2_hwio=w2_hwio_bf16.astype(jnp.float32),
        # kernel layout: (ky, kx*Cmid + ci, co) — 3 wide-K taps.
        w2_taps=w2_hwio_bf16.reshape(3, 3 * Cmid, Cout),
    )


# ---------------------------------------------------------------------------
# Plain-JAX reference (for correctness check only)
# ---------------------------------------------------------------------------
def reference_forward(inputs, params):
    if not isinstance(inputs, (list, tuple)):
        inputs = [inputs]
    x = jnp.concatenate(inputs, axis=1)  # NCHW
    s1 = params["scale1"][None, :, None, None]
    b1 = params["bias1"][None, :, None, None]
    y = jnp.maximum(x * s1 + b1, 0.0)
    w1_oihw = jnp.transpose(params["w1"].astype(jnp.float32), (1, 0))[:, :, None, None]
    bott = lax.conv_general_dilated(y, w1_oihw, (1, 1), "VALID",
                                    dimension_numbers=("NCHW", "OIHW", "NCHW"))
    s2 = params["scale2"][None, :, None, None]
    b2 = params["bias2"][None, :, None, None]
    z = jnp.maximum(bott * s2 + b2, 0.0)
    w2_oihw = jnp.transpose(params["w2_hwio"], (3, 2, 0, 1))          # (Cout,Cmid,3,3)
    out = lax.conv_general_dilated(z, w2_oihw, (1, 1), [(1, 1), (1, 1)],
                                   dimension_numbers=("NCHW", "OIHW", "NCHW"))
    return out


if __name__ == "__main__":
    # _DenseLayer(num_input_features=8, growth_rate=8, bn_size=4, drop_rate=0.0)
    num_input_features, growth_rate, bn_size = 8, 8, 4
    N, H, W = 2, 16, 16

    key = jax.random.PRNGKey(0)
    k_x1, k_x2, k_p = jax.random.split(key, 3)
    # exercise the list-input (torch.cat) path: two prev-feature maps of 4 ch each
    x1 = jax.random.normal(k_x1, (N, 4, H, W), jnp.float32)
    x2 = jax.random.normal(k_x2, (N, 4, H, W), jnp.float32)

    params = init_params(k_p, num_input_features, growth_rate, bn_size)

    out = jax.block_until_ready(dense_layer_forward([x1, x2], params))
    ref = jax.block_until_ready(reference_forward([x1, x2], params))

    assert out.shape == (N, growth_rate, H, W), out.shape
    max_err = float(jnp.max(jnp.abs(out - ref)))
    assert jnp.allclose(out, ref, atol=2e-2, rtol=2e-2), f"mismatch vs ref, max_err={max_err}"

    print("KERNEL_OK")
</pallas_src>

<mosaic_0001>
module attributes {stable_mosaic.version = 11 : i64} {
  func.func @_dense_layer_kernel(%arg0: i32, %arg1: i32, %arg2: memref<1x16x16x8xf32, #tpu.memory_space<vmem>>, %arg3: memref<1x8xf32, #tpu.memory_space<vmem>>, %arg4: memref<1x8xf32, #tpu.memory_space<vmem>>, %arg5: memref<8x32xbf16, #tpu.memory_space<vmem>>, %arg6: memref<1x32xf32, #tpu.memory_space<vmem>>, %arg7: memref<1x32xf32, #tpu.memory_space<vmem>>, %arg8: memref<3x96x8xbf16, #tpu.memory_space<vmem>>, %arg9: memref<1x16x16x8xf32, #tpu.memory_space<vmem>>, %arg10: memref<256x32xf32, #tpu.memory_space<vmem>>, %arg11: memref<16x18x32xbf16, #tpu.memory_space<vmem>>, %arg12: memref<18x16x96xbf16, #tpu.memory_space<vmem>>, %arg13: memref<256x8xf32, #tpu.memory_space<vmem>>) attributes {dimension_semantics = [#tpu.dimension_semantics<parallel>, #tpu.dimension_semantics<arbitrary>], iteration_bounds = array<i64: 2, 1>, scalar_prefetch = 0 : i64, scratch_operands = 4 : i64, tpu.core_type = #tpu.core_type<tc>, window_params = [{transform_indices = @transform_0, window_bounds = array<i64: 1, 16, 16, 8>}, {transform_indices = @transform_1, window_bounds = array<i64: 1, 8>}, {transform_indices = @transform_2, window_bounds = array<i64: 1, 8>}, {transform_indices = @transform_3, window_bounds = array<i64: 8, 32>}, {pipeline_mode = #tpu.pipeline_mode<synchronous>, transform_indices = @transform_4, window_bounds = array<i64: 1, 32>}, {pipeline_mode = #tpu.pipeline_mode<synchronous>, transform_indices = @transform_5, window_bounds = array<i64: 1, 32>}, {pipeline_mode = #tpu.pipeline_mode<synchronous>, transform_indices = @transform_6, window_bounds = array<i64: 3, 96, 8>}, {transform_indices = @transform_7, window_bounds = array<i64: 1, 16, 16, 8>}]} {
    %c0_i32 = arith.constant 0 : i32
    %0 = arith.cmpi eq, %arg1, %c0_i32 : i32
    %1 = arith.extui %0 : i1 to i32
    %c0_i32_0 = arith.constant 0 : i32
    %2 = arith.cmpi ne, %1, %c0_i32_0 : i32
    scf.if %2 {
      %cst_17 = arith.constant 0.000000e+00 : f32
      %22 = vector.broadcast %cst_17 : f32 to vector<256x32xf32>
      %c0_18 = arith.constant 0 : index
      %c0_19 = arith.constant 0 : index
      %23 = vector.load %arg10[%c0_18, %c0_19] : memref<256x32xf32, #tpu.memory_space<vmem>>, vector<256x32xf32>
      tpu.vector_store %arg10[%c0_18, %c0_19], %22 {strides = array<i32>} : memref<256x32xf32, #tpu.memory_space<vmem>>, vector<256x32xf32>,
    } else {
    }
    %c0 = arith.constant 0 : index
    %c0_1 = arith.constant 0 : index
    %c0_2 = arith.constant 0 : index
    %c0_3 = arith.constant 0 : index
    %3 = vector.load %arg2[%c0, %c0_1, %c0_2, %c0_3] : memref<1x16x16x8xf32, #tpu.memory_space<vmem>>, vector<1x16x16x8xf32>
    %4 = vector.shape_cast %3 : vector<1x16x16x8xf32> to vector<256x8xf32>
    %c0_4 = arith.constant 0 : index
    %c0_5 = arith.constant 0 : index
    %5 = vector.load %arg3[%c0_4, %c0_5] : memref<1x8xf32, #tpu.memory_space<vmem>>, vector<1x8xf32>
    %6 = vector.broadcast %5 : vector<1x8xf32> to vector<256x8xf32>
    %7 = arith.mulf %4, %6 : vector<256x8xf32>
    %c0_6 = arith.constant 0 : index
    %c0_7 = arith.constant 0 : index
    %8 = vector.load %arg4[%c0_6, %c0_7] : memref<1x8xf32, #tpu.memory_space<vmem>>, vector<1x8xf32>
    %9 = vector.broadcast %8 : vector<1x8xf32> to vector<256x8xf32>
    %10 = arith.addf %7, %9 : vector<256x8xf32>
    %cst = arith.constant 0.000000e+00 : f32
    %11 = vector.broadcast %cst : f32 to vector<256x8xf32>
    %12 = arith.maximumf %10, %11 : vector<256x8xf32>
    %c0_8 = arith.constant 0 : index
    %c0_9 = arith.constant 0 : index
    %13 = vector.load %arg10[%c0_8, %c0_9] : memref<256x32xf32, #tpu.memory_space<vmem>>, vector<256x32xf32>
    %14 = arith.truncf %12 : vector<256x8xf32> to vector<256x8xbf16>
    %c0_10 = arith.constant 0 : index
    %c0_11 = arith.constant 0 : index
    %15 = vector.load %arg5[%c0_10, %c0_11] : memref<8x32xbf16, #tpu.memory_space<vmem>>, vector<8x32xbf16>
    %cst_12 = arith.constant dense<0.000000e+00> : vector<256x32xf32>
    %16 = tpu.matmul %14, %15, %cst_12 {dimension_numbers = #tpu.dot_dimension_numbers<[1], [0], [0], [1], [0, 0, 1, 1], [], []>} : vector<256x8xbf16>, vector<8x32xbf16>, vector<256x32xf32> -> vector<256x32xf32>
    %17 = arith.addf %13, %16 : vector<256x32xf32>
    %c0_13 = arith.constant 0 : index
    %c0_14 = arith.constant 0 : index
    %18 = vector.load %arg10[%c0_13, %c0_14] : memref<256x32xf32, #tpu.memory_space<vmem>>, vector<256x32xf32>
    tpu.vector_store %arg10[%c0_13, %c0_14], %17 {strides = array<i32>} : memref<256x32xf32, #tpu.memory_space<vmem>>, vector<256x32xf32>,
    %c0_i32_15 = arith.constant 0 : i32
    %19 = arith.cmpi eq, %arg1, %c0_i32_15 : i32
    %20 = arith.extui %19 : i1 to i32
    %c0_i32_16 = arith.constant 0 : i32
    %21 = arith.cmpi ne, %20, %c0_i32_16 : i32
    scf.if %21 {
      %c0_17 = arith.constant 0 : index
      %c0_18 = arith.constant 0 : index
      %22 = vector.load %arg10[%c0_17, %c0_18] : memref<256x32xf32, #tpu.memory_space<vmem>>, vector<256x32xf32>
      %c0_19 = arith.constant 0 : index
      %c0_20 = arith.constant 0 : index
      %23 = vector.load %arg6[%c0_19, %c0_20] : memref<1x32xf32, #tpu.memory_space<vmem>>, vector<1x32xf32>
      %24 = vector.broadcast %23 : vector<1x32xf32> to vector<256x32xf32>
      %25 = arith.mulf %22, %24 : vector<256x32xf32>
      %c0_21 = arith.constant 0 : index
      %c0_22 = arith.constant 0 : index
      %26 = vector.load %arg7[%c0_21, %c0_22] : memref<1x32xf32, #tpu.memory_space<vmem>>, vector<1x32xf32>
      %27 = vector.broadcast %26 : vector<1x32xf32> to vector<256x32xf32>
      %28 = arith.addf %25, %27 : vector<256x32xf32>
      %cst_23 = arith.constant 0.000000e+00 : f32
      %29 = vector.broadcast %cst_23 : f32 to vector<256x32xf32>
      %30 = arith.maximumf %28, %29 : vector<256x32xf32>
      %31 = arith.truncf %30 : vector<256x32xf32> to vector<256x32xbf16>
      %32 = vector.shape_cast %31 : vector<256x32xbf16> to vector<16x16x32xbf16>
      %cst_24 = arith.constant 0.000000e+00 : bf16
      %33 = vector.broadcast %cst_24 : bf16 to vector<16x1x32xbf16>
      %c0_25 = arith.constant 0 : index
      %c1 = arith.constant 1 : index
      %c0_26 = arith.constant 0 : index
      %34 = vector.load %arg11[%c0_25, %c1, %c0_26] : memref<16x18x32xbf16, #tpu.memory_space<vmem>>, vector<16x16x32xbf16>
      tpu.vector_store %arg11[%c0_25, %c1, %c0_26], %32 {strides = array<i32>} : memref<16x18x32xbf16, #tpu.memory_space<vmem>>, vector<16x16x32xbf16>,
      %c0_27 = arith.constant 0 : index
      %c0_28 = arith.constant 0 : index
      %c0_29 = arith.constant 0 : index
      %35 = vector.load %arg11[%c0_27, %c0_28, %c0_29] : memref<16x18x32xbf16, #tpu.memory_space<vmem>>, vector<16x1x32xbf16>
      tpu.vector_store %arg11[%c0_27, %c0_28, %c0_29], %33 {strides = array<i32>} : memref<16x18x32xbf16, #tpu.memory_space<vmem>>, vector<16x1x32xbf16>,
      %c0_30 = arith.constant 0 : index
      %c17 = arith.constant 17 : index
      %c0_31 = arith.constant 0 : index
      %36 = vector.load %arg11[%c0_30, %c17, %c0_31] : memref<16x18x32xbf16, #tpu.memory_space<vmem>>, vector<16x1x32xbf16>
      tpu.vector_store %arg11[%c0_30, %c17, %c0_31], %33 {strides = array<i32>} : memref<16x18x32xbf16, #tpu.memory_space<vmem>>, vector<16x1x32xbf16>,
      %c0_32 = arith.constant 0 : index
      %c0_33 = arith.constant 0 : index
      %c0_34 = arith.constant 0 : index
      %37 = vector.load %arg11[%c0_32, %c0_33, %c0_34] : memref<16x18x32xbf16, #tpu.memory_space<vmem>>, vector<16x16x32xbf16>
      %c0_35 = arith.constant 0 : index
      %c2 = arith.constant 2 : index
      %c0_36 = arith.constant 0 : index
      %38 = vector.load %arg11[%c0_35, %c2, %c0_36] : memref<16x18x32xbf16, #tpu.memory_space<vmem>>, vector<16x16x32xbf16>
      %39 = tpu.concatenate %37, %32, %38 in 2 : vector<16x16x32xbf16>, vector<16x16x32xbf16>, vector<16x16x32xbf16> -> vector<16x16x96xbf16>
      %cst_37 = arith.constant 0.000000e+00 : bf16
      %40 = vector.broadcast %cst_37 : bf16 to vector<1x16x96xbf16>
      %c1_38 = arith.constant 1 : index
      %c0_39 = arith.constant 0 : index
      %c0_40 = arith.constant 0 : index
      %41 = vector.load %arg12[%c1_38, %c0_39, %c0_40] : memref<18x16x96xbf16, #tpu.memory_space<vmem>>, vector<16x16x96xbf16>
      tpu.vector_store %arg12[%c1_38, %c0_39, %c0_40], %39 {strides = array<i32>} : memref<18x16x96xbf16, #tpu.memory_space<vmem>>, vector<16x16x96xbf16>,
      %c0_41 = arith.constant 0 : index
      %c0_42 = arith.constant 0 : index
      %c0_43 = arith.constant 0 : index
      %42 = vector.load %arg12[%c0_41, %c0_42, %c0_43] : memref<18x16x96xbf16, #tpu.memory_space<vmem>>, vector<1x16x96xbf16>
      tpu.vector_store %arg12[%c0_41, %c0_42, %c0_43], %40 {strides = array<i32>} : memref<18x16x96xbf16, #tpu.memory_space<vmem>>, vector<1x16x96xbf16>,
      %c17_44 = arith.constant 17 : index
      %c0_45 = arith.constant 0 : index
      %c0_46 = arith.constant 0 : index
      %43 = vector.load %arg12[%c17_44, %c0_45, %c0_46] : memref<18x16x96xbf16, #tpu.memory_space<vmem>>, vector<1x16x96xbf16>
      tpu.vector_store %arg12[%c17_44, %c0_45, %c0_46], %40 {strides = array<i32>} : memref<18x16x96xbf16, #tpu.memory_space<vmem>>, vector<1x16x96xbf16>,
      %c0_47 = arith.constant 0 : index
      %c0_48 = arith.constant 0 : index
      %c0_49 = arith.constant 0 : index
      %44 = vector.load %arg12[%c0_47, %c0_48, %c0_49] : memref<18x16x96xbf16, #tpu.memory_space<vmem>>, vector<16x16x96xbf16>
      %45 = vector.shape_cast %44 : vector<16x16x96xbf16> to vector<256x96xbf16>
      %c0_50 = arith.constant 0 : index
      %c0_51 = arith.constant 0 : index
      %c0_52 = arith.constant 0 : index
      %46 = vector.load %arg8[%c0_50, %c0_51, %c0_52] : memref<3x96x8xbf16, #tpu.memory_space<vmem>>, vector<1x96x8xbf16>
      %47 = vector.shape_cast %46 : vector<1x96x8xbf16> to vector<96x8xbf16>
      %cst_53 = arith.constant dense<0.000000e+00> : vector<256x8xf32>
      %48 = tpu.matmul %45, %47, %cst_53 {dimension_numbers = #tpu.dot_dimension_numbers<[1], [0], [0], [1], [0, 0, 1, 1], [], []>} : vector<256x96xbf16>, vector<96x8xbf16>, vector<256x8xf32> -> vector<256x8xf32>
      %c0_54 = arith.constant 0 : index
      %c0_55 = arith.constant 0 : index
      %49 = vector.load %arg13[%c0_54, %c0_55] : memref<256x8xf32, #tpu.memory_space<vmem>>, vector<256x8xf32>
      tpu.vector_store %arg13[%c0_54, %c0_55], %48 {strides = array<i32>} : memref<256x8xf32, #tpu.memory_space<vmem>>, vector<256x8xf32>,
      %c1_56 = arith.constant 1 : index
      %c0_57 = arith.constant 0 : index
      %c0_58 = arith.constant 0 : index
      %50 = vector.load %arg12[%c1_56, %c0_57, %c0_58] : memref<18x16x96xbf16, #tpu.memory_space<vmem>>, vector<16x16x96xbf16>
      %51 = vector.shape_cast %50 : vector<16x16x96xbf16> to vector<256x96xbf16>
      %c1_59 = arith.constant 1 : index
      %c0_60 = arith.constant 0 : index
      %c0_61 = arith.constant 0 : index
      %52 = vector.load %arg8[%c1_59, %c0_60, %c0_61] : memref<3x96x8xbf16, #tpu.memory_space<vmem>>, vector<1x96x8xbf16>
      %53 = vector.shape_cast %52 : vector<1x96x8xbf16> to vector<96x8xbf16>
      %cst_62 = arith.constant dense<0.000000e+00> : vector<256x8xf32>
      %54 = tpu.matmul %51, %53, %cst_62 {dimension_numbers = #tpu.dot_dimension_numbers<[1], [0], [0], [1], [0, 0, 1, 1], [], []>} : vector<256x96xbf16>, vector<96x8xbf16>, vector<256x8xf32> -> vector<256x8xf32>
      %c0_63 = arith.constant 0 : index
      %c0_64 = arith.constant 0 : index
      %55 = vector.load %arg13[%c0_63, %c0_64] : memref<256x8xf32, #tpu.memory_space<vmem>>, vector<256x8xf32>
      %56 = arith.addf %55, %54 : vector<256x8xf32>
      %c0_65 = arith.constant 0 : index
      %c0_66 = arith.constant 0 : index
      %57 = vector.load %arg13[%c0_65, %c0_66] : memref<256x8xf32, #tpu.memory_space<vmem>>, vector<256x8xf32>
      tpu.vector_store %arg13[%c0_65, %c0_66], %56 {strides = array<i32>} : memref<256x8xf32, #tpu.memory_space<vmem>>, vector<256x8xf32>,
      %c2_67 = arith.constant 2 : index
      %c0_68 = arith.constant 0 : index
      %c0_69 = arith.constant 0 : index
      %58 = vector.load %arg12[%c2_67, %c0_68, %c0_69] : memref<18x16x96xbf16, #tpu.memory_space<vmem>>, vector<16x16x96xbf16>
      %59 = vector.shape_cast %58 : vector<16x16x96xbf16> to vector<256x96xbf16>
      %c2_70 = arith.constant 2 : index
      %c0_71 = arith.constant 0 : index
      %c0_72 = arith.constant 0 : index
      %60 = vector.load %arg8[%c2_70, %c0_71, %c0_72] : memref<3x96x8xbf16, #tpu.memory_space<vmem>>, vector<1x96x8xbf16>
      %61 = vector.shape_cast %60 : vector<1x96x8xbf16> to vector<96x8xbf16>
      %cst_73 = arith.constant dense<0.000000e+00> : vector<256x8xf32>
      %62 = tpu.matmul %59, %61, %cst_73 {dimension_numbers = #tpu.dot_dimension_numbers<[1], [0], [0], [1], [0, 0, 1, 1], [], []>} : vector<256x96xbf16>, vector<96x8xbf16>, vector<256x8xf32> -> vector<256x8xf32>
      %c0_74 = arith.constant 0 : index
      %c0_75 = arith.constant 0 : index
      %63 = vector.load %arg13[%c0_74, %c0_75] : memref<256x8xf32, #tpu.memory_space<vmem>>, vector<256x8xf32>
      %64 = arith.addf %63, %62 : vector<256x8xf32>
      %c0_76 = arith.constant 0 : index
      %c0_77 = arith.constant 0 : index
      %65 = vector.load %arg13[%c0_76, %c0_77] : memref<256x8xf32, #tpu.memory_space<vmem>>, vector<256x8xf32>
      tpu.vector_store %arg13[%c0_76, %c0_77], %64 {strides = array<i32>} : memref<256x8xf32, #tpu.memory_space<vmem>>, vector<256x8xf32>,
      %c0_78 = arith.constant 0 : index
      %c0_79 = arith.constant 0 : index
      %66 = vector.load %arg13[%c0_78, %c0_79] : memref<256x8xf32, #tpu.memory_space<vmem>>, vector<256x8xf32>
      %67 = vector.shape_cast %66 : vector<256x8xf32> to vector<1x16x16x8xf32>
      %c0_80 = arith.constant 0 : index
      %c0_81 = arith.constant 0 : index
      %c0_82 = arith.constant 0 : index
      %c0_83 = arith.constant 0 : index
      %68 = vector.load %arg9[%c0_80, %c0_81, %c0_82, %c0_83] : memref<1x16x16x8xf32, #tpu.memory_space<vmem>>, vector<1x16x16x8xf32>
      tpu.vector_store %arg9[%c0_80, %c0_81, %c0_82, %c0_83], %67 {strides = array<i32>} : memref<1x16x16x8xf32, #tpu.memory_space<vmem>>, vector<1x16x16x8xf32>,
    } else {
    }
    return
  }
  func.func @transform_0(%arg0: i32, %arg1: i32) -> (i32, i32, i32, i32) {
    %c0_i32 = arith.constant 0 : i32
    %c0_i32_0 = arith.constant 0 : i32
    %c0_i32_1 = arith.constant 0 : i32
    return %arg0, %c0_i32, %c0_i32_0, %arg1 : i32, i32, i32, i32
  }
  func.func @transform_1(%arg0: i32, %arg1: i32) -> (i32, i32) {
    %c0_i32 = arith.constant 0 : i32
    %c0_i32_0 = arith.constant 0 : i32
    return %c0_i32, %arg1 : i32, i32
  }
  func.func @transform_2(%arg0: i32, %arg1: i32) -> (i32, i32) {
    %c0_i32 = arith.constant 0 : i32
    %c0_i32_0 = arith.constant 0 : i32
    return %c0_i32, %arg1 : i32, i32
  }
  func.func @transform_3(%arg0: i32, %arg1: i32) -> (i32, i32) {
    %c0_i32 = arith.constant 0 : i32
    %c0_i32_0 = arith.constant 0 : i32
    return %arg1, %c0_i32 : i32, i32
  }
  func.func @transform_4(%arg0: i32, %arg1: i32) -> (i32, i32) {
    %c0_i32 = arith.constant 0 : i32
    %c0_i32_0 = arith.constant 0 : i32
    %c0_i32_1 = arith.constant 0 : i32
    return %c0_i32, %c0_i32_0 : i32, i32
  }
  func.func @transform_5(%arg0: i32, %arg1: i32) -> (i32, i32) {
    %c0_i32 = arith.constant 0 : i32
    %c0_i32_0 = arith.constant 0 : i32
    %c0_i32_1 = arith.constant 0 : i32
    return %c0_i32, %c0_i32_0 : i32, i32
  }
  func.func @transform_6(%arg0: i32, %arg1: i32) -> (i32, i32, i32) {
    %c0_i32 = arith.constant 0 : i32
    %c0_i32_0 = arith.constant 0 : i32
    %c0_i32_1 = arith.constant 0 : i32
    %c0_i32_2 = arith.constant 0 : i32
    return %c0_i32, %c0_i32_0, %c0_i32_1 : i32, i32, i32
  }
  func.func @transform_7(%arg0: i32, %arg1: i32) -> (i32, i32, i32, i32) {
    %c0_i32 = arith.constant 0 : i32
    %c0_i32_0 = arith.constant 0 : i32
    %c0_i32_1 = arith.constant 0 : i32
    %c0_i32_2 = arith.constant 0 : i32
    return %arg0, %c0_i32, %c0_i32_0, %c0_i32_1 : i32, i32, i32, i32
  }
}

</mosaic_0001>

<llo_original>
// kernel: tpu_custom_call.1
$region0: #{tpu_custom_call.1}
  #allocation0 [shape = 'u32[]', space=smem, size = 0x4, offset = 0x4, fixed_abs, tag = 'smem constant byte address 0x4 - core index']
  #allocation1 [shape = 'u32[72,128]{1,0:T(1,128)}', space=vmem, size = 0x9000, scoped, tag = 'internal scratch']
  #allocation2 [shape = 'f32[256,32]{1,0:T(8,128)}', space=vmem, size = 0x20000, scoped, tag = 'scratch operand']
  #allocation3 [shape = 'bf16[16,18,32]{2,1,0:T(8,128)(2,1)}', space=vmem, size = 0x18000, scoped, tag = 'scratch operand']
  #allocation4 [shape = 'bf16[18,16,96]{2,1,0:T(8,128)(2,1)}', space=vmem, size = 0x12000, scoped, tag = 'scratch operand']
  #allocation5 [shape = 'f32[256,8]{1,0:T(8,128)}', space=vmem, size = 0x20000, scoped, tag = 'scratch operand']
  %s0 = inlined_call_operand.vmem [shape: f32[2,16,16,8], index: 0, kind: input, shape index: {}]
  %s1 = inlined_call_operand.vmem [shape: f32[1,8], index: 1, kind: input, shape index: {}]
  %s2 = inlined_call_operand.vmem [shape: f32[1,8], index: 2, kind: input, shape index: {}]
  %s3 = inlined_call_operand.vmem [shape: bf16[8,32], index: 3, kind: input, shape index: {}]
  %s4 = inlined_call_operand.vmem [shape: f32[1,32], index: 4, kind: input, shape index: {}]
  %s5 = inlined_call_operand.vmem [shape: f32[1,32], index: 5, kind: input, shape index: {}]
  %s6 = inlined_call_operand.vmem [shape: bf16[3,96,8], index: 6, kind: input, shape index: {}]
  %s7 = inlined_call_operand.vmem [shape: f32[2,16,16,8], index: 7, kind: output, shape index: {}]
  %s8 = sld [smem:[#allocation0]]
  $region69: #{tpu_custom_call.1} parent=0
    _
  %s10 = ssub.s32 1, %s8
  %s11 = scalar_select 0, %s10, %s8
  loop: start=0, step=1, limit=4
  $region2: #{tpu_custom_call.1} parent=0 // loop_pre_header
    _
  $region3: #{tpu_custom_call.1} parent=0 // loop_header
    %s13 = sphi 0, %s17
    %p14 = scmp.ge.s32.totalorder %s13, 4
    %s20 = sphi 0, %s32
    %s21 = sphi 0, %s28
    %s22 = sphi 0, %s20
    %s23 = sphi 0, %s21
    %s24 = sphi 0, %s22
    %s25 = sphi 0, %s23
    %s37 = sphi 0, %s39
    %s40 = sphi 0, %s37
    %s41 = sphi 0, %s40
    %s57 = sphi 0, %s41
    %s63 = sphi 0, %s65
    %s66 = sphi 0, %s63
    %s67 = sphi 0, %s66
    %s83 = sphi 0, %s67
    %s89 = sphi 0, %s91
    %s92 = sphi 0, %s89
    %s93 = sphi 0, %s92
    %s109 = sphi 0, %s93
    %s115 = sphi 0, %s117
    %s118 = sphi 0, %s115
    %s119 = sphi 0, %s118
    %s135 = sphi 0, %s119
    %s139 = sphi 0, %s139
    %s141 = sphi 0, %s139
    %s142 = sphi 0, %s141
    %s156 = sphi 0, %s142
    %s160 = sphi 0, %s160
    %s162 = sphi 0, %s160
    %s163 = sphi 0, %s162
    %s177 = sphi 0, %s163
    %s181 = sphi 0, %s181
    %s183 = sphi 0, %s181
    %s184 = sphi 0, %s183
    %s198 = sphi 0, %s184
    %s204 = sphi 0, %s206
    %s207 = sphi 0, %s204
    %s208 = sphi 0, %s207
    %s224 = sphi 0, %s208
  $region4: #{tpu_custom_call.1} parent=0 // loop_header_branch
    %16 = sbr.rel (%p14) target = $region8
  $region5: #{tpu_custom_call.1} parent=0 // loop_body
    %s18 = ssub.s32 %s13, 1
    %s19 = ssub.s32 %s13, 2
    %s26 = sadd.s32 1, %s21
    %p27 = scmp.ge.s32.totalorder %s26, 1
    %s28 = scalar_select %p27, 0, %s26
    %s29 = sadd.s32 1, %s20
    %s30 = scalar_select %p27, %s29, %s20
    %p31 = scmp.ge.s32.totalorder %s30, 2
    %s32 = scalar_select %p31, 0, %s30
    %s33 = ssub.s32 %s20, %s32
    %s34 = ssub.s32 %s21, %s28
    %s35 = sor.u32 %s33, %s34
    %p36 = scmp.eq.s32.totalorder %s35, 0
    %s38 = sadd.s32 %s37, 1
    %s39 = scalar_select %p36, %s37, %s38
    %p42 = pneg %p36
    %p43 = scmp.eq.s32.totalorder %s13, 1
    %p44 = por %p42, %p43
    %p45 = scmp.ne.s32.totalorder %s37, %s40
    %p46 = scmp.eq.s32.totalorder %s13, 0
    %p47 = por %p45, %p46
    %p48 = scmp.ne.s32.totalorder %s37, %s40
    %p49 = scmp.eq.s32.totalorder %s18, 1
    %p50 = por %p48, %p49
    %p51 = scmp.ne.s32.totalorder %s40, %s41
    %p52 = scmp.eq.s32.totalorder %s18, 0
    %p53 = por %p51, %p52
    %p54 = scmp.ne.s32.totalorder %s40, %s41
    %p55 = scmp.eq.s32.totalorder %s19, 1
    %p56 = por %p54, %p55
    %p58 = scmp.ne.s32.totalorder %s41, %s57
    %p59 = scmp.eq.s32.totalorder %s19, 0
    %p60 = por %p58, %p59
    %s61 = ssub.s32 %s21, %s28
    %p62 = scmp.eq.s32.totalorder %s61, 0
    %s64 = sadd.s32 %s63, 1
    %s65 = scalar_select %p62, %s63, %s64
    %p68 = pneg %p62
    %p69 = scmp.eq.s32.totalorder %s13, 1
    %p70 = por %p68, %p69
    %p71 = scmp.ne.s32.totalorder %s63, %s66
    %p72 = scmp.eq.s32.totalorder %s13, 0
    %p73 = por %p71, %p72
    %p74 = scmp.ne.s32.totalorder %s63, %s66
    %p75 = scmp.eq.s32.totalorder %s18, 1
    %p76 = por %p74, %p75
    %p77 = scmp.ne.s32.totalorder %s66, %s67
    %p78 = scmp.eq.s32.totalorder %s18, 0
    %p79 = por %p77, %p78
    %p80 = scmp.ne.s32.totalorder %s66, %s67
    %p81 = scmp.eq.s32.totalorder %s19, 1
    %p82 = por %p80, %p81
    %p84 = scmp.ne.s32.totalorder %s67, %s83
    %p85 = scmp.eq.s32.totalorder %s19, 0
    %p86 = por %p84, %p85
    %s87 = ssub.s32 %s21, %s28
    %p88 = scmp.eq.s32.totalorder %s87, 0
    %s90 = sadd.s32 %s89, 1
    %s91 = scalar_select %p88, %s89, %s90
    %p94 = pneg %p88
    %p95 = scmp.eq.s32.totalorder %s13, 1
    %p96 = por %p94, %p95
    %p97 = scmp.ne.s32.totalorder %s89, %s92
    %p98 = scmp.eq.s32.totalorder %s13, 0
    %p99 = por %p97, %p98
    %p100 = scmp.ne.s32.totalorder %s89, %s92
    %p101 = scmp.eq.s32.totalorder %s18, 1
    %p102 = por %p100, %p101
    %p103 = scmp.ne.s32.totalorder %s92, %s93
    %p104 = scmp.eq.s32.totalorder %s18, 0
    %p105 = por %p103, %p104
    %p106 = scmp.ne.s32.totalorder %s92, %s93
    %p107 = scmp.eq.s32.totalorder %s19, 1
    %p108 = por %p106, %p107
    %p110 = scmp.ne.s32.totalorder %s93, %s109
    %p111 = scmp.eq.s32.totalorder %s19, 0
    %p112 = por %p110, %p111
    %s113 = ssub.s32 %s21, %s28
    %p114 = scmp.eq.s32.totalorder %s113, 0
    %s116 = sadd.s32 %s115, 1
    %s117 = scalar_select %p114, %s115, %s116
    %p120 = pneg %p114
    %p121 = scmp.eq.s32.totalorder %s13, 1
    %p122 = por %p120, %p121
    %p123 = scmp.ne.s32.totalorder %s115, %s118
    %p124 = scmp.eq.s32.totalorder %s13, 0
    %p125 = por %p123, %p124
    %p126 = scmp.ne.s32.totalorder %s115, %s118
    %p127 = scmp.eq.s32.totalorder %s18, 1
    %p128 = por %p126, %p127
    %p129 = scmp.ne.s32.totalorder %s118, %s119
    %p130 = scmp.eq.s32.totalorder %s18, 0
    %p131 = por %p129, %p130
    %p132 = scmp.ne.s32.totalorder %s118, %s119
    %p133 = scmp.eq.s32.totalorder %s19, 1
    %p134 = por %p132, %p133
    %p136 = scmp.ne.s32.totalorder %s119, %s135
    %p137 = scmp.eq.s32.totalorder %s19, 0
    %p138 = por %p136, %p137
    %s140 = sadd.s32 %s139, 1
    %p143 = scmp.eq.s32.totalorder %s13, 1
    %p144 = scmp.ne.s32.totalorder %s139, %s141
    %p145 = scmp.eq.s32.totalorder %s13, 0
    %p146 = por %p144, %p145
    %p147 = scmp.ne.s32.totalorder %s139, %s141
    %p148 = scmp.eq.s32.totalorder %s18, 1
    %p149 = por %p147, %p148
    %p150 = scmp.ne.s32.totalorder %s141, %s142
    %p151 = scmp.eq.s32.totalorder %s18, 0
    %p152 = por %p150, %p151
    %p153 = scmp.ne.s32.totalorder %s141, %s142
    %p154 = scmp.eq.s32.totalorder %s19, 1
    %p155 = por %p153, %p154
    %p157 = scmp.ne.s32.totalorder %s142, %s156
    %p158 = scmp.eq.s32.totalorder %s19, 0
    %p159 = por %p157, %p158
    %s161 = sadd.s32 %s160, 1
    %p164 = scmp.eq.s32.totalorder %s13, 1
    %p165 = scmp.ne.s32.totalorder %s160, %s162
    %p166 = scmp.eq.s32.totalorder %s13, 0
    %p167 = por %p165, %p166
    %p168 = scmp.ne.s32.totalorder %s160, %s162
    %p169 = scmp.eq.s32.totalorder %s18, 1
    %p170 = por %p168, %p169
    %p171 = scmp.ne.s32.totalorder %s162, %s163
    %p172 = scmp.eq.s32.totalorder %s18, 0
    %p173 = por %p171, %p172
    %p174 = scmp.ne.s32.totalorder %s162, %s163
    %p175 = scmp.eq.s32.totalorder %s19, 1
    %p176 = por %p174, %p175
    %p178 = scmp.ne.s32.totalorder %s163, %s177
    %p179 = scmp.eq.s32.totalorder %s19, 0
    %p180 = por %p178, %p179
    %s182 = sadd.s32 %s181, 1
    %p185 = scmp.eq.s32.totalorder %s13, 1
    %p186 = scmp.ne.s32.totalorder %s181, %s183
    %p187 = scmp.eq.s32.totalorder %s13, 0
    %p188 = por %p186, %p187
    %p189 = scmp.ne.s32.totalorder %s181, %s183
    %p190 = scmp.eq.s32.totalorder %s18, 1
    %p191 = por %p189, %p190
    %p192 = scmp.ne.s32.totalorder %s183, %s184
    %p193 = scmp.eq.s32.totalorder %s18, 0
    %p194 = por %p192, %p193
    %p195 = scmp.ne.s32.totalorder %s183, %s184
    %p196 = scmp.eq.s32.totalorder %s19, 1
    %p197 = por %p195, %p196
    %p199 = scmp.ne.s32.totalorder %s184, %s198
    %p200 = scmp.eq.s32.totalorder %s19, 0
    %p201 = por %p199, %p200
    %s202 = ssub.s32 %s20, %s32
    %p203 = scmp.eq.s32.totalorder %s202, 0
    %s205 = sadd.s32 %s204, 1
    %s206 = scalar_select %p203, %s204, %s205
    %p209 = pneg %p203
    %p210 = scmp.eq.s32.totalorder %s13, 1
    %p211 = por %p209, %p210
    %p212 = scmp.ne.s32.totalorder %s204, %s207
    %p213 = scmp.eq.s32.totalorder %s13, 0
    %p214 = por %p212, %p213
    %p215 = scmp.ne.s32.totalorder %s204, %s207
    %p216 = scmp.eq.s32.totalorder %s18, 1
    %p217 = por %p215, %p216
    %p218 = scmp.ne.s32.totalorder %s207, %s208
    %p219 = scmp.eq.s32.totalorder %s18, 0
    %p220 = por %p218, %p219
    %p221 = scmp.ne.s32.totalorder %s207, %s208
    %p222 = scmp.eq.s32.totalorder %s19, 1
    %p223 = por %p221, %p222
    %p225 = scmp.ne.s32.totalorder %s208, %s224
    %p226 = scmp.eq.s32.totalorder %s19, 0
    %p227 = por %p225, %p226
    %p228 = scmp.le.s32.totalorder 1, %s13
    %p229 = scmp.lt.s32.totalorder %s13, 3
    %p230 = pnand %p228, %p229
    %p231 = pneg %p230
    // Predicated region
    $region9: #{tpu_custom_call.1} parent=5 // pred_check
      _
    $region10: #{tpu_custom_call.1} parent=5 // pred_check_branch
      %233 = sbr.rel (%p230) target = $region12
    $region11: #{tpu_custom_call.1} parent=5 // pred_region
      %s234 = ssub.s32 %s13, 1
      // Predicated region
      $region13: #{tpu_custom_call.1} parent=11 // pred_check
        %p235 = pneg %p79
      $region14: #{tpu_custom_call.1} parent=11 // pred_check_branch
        %237 = sbr.rel (%p235) target = $region16
      $region15: #{tpu_custom_call.1} parent=11 // pred_region
        %p238 = scmp.lt.s32.totalorder %s23, 0
        %s239 = scalar_select %p238, %s23, 0
        %s240 = scalar_lea.vmem %s1, %s239
      $region16: #{tpu_custom_call.1} parent=11 // pred_fallthru
        _
      // Predicated region
      $region17: #{tpu_custom_call.1} parent=11 // pred_check
        %p241 = pneg %p105
      $region18: #{tpu_custom_call.1} parent=11 // pred_check_branch
        %243 = sbr.rel (%p241) target = $region20
      $region19: #{tpu_custom_call.1} parent=11 // pred_region
        %p244 = scmp.lt.s32.totalorder %s23, 0
        %s245 = scalar_select %p244, %s23, 0
        %s246 = scalar_lea.vmem %s2, %s245
      $region20: #{tpu_custom_call.1} parent=11 // pred_fallthru
        _
      // Predicated region
      $region21: #{tpu_custom_call.1} parent=11 // pred_check
        %p247 = pneg %p131
      $region22: #{tpu_custom_call.1} parent=11 // pred_check_branch
        %249 = sbr.rel (%p247) target = $region24
      $region23: #{tpu_custom_call.1} parent=11 // pred_region
        %p250 = scmp.lt.s32.totalorder %s23, 0
        %s251 = scalar_select %p250, %s23, 0
        %s252 = smul.addr %s251, 4
        %s253 = scalar_lea.vmem %s3, %s252
      $region24: #{tpu_custom_call.1} parent=11 // pred_fallthru
        _
      // Predicated region
      $region25: #{tpu_custom_call.1} parent=11 // pred_check
        %p254 = pneg %p152
      $region26: #{tpu_custom_call.1} parent=11 // pred_check_branch
        %256 = sbr.rel (%p254) target = $region28
      $region27: #{tpu_custom_call.1} parent=11 // pred_region
        _
      $region28: #{tpu_custom_call.1} parent=11 // pred_fallthru
        _
      // Predicated region
      $region29: #{tpu_custom_call.1} parent=11 // pred_check
        %p257 = pneg %p173
      $region30: #{tpu_custom_call.1} parent=11 // pred_check_branch
        %259 = sbr.rel (%p257) target = $region32
      $region31: #{tpu_custom_call.1} parent=11 // pred_region
        _
      $region32: #{tpu_custom_call.1} parent=11 // pred_fallthru
        _
      // Predicated region
      $region33: #{tpu_custom_call.1} parent=11 // pred_check
        %p260 = pneg %p194
      $region34: #{tpu_custom_call.1} parent=11 // pred_check_branch
        %262 = sbr.rel (%p260) target = $region36
      $region35: #{tpu_custom_call.1} parent=11 // pred_region
        _
      $region36: #{tpu_custom_call.1} parent=11 // pred_fallthru
        _
    $region12: #{tpu_custom_call.1} parent=5 // pred_fallthru
      _
    %p263 = scmp.lt.s32.totalorder %s13, 2
    // Predicated region
    $region37: #{tpu_custom_call.1} parent=5 // pred_check
      %p264 = pneg %p263
    $region38: #{tpu_custom_call.1} parent=5 // pred_check_branch
      %266 = sbr.rel (%p264) target = $region40
    $region39: #{tpu_custom_call.1} parent=5 // pred_region
      // Predicated region
      $region41: #{tpu_custom_call.1} parent=39 // pred_check
        %p267 = pneg %p47
      $region42: #{tpu_custom_call.1} parent=39 // pred_check_branch
        %269 = sbr.rel (%p267) target = $region44
      $region43: #{tpu_custom_call.1} parent=39 // pred_region
        %p270 = scmp.lt.s32.totalorder %s20, 1
        %s271 = scalar_select %p270, %s20, 1
        %p272 = scmp.lt.s32.totalorder %s21, 0
        %s273 = scalar_select %p272, %s21, 0
        %s274 = smul.addr %s271, 32
        %s275 = sadd.s32 %s273, %s274
        %s276 = smul.addr %s275, 8
        %s277 = scalar_lea.vmem %s0, %s276
      $region44: #{tpu_custom_call.1} parent=39 // pred_fallthru
        _
    $region40: #{tpu_custom_call.1} parent=5 // pred_fallthru
      _
    %p278 = scmp.le.s32.totalorder 1, %s13
    %p279 = scmp.lt.s32.totalorder %s13, 3
    %p280 = pnand %p278, %p279
    %p281 = pneg %p280
    // Predicated region
    $region45: #{tpu_custom_call.1} parent=5 // pred_check
      _
    $region46: #{tpu_custom_call.1} parent=5 // pred_check_branch
      %283 = sbr.rel (%p280) target = $region48
    $region47: #{tpu_custom_call.1} parent=5 // pred_region
      %s284 = ssub.s32 %s13, 1
      %p285 = scmp.lt.s32.totalorder %s22, 1
      %s286 = scalar_select %p285, %s22, 1
      %p287 = scmp.lt.s32.totalorder %s23, 0
      %s288 = scalar_select %p287, %s23, 0
      %s289 = smul.addr %s286, 32
      %s290 = sadd.s32 %s288, %s289
      %s291 = smul.addr %s290, 8
      %s292 = scalar_lea.vmem %s0, %s291
      %p293 = pneg %p53
      %p294 = pneg %p50
      %p295 = scmp.lt.s32.totalorder %s23, 0
      %s296 = scalar_select %p295, %s23, 0
      %s297 = scalar_lea.vmem %s1, %s296
      %p298 = pneg %p79
      %p299 = pneg %p76
      %p300 = scmp.lt.s32.totalorder %s23, 0
      %s301 = scalar_select %p300, %s23, 0
      %s302 = scalar_lea.vmem %s2, %s301
      %p303 = pneg %p105
      %p304 = pneg %p102
      %p305 = scmp.lt.s32.totalorder %s23, 0
      %s306 = scalar_select %p305, %s23, 0
      %s307 = smul.addr %s306, 4
      %s308 = scalar_lea.vmem %s3, %s307
      %p309 = pneg %p131
      %p310 = pneg %p128
      %p311 = pneg %p152
      %p312 = pneg %p149
      %p313 = pneg %p173
      %p314 = pneg %p170
      %p315 = pneg %p194
      %p316 = pneg %p191
      %p317 = pneg %p220
      %p318 = pneg %p217
      %p319 = scmp.lt.s32.totalorder %s22, 1
      %s320 = scalar_select %p319, %s22, 1
      %s321 = smul.addr %s320, 32
      %s322 = smul.addr %s321, 8
      %s323 = scalar_lea.vmem %s7, %s322
      %p324 = scmp.lt.s32.totalorder %s22, 1
      %s325 = scalar_select %p324, %s22, 1
      %p326 = scmp.lt.s32.totalorder %s23, 0
      %s327 = scalar_select %p326, %s23, 0
      %s328 = smul.addr %s325, 32
      %s329 = sadd.s32 %s327, %s328
      %s330 = smul.addr %s329, 8
      %s331 = scalar_lea.vmem %s0, %s330
      %p332 = scmp.lt.s32.totalorder %s23, 0
      %s333 = scalar_select %p332, %s23, 0
      %s334 = scalar_lea.vmem %s1, %s333
      %p335 = scmp.lt.s32.totalorder %s23, 0
      %s336 = scalar_select %p335, %s23, 0
      %s337 = scalar_lea.vmem %s2, %s336
      %p338 = scmp.lt.s32.totalorder %s23, 0
      %s339 = scalar_select %p338, %s23, 0
      %s340 = smul.addr %s339, 4
      %s341 = scalar_lea.vmem %s3, %s340
      %p342 = scmp.lt.s32.totalorder %s22, 1
      %s343 = scalar_select %p342, %s22, 1
      %s344 = smul.addr %s343, 32
      %s345 = smul.addr %s344, 8
      %s346 = scalar_lea.vmem %s7, %s345
      %p348 = scmp.eq.s32.totalorder %s23, 0
      // Predicated region
      $region49: #{tpu_custom_call.1} parent=47 // pred_check
        %p349 = pneg %p348
      $region50: #{tpu_custom_call.1} parent=47 // pred_check_branch
        %351 = sbr.rel (%p349) target = $region52
      $region51: #{tpu_custom_call.1} parent=47 // pred_region
        %vm352 = vcmask 261120
        %353 = vst.msk [vmem:[#allocation2] sm:$0xff] %vm352, 0.0
        %354 = vst.msk [vmem:[#allocation2 + $0x8] sm:$0xff] %vm352, 0.0
        %355 = vst.msk [vmem:[#allocation2 + $0x10] sm:$0xff] %vm352, 0.0
        %356 = vst.msk [vmem:[#allocation2 + $0x18] sm:$0xff] %vm352, 0.0
        %357 = vst.msk [vmem:[#allocation2 + $0x20] sm:$0xff] %vm352, 0.0
        %358 = vst.msk [vmem:[#allocation2 + $0x28] sm:$0xff] %vm352, 0.0
        %359 = vst.msk [vmem:[#allocation2 + $0x30] sm:$0xff] %vm352, 0.0
        %360 = vst.msk [vmem:[#allocation2 + $0x38] sm:$0xff] %vm352, 0.0
        %361 = vst.msk [vmem:[#allocation2 + $0x40] sm:$0xff] %vm352, 0.0
        %362 = vst.msk [vmem:[#allocation2 + $0x48] sm:$0xff] %vm352, 0.0
        %363 = vst.msk [vmem:[#allocation2 + $0x50] sm:$0xff] %vm352, 0.0
        %364 = vst.msk [vmem:[#allocation2 + $0x58] sm:$0xff] %vm352, 0.0
        %365 = vst.msk [vmem:[#allocation2 + $0x60] sm:$0xff] %vm352, 0.0
        %366 = vst.msk [vmem:[#allocation2 + $0x68] sm:$0xff] %vm352, 0.0
        %367 = vst.msk [vmem:[#allocation2 + $0x70] sm:$0xff] %vm352, 0.0
        %368 = vst.msk [vmem:[#allocation2 + $0x78] sm:$0xff] %vm352, 0.0
        %369 = vst.msk [vmem:[#allocation2 + $0x80] sm:$0xff] %vm352, 0.0
        %370 = vst.msk [vmem:[#allocation2 + $0x88] sm:$0xff] %vm352, 0.0
        %371 = vst.msk [vmem:[#allocation2 + $0x90] sm:$0xff] %vm352, 0.0
        %372 = vst.msk [vmem:[#allocation2 + $0x98] sm:$0xff] %vm352, 0.0
        %373 = vst.msk [vmem:[#allocation2 + $0xa0] sm:$0xff] %vm352, 0.0
        %374 = vst.msk [vmem:[#allocation2 + $0xa8] sm:$0xff] %vm352, 0.0
        %375 = vst.msk [vmem:[#allocation2 + $0xb0] sm:$0xff] %vm352, 0.0
        %376 = vst.msk [vmem:[#allocation2 + $0xb8] sm:$0xff] %vm352, 0.0
        %377 = vst.msk [vmem:[#allocation2 + $0xc0] sm:$0xff] %vm352, 0.0
        %378 = vst.msk [vmem:[#allocation2 + $0xc8] sm:$0xff] %vm352, 0.0
        %379 = vst.msk [vmem:[#allocation2 + $0xd0] sm:$0xff] %vm352, 0.0
        %380 = vst.msk [vmem:[#allocation2 + $0xd8] sm:$0xff] %vm352, 0.0
        %381 = vst.msk [vmem:[#allocation2 + $0xe0] sm:$0xff] %vm352, 0.0
        %382 = vst.msk [vmem:[#allocation2 + $0xe8] sm:$0xff] %vm352, 0.0
        %383 = vst.msk [vmem:[#allocation2 + $0xf0] sm:$0xff] %vm352, 0.0
        %384 = vst.msk [vmem:[#allocation2 + $0xf8] sm:$0xff] %vm352, 0.0
      $region52: #{tpu_custom_call.1} parent=47 // pred_fallthru
        _
      %v385 = vld [vmem:[%s331] sm:$0xff]
      %v386 = vld [vmem:[%s331 + $0x8] sm:$0xff]
      %v387 = vld [vmem:[%s331 + $0x10] sm:$0xff]
      %v388 = vld [vmem:[%s331 + $0x18] sm:$0xff]
      %v389 = vld [vmem:[%s331 + $0x20] sm:$0xff]
      %v390 = vld [vmem:[%s331 + $0x28] sm:$0xff]
      %v391 = vld [vmem:[%s331 + $0x30] sm:$0xff]
      %v392 = vld [vmem:[%s331 + $0x38] sm:$0xff]
      %v393 = vld [vmem:[%s331 + $0x40] sm:$0xff]
      %v394 = vld [vmem:[%s331 + $0x48] sm:$0xff]
      %v395 = vld [vmem:[%s331 + $0x50] sm:$0xff]
      %v396 = vld [vmem:[%s331 + $0x58] sm:$0xff]
      %v397 = vld [vmem:[%s331 + $0x60] sm:$0xff]
      %v398 = vld [vmem:[%s331 + $0x68] sm:$0xff]
      %v399 = vld [vmem:[%s331 + $0x70] sm:$0xff]
      %v400 = vld [vmem:[%s331 + $0x78] sm:$0xff]
      %v401 = vld [vmem:[%s331 + $0x80] sm:$0xff]
      %v402 = vld [vmem:[%s331 + $0x88] sm:$0xff]
      %v403 = vld [vmem:[%s331 + $0x90] sm:$0xff]
      %v404 = vld [vmem:[%s331 + $0x98] sm:$0xff]
      %v405 = vld [vmem:[%s331 + $0xa0] sm:$0xff]
      %v406 = vld [vmem:[%s331 + $0xa8] sm:$0xff]
      %v407 = vld [vmem:[%s331 + $0xb0] sm:$0xff]
      %v408 = vld [vmem:[%s331 + $0xb8] sm:$0xff]
      %v409 = vld [vmem:[%s331 + $0xc0] sm:$0xff]
      %v410 = vld [vmem:[%s331 + $0xc8] sm:$0xff]
      %v411 = vld [vmem:[%s331 + $0xd0] sm:$0xff]
      %v412 = vld [vmem:[%s331 + $0xd8] sm:$0xff]
      %v413 = vld [vmem:[%s331 + $0xe0] sm:$0xff]
      %v414 = vld [vmem:[%s331 + $0xe8] sm:$0xff]
      %v415 = vld [vmem:[%s331 + $0xf0] sm:$0xff]
      %v416 = vld [vmem:[%s331 + $0xf8] sm:$0xff]
      %v417 = vld [vmem:[%s334] sm:$0x1]
      %v419 = vperm.slane %v417, 0
      %v421 = vmul.f32 %v385, %v419
      %v422 = vmul.f32 %v386, %v419
      %v423 = vmul.f32 %v387, %v419
      %v424 = vmul.f32 %v388, %v419
      %v425 = vmul.f32 %v389, %v419
      %v426 = vmul.f32 %v390, %v419
      %v427 = vmul.f32 %v391, %v419
      %v428 = vmul.f32 %v392, %v419
      %v429 = vmul.f32 %v393, %v419
      %v430 = vmul.f32 %v394, %v419
      %v431 = vmul.f32 %v395, %v419
      %v432 = vmul.f32 %v396, %v419
      %v433 = vmul.f32 %v397, %v419
      %v434 = vmul.f32 %v398, %v419
      %v435 = vmul.f32 %v399, %v419
      %v436 = vmul.f32 %v400, %v419
      %v437 = vmul.f32 %v401, %v419
      %v438 = vmul.f32 %v402, %v419
      %v439 = vmul.f32 %v403, %v419
      %v440 = vmul.f32 %v404, %v419
      %v441 = vmul.f32 %v405, %v419
      %v442 = vmul.f32 %v406, %v419
      %v443 = vmul.f32 %v407, %v419
      %v444 = vmul.f32 %v408, %v419
      %v445 = vmul.f32 %v409, %v419
      %v446 = vmul.f32 %v410, %v419
      %v447 = vmul.f32 %v411, %v419
      %v448 = vmul.f32 %v412, %v419
      %v449 = vmul.f32 %v413, %v419
      %v450 = vmul.f32 %v414, %v419
      %v451 = vmul.f32 %v415, %v419
      %v452 = vmul.f32 %v416, %v419
      %v453 = vld [vmem:[%s337] sm:$0x1]
      %v455 = vperm.slane %v453, 0
      %v457 = vadd.f32 %v421, %v455
      %v458 = vadd.f32 %v422, %v455
      %v459 = vadd.f32 %v423, %v455
      %v460 = vadd.f32 %v424, %v455
      %v461 = vadd.f32 %v425, %v455
      %v462 = vadd.f32 %v426, %v455
      %v463 = vadd.f32 %v427, %v455
      %v464 = vadd.f32 %v428, %v455
      %v465 = vadd.f32 %v429, %v455
      %v466 = vadd.f32 %v430, %v455
      %v467 = vadd.f32 %v431, %v455
      %v468 = vadd.f32 %v432, %v455
      %v469 = vadd.f32 %v433, %v455
      %v470 = vadd.f32 %v434, %v455
      %v471 = vadd.f32 %v435, %v455
      %v472 = vadd.f32 %v436, %v455
      %v473 = vadd.f32 %v437, %v455
      %v474 = vadd.f32 %v438, %v455
      %v475 = vadd.f32 %v439, %v455
      %v476 = vadd.f32 %v440, %v455
      %v477 = vadd.f32 %v441, %v455
      %v478 = vadd.f32 %v442, %v455
      %v479 = vadd.f32 %v443, %v455
      %v480 = vadd.f32 %v444, %v455
      %v481 = vadd.f32 %v445, %v455
      %v482 = vadd.f32 %v446, %v455
      %v483 = vadd.f32 %v447, %v455
      %v484 = vadd.f32 %v448, %v455
      %v485 = vadd.f32 %v449, %v455
      %v486 = vadd.f32 %v450, %v455
      %v487 = vadd.f32 %v451, %v455
      %v488 = vadd.f32 %v452, %v455
      %v489 = vmax.f32 %v457, 0.0
      %v490 = vmax.f32 %v458, 0.0
      %v491 = vmax.f32 %v459, 0.0
      %v492 = vmax.f32 %v460, 0.0
      %v493 = vmax.f32 %v461, 0.0
      %v494 = vmax.f32 %v462, 0.0
      %v495 = vmax.f32 %v463, 0.0
      %v496 = vmax.f32 %v464, 0.0
      %v497 = vmax.f32 %v465, 0.0
      %v498 = vmax.f32 %v466, 0.0
      %v499 = vmax.f32 %v467, 0.0
      %v500 = vmax.f32 %v468, 0.0
      %v501 = vmax.f32 %v469, 0.0
      %v502 = vmax.f32 %v470, 0.0
      %v503 = vmax.f32 %v471, 0.0
      %v504 = vmax.f32 %v472, 0.0
      %v505 = vmax.f32 %v473, 0.0
      %v506 = vmax.f32 %v474, 0.0
      %v507 = vmax.f32 %v475, 0.0
      %v508 = vmax.f32 %v476, 0.0
      %v509 = vmax.f32 %v477, 0.0
      %v510 = vmax.f32 %v478, 0.0
      %v511 = vmax.f32 %v479, 0.0
      %v512 = vmax.f32 %v480, 0.0
      %v513 = vmax.f32 %v481, 0.0
      %v514 = vmax.f32 %v482, 0.0
      %v515 = vmax.f32 %v483, 0.0
      %v516 = vmax.f32 %v484, 0.0
      %v517 = vmax.f32 %v485, 0.0
      %v518 = vmax.f32 %v486, 0.0
      %v519 = vmax.f32 %v487, 0.0
      %v520 = vmax.f32 %v488, 0.0
      %v521 = vld [vmem:[#allocation2] sm:$0xff]
      %v522 = vld [vmem:[#allocation2 + $0x8] sm:$0xff]
      %v523 = vld [vmem:[#allocation2 + $0x10] sm:$0xff]
      %v524 = vld [vmem:[#allocation2 + $0x18] sm:$0xff]
      %v525 = vld [vmem:[#allocation2 + $0x20] sm:$0xff]
      %v526 = vld [vmem:[#allocation2 + $0x28] sm:$0xff]
      %v527 = vld [vmem:[#allocation2 + $0x30] sm:$0xff]
      %v528 = vld [vmem:[#allocation2 + $0x38] sm:$0xff]
      %v529 = vld [vmem:[#allocation2 + $0x40] sm:$0xff]
      %v530 = vld [vmem:[#allocation2 + $0x48] sm:$0xff]
      %v531 = vld [vmem:[#allocation2 + $0x50] sm:$0xff]
      %v532 = vld [vmem:[#allocation2 + $0x58] sm:$0xff]
      %v533 = vld [vmem:[#allocation2 + $0x60] sm:$0xff]
      %v534 = vld [vmem:[#allocation2 + $0x68] sm:$0xff]
      %v535 = vld [vmem:[#allocation2 + $0x70] sm:$0xff]
      %v536 = vld [vmem:[#allocation2 + $0x78] sm:$0xff]
      %v537 = vld [vmem:[#allocation2 + $0x80] sm:$0xff]
      %v538 = vld [vmem:[#allocation2 + $0x88] sm:$0xff]
      %v539 = vld [vmem:[#allocation2 + $0x90] sm:$0xff]
      %v540 = vld [vmem:[#allocation2 + $0x98] sm:$0xff]
      %v541 = vld [vmem:[#allocation2 + $0xa0] sm:$0xff]
      %v542 = vld [vmem:[#allocation2 + $0xa8] sm:$0xff]
      %v543 = vld [vmem:[#allocation2 + $0xb0] sm:$0xff]
      %v544 = vld [vmem:[#allocation2 + $0xb8] sm:$0xff]
      %v545 = vld [vmem:[#allocation2 + $0xc0] sm:$0xff]
      %v546 = vld [vmem:[#allocation2 + $0xc8] sm:$0xff]
      %v547 = vld [vmem:[#allocation2 + $0xd0] sm:$0xff]
      %v548 = vld [vmem:[#allocation2 + $0xd8] sm:$0xff]
      %v549 = vld [vmem:[#allocation2 + $0xe0] sm:$0xff]
      %v550 = vld [vmem:[#allocation2 + $0xe8] sm:$0xff]
      %v551 = vld [vmem:[#allocation2 + $0xf0] sm:$0xff]
      %v552 = vld [vmem:[#allocation2 + $0xf8] sm:$0xff]
      %v553 = vpack.c.bf16 %v490, %v489
      %v554 = vpack.c.bf16 %v492, %v491
      %v555 = vpack.c.bf16 %v494, %v493
      %v556 = vpack.c.bf16 %v496, %v495
      %v557 = vpack.c.bf16 %v498, %v497
      %v558 = vpack.c.bf16 %v500, %v499
      %v559 = vpack.c.bf16 %v502, %v501
      %v560 = vpack.c.bf16 %v504, %v503
      %v561 = vpack.c.bf16 %v506, %v505
      %v562 = vpack.c.bf16 %v508, %v507
      %v563 = vpack.c.bf16 %v510, %v509
      %v564 = vpack.c.bf16 %v512, %v511
      %v565 = vpack.c.bf16 %v514, %v513
      %v566 = vpack.c.bf16 %v516, %v515
      %v567 = vpack.c.bf16 %v518, %v517
      %v568 = vpack.c.bf16 %v520, %v519
      %v569 = vld [vmem:[%s341] sm:$0xf]
      %vm570 = vcmask 64512
      %v572 = vsel %vm570, %v553, 0
      %v575 = vsel %vm570, %v554, 0
      %v578 = vsel %vm570, %v555, 0
      %v581 = vsel %vm570, %v556, 0
      %v584 = vsel %vm570, %v557, 0
      %v587 = vsel %vm570, %v558, 0
      %v590 = vsel %vm570, %v559, 0
      %v593 = vsel %vm570, %v560, 0
      %v596 = vsel %vm570, %v561, 0
      %v599 = vsel %vm570, %v562, 0
      %v602 = vsel %vm570, %v563, 0
      %v605 = vsel %vm570, %v564, 0
      %v608 = vsel %vm570, %v565, 0
      %v611 = vsel %vm570, %v566, 0
      %v614 = vsel %vm570, %v567, 0
      %v617 = vsel %vm570, %v568, 0
      %vm619 = vcmask 1043456
      %v621 = vsel %vm619, %v569, 0
      %623 = vmatpush.bf16.msra.mxu0 0
      %624 = vmatpush.bf16.msra.mxu0 0
      %625 = vmatpush.bf16.msra.mxu0 0
      %626 = vmatpush.bf16.msra.mxu0 0
      %627 = vmatpush.bf16.msra.mxu0 0
      %628 = vmatpush.bf16.msra.mxu0 0
      %629 = vmatpush.bf16.msra.mxu0 0
      %630 = vmatpush.bf16.msra.mxu0 %v621
      %631 = vmatmul.bf16.gmra.mxu0 %v572
      %v632 = vpop.f32.mrf.mxu0
      %v633 = vadd.f32 0.0, %v632
      %v634 = vpop.f32.mrf.mxu0
      %v635 = vadd.f32 0.0, %v634
      %636 = vmatmul.bf16.gmra.mxu0 %v575
      %v637 = vpop.f32.mrf.mxu0
      %v638 = vadd.f32 0.0, %v637
      %v639 = vpop.f32.mrf.mxu0
      %v640 = vadd.f32 0.0, %v639
      %641 = vmatmul.bf16.gmra.mxu0 %v578
      %v642 = vpop.f32.mrf.mxu0
      %v643 = vadd.f32 0.0, %v642
      %v644 = vpop.f32.mrf.mxu0
      %v645 = vadd.f32 0.0, %v644
      %646 = vmatmul.bf16.gmra.mxu0 %v581
      %v647 = vpop.f32.mrf.mxu0
      %v648 = vadd.f32 0.0, %v647
      %v649 = vpop.f32.mrf.mxu0
      %v650 = vadd.f32 0.0, %v649
      %651 = vmatmul.bf16.gmra.mxu0 %v584
      %v652 = vpop.f32.mrf.mxu0
      %v653 = vadd.f32 0.0, %v652
      %v654 = vpop.f32.mrf.mxu0
      %v655 = vadd.f32 0.0, %v654
      %656 = vmatmul.bf16.gmra.mxu0 %v587
      %v657 = vpop.f32.mrf.mxu0
      %v658 = vadd.f32 0.0, %v657
      %v659 = vpop.f32.mrf.mxu0
      %v660 = vadd.f32 0.0, %v659
      %661 = vmatmul.bf16.gmra.mxu0 %v590
      %v662 = vpop.f32.mrf.mxu0
      %v663 = vadd.f32 0.0, %v662
      %v664 = vpop.f32.mrf.mxu0
      %v665 = vadd.f32 0.0, %v664
      %666 = vmatmul.bf16.gmra.mxu0 %v593
      %v667 = vpop.f32.mrf.mxu0
      %v668 = vadd.f32 0.0, %v667
      %v669 = vpop.f32.mrf.mxu0
      %v670 = vadd.f32 0.0, %v669
      %671 = vmatmul.bf16.gmra.mxu0 %v596
      %v672 = vpop.f32.mrf.mxu0
      %v673 = vadd.f32 0.0, %v672
      %v674 = vpop.f32.mrf.mxu0
      %v675 = vadd.f32 0.0, %v674
      %676 = vmatmul.bf16.gmra.mxu0 %v599
      %v677 = vpop.f32.mrf.mxu0
      %v678 = vadd.f32 0.0, %v677
      %v679 = vpop.f32.mrf.mxu0
      %v680 = vadd.f32 0.0, %v679
      %681 = vmatmul.bf16.gmra.mxu0 %v602
      %v682 = vpop.f32.mrf.mxu0
      %v683 = vadd.f32 0.0, %v682
      %v684 = vpop.f32.mrf.mxu0
      %v685 = vadd.f32 0.0, %v684
      %686 = vmatmul.bf16.gmra.mxu0 %v605
      %v687 = vpop.f32.mrf.mxu0
      %v688 = vadd.f32 0.0, %v687
      %v689 = vpop.f32.mrf.mxu0
      %v690 = vadd.f32 0.0, %v689
      %691 = vmatmul.bf16.gmra.mxu0 %v608
      %v692 = vpop.f32.mrf.mxu0
      %v693 = vadd.f32 0.0, %v692
      %v694 = vpop.f32.mrf.mxu0
      %v695 = vadd.f32 0.0, %v694
      %696 = vmatmul.bf16.gmra.mxu0 %v611
      %v697 = vpop.f32.mrf.mxu0
      %v698 = vadd.f32 0.0, %v697
      %v699 = vpop.f32.mrf.mxu0
      %v700 = vadd.f32 0.0, %v699
      %701 = vmatmul.bf16.gmra.mxu0 %v614
      %v702 = vpop.f32.mrf.mxu0
      %v703 = vadd.f32 0.0, %v702
      %v704 = vpop.f32.mrf.mxu0
      %v705 = vadd.f32 0.0, %v704
      %706 = vmatmul.bf16.gmra.mxu0 %v617
      %v707 = vpop.f32.mrf.mxu0
      %v708 = vadd.f32 0.0, %v707
      %v709 = vpop.f32.mrf.mxu0
      %v710 = vadd.f32 0.0, %v709
      %711 = vdwg.mxu0
      %v712 = vadd.f32 %v521, %v633
      %v713 = vadd.f32 %v522, %v635
      %v714 = vadd.f32 %v523, %v638
      %v715 = vadd.f32 %v524, %v640
      %v716 = vadd.f32 %v525, %v643
      %v717 = vadd.f32 %v526, %v645
      %v718 = vadd.f32 %v527, %v648
      %v719 = vadd.f32 %v528, %v650
      %v720 = vadd.f32 %v529, %v653
      %v721 = vadd.f32 %v530, %v655
      %v722 = vadd.f32 %v531, %v658
      %v723 = vadd.f32 %v532, %v660
      %v724 = vadd.f32 %v533, %v663
      %v725 = vadd.f32 %v534, %v665
      %v726 = vadd.f32 %v535, %v668
      %v727 = vadd.f32 %v536, %v670
      %v728 = vadd.f32 %v537, %v673
      %v729 = vadd.f32 %v538, %v675
      %v730 = vadd.f32 %v539, %v678
      %v731 = vadd.f32 %v540, %v680
      %v732 = vadd.f32 %v541, %v683
      %v733 = vadd.f32 %v542, %v685
      %v734 = vadd.f32 %v543, %v688
      %v735 = vadd.f32 %v544, %v690
      %v736 = vadd.f32 %v545, %v693
      %v737 = vadd.f32 %v546, %v695
      %v738 = vadd.f32 %v547, %v698
      %v739 = vadd.f32 %v548, %v700
      %v740 = vadd.f32 %v549, %v703
      %v741 = vadd.f32 %v550, %v705
      %v742 = vadd.f32 %v551, %v708
      %v743 = vadd.f32 %v552, %v710
      %vm744 = vcmask 261120
      %745 = vst.msk [vmem:[#allocation2] sm:$0xff] %vm744, %v712
      %746 = vst.msk [vmem:[#allocation2 + $0x8] sm:$0xff] %vm744, %v713
      %747 = vst.msk [vmem:[#allocation2 + $0x10] sm:$0xff] %vm744, %v714
      %748 = vst.msk [vmem:[#allocation2 + $0x18] sm:$0xff] %vm744, %v715
      %749 = vst.msk [vmem:[#allocation2 + $0x20] sm:$0xff] %vm744, %v716
      %750 = vst.msk [vmem:[#allocation2 + $0x28] sm:$0xff] %vm744, %v717
      %751 = vst.msk [vmem:[#allocation2 + $0x30] sm:$0xff] %vm744, %v718
      %752 = vst.msk [vmem:[#allocation2 + $0x38] sm:$0xff] %vm744, %v719
      %753 = vst.msk [vmem:[#allocation2 + $0x40] sm:$0xff] %vm744, %v720
      %754 = vst.msk [vmem:[#allocation2 + $0x48] sm:$0xff] %vm744, %v721
      %755 = vst.msk [vmem:[#allocation2 + $0x50] sm:$0xff] %vm744, %v722
      %756 = vst.msk [vmem:[#allocation2 + $0x58] sm:$0xff] %vm744, %v723
      %757 = vst.msk [vmem:[#allocation2 + $0x60] sm:$0xff] %vm744, %v724
      %758 = vst.msk [vmem:[#allocation2 + $0x68] sm:$0xff] %vm744, %v725
      %759 = vst.msk [vmem:[#allocation2 + $0x70] sm:$0xff] %vm744, %v726
      %760 = vst.msk [vmem:[#allocation2 + $0x78] sm:$0xff] %vm744, %v727
      %761 = vst.msk [vmem:[#allocation2 + $0x80] sm:$0xff] %vm744, %v728
      %762 = vst.msk [vmem:[#allocation2 + $0x88] sm:$0xff] %vm744, %v729
      %763 = vst.msk [vmem:[#allocation2 + $0x90] sm:$0xff] %vm744, %v730
      %764 = vst.msk [vmem:[#allocation2 + $0x98] sm:$0xff] %vm744, %v731
      %765 = vst.msk [vmem:[#allocation2 + $0xa0] sm:$0xff] %vm744, %v732
      %766 = vst.msk [vmem:[#allocation2 + $0xa8] sm:$0xff] %vm744, %v733
      %767 = vst.msk [vmem:[#allocation2 + $0xb0] sm:$0xff] %vm744, %v734
      %768 = vst.msk [vmem:[#allocation2 + $0xb8] sm:$0xff] %vm744, %v735
      %769 = vst.msk [vmem:[#allocation2 + $0xc0] sm:$0xff] %vm744, %v736
      %770 = vst.msk [vmem:[#allocation2 + $0xc8] sm:$0xff] %vm744, %v737
      %771 = vst.msk [vmem:[#allocation2 + $0xd0] sm:$0xff] %vm744, %v738
      %772 = vst.msk [vmem:[#allocation2 + $0xd8] sm:$0xff] %vm744, %v739
      %773 = vst.msk [vmem:[#allocation2 + $0xe0] sm:$0xff] %vm744, %v740
      %774 = vst.msk [vmem:[#allocation2 + $0xe8] sm:$0xff] %vm744, %v741
      %775 = vst.msk [vmem:[#allocation2 + $0xf0] sm:$0xff] %vm744, %v742
      %776 = vst.msk [vmem:[#allocation2 + $0xf8] sm:$0xff] %vm744, %v743
      // Predicated region
      $region53: #{tpu_custom_call.1} parent=47 // pred_check
        %p777 = pneg %p348
      $region54: #{tpu_custom_call.1} parent=47 // pred_check_branch
        %779 = sbr.rel (%p777) target = $region56
      $region55: #{tpu_custom_call.1} parent=47 // pred_region
        %v780 = vld [vmem:[#allocation2] sm:$0xff]
        %v781 = vld [vmem:[#allocation2 + $0x8] sm:$0xff]
        %v782 = vld [vmem:[#allocation2 + $0x10] sm:$0xff]
        %v783 = vld [vmem:[#allocation2 + $0x18] sm:$0xff]
        %v784 = vld [vmem:[#allocation2 + $0x20] sm:$0xff]
        %v785 = vld [vmem:[#allocation2 + $0x28] sm:$0xff]
        %v786 = vld [vmem:[#allocation2 + $0x30] sm:$0xff]
        %v787 = vld [vmem:[#allocation2 + $0x38] sm:$0xff]
        %v788 = vld [vmem:[#allocation2 + $0x40] sm:$0xff]
        %v789 = vld [vmem:[#allocation2 + $0x48] sm:$0xff]
        %v790 = vld [vmem:[#allocation2 + $0x50] sm:$0xff]
        %v791 = vld [vmem:[#allocation2 + $0x58] sm:$0xff]
        %v792 = vld [vmem:[#allocation2 + $0x60] sm:$0xff]
        %v793 = vld [vmem:[#allocation2 + $0x68] sm:$0xff]
        %v794 = vld [vmem:[#allocation2 + $0x70] sm:$0xff]
        %v795 = vld [vmem:[#allocation2 + $0x78] sm:$0xff]
        %v796 = vld [vmem:[#allocation2 + $0x80] sm:$0xff]
        %v797 = vld [vmem:[#allocation2 + $0x88] sm:$0xff]
        %v798 = vld [vmem:[#allocation2 + $0x90] sm:$0xff]
        %v799 = vld [vmem:[#allocation2 + $0x98] sm:$0xff]
        %v800 = vld [vmem:[#allocation2 + $0xa0] sm:$0xff]
        %v801 = vld [vmem:[#allocation2 + $0xa8] sm:$0xff]
        %v802 = vld [vmem:[#allocation2 + $0xb0] sm:$0xff]
        %v803 = vld [vmem:[#allocation2 + $0xb8] sm:$0xff]
        %v804 = vld [vmem:[#allocation2 + $0xc0] sm:$0xff]
        %v805 = vld [vmem:[#allocation2 + $0xc8] sm:$0xff]
        %v806 = vld [vmem:[#allocation2 + $0xd0] sm:$0xff]
        %v807 = vld [vmem:[#allocation2 + $0xd8] sm:$0xff]
        %v808 = vld [vmem:[#allocation2 + $0xe0] sm:$0xff]
        %v809 = vld [vmem:[#allocation2 + $0xe8] sm:$0xff]
        %v810 = vld [vmem:[#allocation2 + $0xf0] sm:$0xff]
        %v811 = vld [vmem:[#allocation2 + $0xf8] sm:$0xff]
        %v812 = vld [vmem:[%s4] sm:$0x1]
        %v814 = vperm.slane %v812, 0
        %v816 = vmul.f32 %v780, %v814
        %v817 = vmul.f32 %v781, %v814
        %v818 = vmul.f32 %v782, %v814
        %v819 = vmul.f32 %v783, %v814
        %v820 = vmul.f32 %v784, %v814
        %v821 = vmul.f32 %v785, %v814
        %v822 = vmul.f32 %v786, %v814
        %v823 = vmul.f32 %v787, %v814
        %v824 = vmul.f32 %v788, %v814
        %v825 = vmul.f32 %v789, %v814
        %v826 = vmul.f32 %v790, %v814
        %v827 = vmul.f32 %v791, %v814
        %v828 = vmul.f32 %v792, %v814
        %v829 = vmul.f32 %v793, %v814
        %v830 = vmul.f32 %v794, %v814
        %v831 = vmul.f32 %v795, %v814
        %v832 = vmul.f32 %v796, %v814
        %v833 = vmul.f32 %v797, %v814
        %v834 = vmul.f32 %v798, %v814
        %v835 = vmul.f32 %v799, %v814
        %v836 = vmul.f32 %v800, %v814
        %v837 = vmul.f32 %v801, %v814
        %v838 = vmul.f32 %v802, %v814
        %v839 = vmul.f32 %v803, %v814
        %v840 = vmul.f32 %v804, %v814
        %v841 = vmul.f32 %v805, %v814
        %v842 = vmul.f32 %v806, %v814
        %v843 = vmul.f32 %v807, %v814
        %v844 = vmul.f32 %v808, %v814
        %v845 = vmul.f32 %v809, %v814
        %v846 = vmul.f32 %v810, %v814
        %v847 = vmul.f32 %v811, %v814
        %v848 = vld [vmem:[%s5] sm:$0x1]
        %v850 = vperm.slane %v848, 0
        %v852 = vadd.f32 %v816, %v850
        %v853 = vadd.f32 %v817, %v850
        %v854 = vadd.f32 %v818, %v850
        %v855 = vadd.f32 %v819, %v850
        %v856 = vadd.f32 %v820, %v850
        %v857 = vadd.f32 %v821, %v850
        %v858 = vadd.f32 %v822, %v850
        %v859 = vadd.f32 %v823, %v850
        %v860 = vadd.f32 %v824, %v850
        %v861 = vadd.f32 %v825, %v850
        %v862 = vadd.f32 %v826, %v850
        %v863 = vadd.f32 %v827, %v850
        %v864 = vadd.f32 %v828, %v850
        %v865 = vadd.f32 %v829, %v850
        %v866 = vadd.f32 %v830, %v850
        %v867 = vadd.f32 %v831, %v850
        %v868 = vadd.f32 %v832, %v850
        %v869 = vadd.f32 %v833, %v850
        %v870 = vadd.f32 %v834, %v850
        %v871 = vadd.f32 %v835, %v850
        %v872 = vadd.f32 %v836, %v850
        %v873 = vadd.f32 %v837, %v850
        %v874 = vadd.f32 %v838, %v850
        %v875 = vadd.f32 %v839, %v850
        %v876 = vadd.f32 %v840, %v850
        %v877 = vadd.f32 %v841, %v850
        %v878 = vadd.f32 %v842, %v850
        %v879 = vadd.f32 %v843, %v850
        %v880 = vadd.f32 %v844, %v850
        %v881 = vadd.f32 %v845, %v850
        %v882 = vadd.f32 %v846, %v850
        %v883 = vadd.f32 %v847, %v850
        %v884 = vmax.f32 %v852, 0.0
        %v885 = vmax.f32 %v853, 0.0
        %v886 = vmax.f32 %v854, 0.0
        %v887 = vmax.f32 %v855, 0.0
        %v888 = vmax.f32 %v856, 0.0
        %v889 = vmax.f32 %v857, 0.0
        %v890 = vmax.f32 %v858, 0.0
        %v891 = vmax.f32 %v859, 0.0
        %v892 = vmax.f32 %v860, 0.0
        %v893 = vmax.f32 %v861, 0.0
        %v894 = vmax.f32 %v862, 0.0
        %v895 = vmax.f32 %v863, 0.0
        %v896 = vmax.f32 %v864, 0.0
        %v897 = vmax.f32 %v865, 0.0
        %v898 = vmax.f32 %v866, 0.0
        %v899 = vmax.f32 %v867, 0.0
        %v900 = vmax.f32 %v868, 0.0
        %v901 = vmax.f32 %v869, 0.0
        %v902 = vmax.f32 %v870, 0.0
        %v903 = vmax.f32 %v871, 0.0
        %v904 = vmax.f32 %v872, 0.0
        %v905 = vmax.f32 %v873, 0.0
        %v906 = vmax.f32 %v874, 0.0
        %v907 = vmax.f32 %v875, 0.0
        %v908 = vmax.f32 %v876, 0.0
        %v909 = vmax.f32 %v877, 0.0
        %v910 = vmax.f32 %v878, 0.0
        %v911 = vmax.f32 %v879, 0.0
        %v912 = vmax.f32 %v880, 0.0
        %v913 = vmax.f32 %v881, 0.0
        %v914 = vmax.f32 %v882, 0.0
        %v915 = vmax.f32 %v883, 0.0
        %v916 = vpack.c.bf16 %v884, %v884
        %v917 = vpack.c.bf16 %v885, %v885
        %v918 = vpack.c.bf16 %v886, %v886
        %v919 = vpack.c.bf16 %v887, %v887
        %v920 = vpack.c.bf16 %v888, %v888
        %v921 = vpack.c.bf16 %v889, %v889
        %v922 = vpack.c.bf16 %v890, %v890
        %v923 = vpack.c.bf16 %v891, %v891
        %v924 = vpack.c.bf16 %v892, %v892
        %v925 = vpack.c.bf16 %v893, %v893
        %v926 = vpack.c.bf16 %v894, %v894
        %v927 = vpack.c.bf16 %v895, %v895
        %v928 = vpack.c.bf16 %v896, %v896
        %v929 = vpack.c.bf16 %v897, %v897
        %v930 = vpack.c.bf16 %v898, %v898
        %v931 = vpack.c.bf16 %v899, %v899
        %v932 = vpack.c.bf16 %v900, %v900
        %v933 = vpack.c.bf16 %v901, %v901
        %v934 = vpack.c.bf16 %v902, %v902
        %v935 = vpack.c.bf16 %v903, %v903
        %v936 = vpack.c.bf16 %v904, %v904
        %v937 = vpack.c.bf16 %v905, %v905
        %v938 = vpack.c.bf16 %v906, %v906
        %v939 = vpack.c.bf16 %v907, %v907
        %v940 = vpack.c.bf16 %v908, %v908
        %v941 = vpack.c.bf16 %v909, %v909
        %v942 = vpack.c.bf16 %v910, %v910
        %v943 = vpack.c.bf16 %v911, %v911
        %v944 = vpack.c.bf16 %v912, %v912
        %v945 = vpack.c.bf16 %v913, %v913
        %v946 = vpack.c.bf16 %v914, %v914
        %v947 = vpack.c.bf16 %v915, %v915
        %vm948 = vsmask.f32 256
        %vm949 = vsmask.f32 4368
        %vm950 = vmor %vm948, %vm949
        %v952 = vshrl.u32 %v916, 16
        %v954 = vrot.slane %v952, 7
        %v955 = vshll.u32 %v916, 16
        %v957 = vor.u32 %v954, %v955
        %v958 = vrot.slane %v954, 4
        %v960 = vshrl.u32 %v917, 16
        %v962 = vrot.slane %v960, 7
        %v963 = vshll.u32 %v917, 16
        %v965 = vor.u32 %v962, %v963
        %v966 = vsel %vm950, %v958, %v965
        %v967 = vrot.slane %v962, 4
        %v969 = vshrl.u32 %v918, 16
        %v971 = vrot.slane %v969, 7
        %v972 = vshll.u32 %v918, 16
        %v974 = vor.u32 %v971, %v972
        %v975 = vrot.slane %v971, 4
        %v977 = vshrl.u32 %v919, 16
        %v979 = vrot.slane %v977, 7
        %v980 = vshll.u32 %v919, 16
        %v982 = vor.u32 %v979, %v980
        %v983 = vsel %vm950, %v975, %v982
        %v984 = vrot.slane %v979, 4
        %v986 = vshrl.u32 %v920, 16
        %v988 = vrot.slane %v986, 7
        %v989 = vshll.u32 %v920, 16
        %v991 = vor.u32 %v988, %v989
        %v992 = vrot.slane %v988, 4
        %v994 = vshrl.u32 %v921, 16
        %v996 = vrot.slane %v994, 7
        %v997 = vshll.u32 %v921, 16
        %v999 = vor.u32 %v996, %v997
        %v1000 = vsel %vm950, %v992, %v999
        %v1001 = vrot.slane %v996, 4
        %v1003 = vshrl.u32 %v922, 16
        %v1005 = vrot.slane %v1003, 7
        %v1006 = vshll.u32 %v922, 16
        %v1008 = vor.u32 %v1005, %v1006
        %v1009 = vrot.slane %v1005, 4
        %v1011 = vshrl.u32 %v923, 16
        %v1013 = vrot.slane %v1011, 7
        %v1014 = vshll.u32 %v923, 16
        %v1016 = vor.u32 %v1013, %v1014
        %v1017 = vsel %vm950, %v1009, %v1016
        %v1018 = vrot.slane %v1013, 4
        %v1020 = vshrl.u32 %v924, 16
        %v1022 = vrot.slane %v1020, 7
        %v1023 = vshll.u32 %v924, 16
        %v1025 = vor.u32 %v1022, %v1023
        %v1026 = vrot.slane %v1022, 4
        %v1028 = vshrl.u32 %v925, 16
        %v1030 = vrot.slane %v1028, 7
        %v1031 = vshll.u32 %v925, 16
        %v1033 = vor.u32 %v1030, %v1031
        %v1034 = vsel %vm950, %v1026, %v1033
        %v1035 = vrot.slane %v1030, 4
        %v1037 = vshrl.u32 %v926, 16
        %v1039 = vrot.slane %v1037, 7
        %v1040 = vshll.u32 %v926, 16
        %v1042 = vor.u32 %v1039, %v1040
        %v1043 = vrot.slane %v1039, 4
        %v1045 = vshrl.u32 %v927, 16
        %v1047 = vrot.slane %v1045, 7
        %v1048 = vshll.u32 %v927, 16
        %v1050 = vor.u32 %v1047, %v1048
        %v1051 = vsel %vm950, %v1043, %v1050
        %v1052 = vrot.slane %v1047, 4
        %v1054 = vshrl.u32 %v928, 16
        %v1056 = vrot.slane %v1054, 7
        %v1057 = vshll.u32 %v928, 16
        %v1059 = vor.u32 %v1056, %v1057
        %v1060 = vrot.slane %v1056, 4
        %v1062 = vshrl.u32 %v929, 16
        %v1064 = vrot.slane %v1062, 7
        %v1065 = vshll.u32 %v929, 16
        %v1067 = vor.u32 %v1064, %v1065
        %v1068 = vsel %vm950, %v1060, %v1067
        %v1069 = vrot.slane %v1064, 4
        %v1071 = vshrl.u32 %v930, 16
        %v1073 = vrot.slane %v1071, 7
        %v1074 = vshll.u32 %v930, 16
        %v1076 = vor.u32 %v1073, %v1074
        %v1077 = vrot.slane %v1073, 4
        %v1079 = vshrl.u32 %v931, 16
        %v1081 = vrot.slane %v1079, 7
        %v1082 = vshll.u32 %v931, 16
        %v1084 = vor.u32 %v1081, %v1082
        %v1085 = vsel %vm950, %v1077, %v1084
        %v1086 = vrot.slane %v1081, 4
        %v1088 = vshrl.u32 %v932, 16
        %v1090 = vrot.slane %v1088, 7
        %v1091 = vshll.u32 %v932, 16
        %v1093 = vor.u32 %v1090, %v1091
        %v1094 = vrot.slane %v1090, 4
        %v1096 = vshrl.u32 %v933, 16
        %v1098 = vrot.slane %v1096, 7
        %v1099 = vshll.u32 %v933, 16
        %v1101 = vor.u32 %v1098, %v1099
        %v1102 = vsel %vm950, %v1094, %v1101
        %v1103 = vrot.slane %v1098, 4
        %v1105 = vshrl.u32 %v934, 16
        %v1107 = vrot.slane %v1105, 7
        %v1108 = vshll.u32 %v934, 16
        %v1110 = vor.u32 %v1107, %v1108
        %v1111 = vrot.slane %v1107, 4
        %v1113 = vshrl.u32 %v935, 16
        %v1115 = vrot.slane %v1113, 7
        %v1116 = vshll.u32 %v935, 16
        %v1118 = vor.u32 %v1115, %v1116
        %v1119 = vsel %vm950, %v1111, %v1118
        %v1120 = vrot.slane %v1115, 4
        %v1122 = vshrl.u32 %v936, 16
        %v1124 = vrot.slane %v1122, 7
        %v1125 = vshll.u32 %v936, 16
        %v1127 = vor.u32 %v1124, %v1125
        %v1128 = vrot.slane %v1124, 4
        %v1130 = vshrl.u32 %v937, 16
        %v1132 = vrot.slane %v1130, 7
        %v1133 = vshll.u32 %v937, 16
        %v1135 = vor.u32 %v1132, %v1133
        %v1136 = vsel %vm950, %v1128, %v1135
        %v1137 = vrot.slane %v1132, 4
        %v1139 = vshrl.u32 %v938, 16
        %v1141 = vrot.slane %v1139, 7
        %v1142 = vshll.u32 %v938, 16
        %v1144 = vor.u32 %v1141, %v1142
        %v1145 = vrot.slane %v1141, 4
        %v1147 = vshrl.u32 %v939, 16
        %v1149 = vrot.slane %v1147, 7
        %v1150 = vshll.u32 %v939, 16
        %v1152 = vor.u32 %v1149, %v1150
        %v1153 = vsel %vm950, %v1145, %v1152
        %v1154 = vrot.slane %v1149, 4
        %v1156 = vshrl.u32 %v940, 16
        %v1158 = vrot.slane %v1156, 7
        %v1159 = vshll.u32 %v940, 16
        %v1161 = vor.u32 %v1158, %v1159
        %v1162 = vrot.slane %v1158, 4
        %v1164 = vshrl.u32 %v941, 16
        %v1166 = vrot.slane %v1164, 7
        %v1167 = vshll.u32 %v941, 16
        %v1169 = vor.u32 %v1166, %v1167
        %v1170 = vsel %vm950, %v1162, %v1169
        %v1171 = vrot.slane %v1166, 4
        %v1173 = vshrl.u32 %v942, 16
        %v1175 = vrot.slane %v1173, 7
        %v1176 = vshll.u32 %v942, 16
        %v1178 = vor.u32 %v1175, %v1176
        %v1179 = vrot.slane %v1175, 4
        %v1181 = vshrl.u32 %v943, 16
        %v1183 = vrot.slane %v1181, 7
        %v1184 = vshll.u32 %v943, 16
        %v1186 = vor.u32 %v1183, %v1184
        %v1187 = vsel %vm950, %v1179, %v1186
        %v1188 = vrot.slane %v1183, 4
        %v1190 = vshrl.u32 %v944, 16
        %v1192 = vrot.slane %v1190, 7
        %v1193 = vshll.u32 %v944, 16
        %v1195 = vor.u32 %v1192, %v1193
        %v1196 = vrot.slane %v1192, 4
        %v1198 = vshrl.u32 %v945, 16
        %v1200 = vrot.slane %v1198, 7
        %v1201 = vshll.u32 %v945, 16
        %v1203 = vor.u32 %v1200, %v1201
        %v1204 = vsel %vm950, %v1196, %v1203
        %v1205 = vrot.slane %v1200, 4
        %v1207 = vshrl.u32 %v946, 16
        %v1209 = vrot.slane %v1207, 7
        %v1210 = vshll.u32 %v946, 16
        %v1212 = vor.u32 %v1209, %v1210
        %v1213 = vrot.slane %v1209, 4
        %v1215 = vshrl.u32 %v947, 16
        %v1217 = vrot.slane %v1215, 7
        %v1218 = vshll.u32 %v947, 16
        %v1220 = vor.u32 %v1217, %v1218
        %v1221 = vsel %vm950, %v1213, %v1220
        %v1222 = vrot.slane %v1217, 4
        %vm1271 = vcmask 257024
        %vm1272 = vsmask.f32 7938
        %vm1273 = vmand %vm1271, %vm1272
        %v1274 = vld [vmem:[#allocation3] sm:$0xf]
        %v1275 = vsel %vm1273, %v957, %v1274
        %1276 = vst [vmem:[#allocation3] sm:$0xf] %v1275
        %vm1277 = vcmask 257024
        %1278 = vst.msk [vmem:[#allocation3 + $0x4] sm:$0xf] %vm1277, %v966
        %vm1279 = vcmask 253952
        %vm1280 = vmand %vm1279, %vm948
        %v1281 = vld [vmem:[#allocation3 + $0x8] sm:$0x1]
        %v1282 = vsel %vm1280, %v967, %v1281
        %1283 = vst [vmem:[#allocation3 + $0x8] sm:$0x1] %v1282
        %v1284 = vld [vmem:[#allocation3 + $0xc] sm:$0xf]
        %v1285 = vsel %vm1273, %v974, %v1284
        %1286 = vst [vmem:[#allocation3 + $0xc] sm:$0xf] %v1285
        %1287 = vst.msk [vmem:[#allocation3 + $0x10] sm:$0xf] %vm1277, %v983
        %v1288 = vld [vmem:[#allocation3 + $0x14] sm:$0x1]
        %v1289 = vsel %vm1280, %v984, %v1288
        %1290 = vst [vmem:[#allocation3 + $0x14] sm:$0x1] %v1289
        %v1291 = vld [vmem:[#allocation3 + $0x18] sm:$0xf]
        %v1292 = vsel %vm1273, %v991, %v1291
        %1293 = vst [vmem:[#allocation3 + $0x18] sm:$0xf] %v1292
        %1294 = vst.msk [vmem:[#allocation3 + $0x1c] sm:$0xf] %vm1277, %v1000
        %v1295 = vld [vmem:[#allocation3 + $0x20] sm:$0x1]
        %v1296 = vsel %vm1280, %v1001, %v1295
        %1297 = vst [vmem:[#allocation3 + $0x20] sm:$0x1] %v1296
        %v1298 = vld [vmem:[#allocation3 + $0x24] sm:$0xf]
        %v1299 = vsel %vm1273, %v1008, %v1298
        %1300 = vst [vmem:[#allocation3 + $0x24] sm:$0xf] %v1299
        %1301 = vst.msk [vmem:[#allocation3 + $0x28] sm:$0xf] %vm1277, %v1017
        %v1302 = vld [vmem:[#allocation3 + $0x2c] sm:$0x1]
        %v1303 = vsel %vm1280, %v1018, %v1302
        %1304 = vst [vmem:[#allocation3 + $0x2c] sm:$0x1] %v1303
        %v1305 = vld [vmem:[#allocation3 + $0x30] sm:$0xf]
        %v1306 = vsel %vm1273, %v1025, %v1305
        %1307 = vst [vmem:[#allocation3 + $0x30] sm:$0xf] %v1306
        %1308 = vst.msk [vmem:[#allocation3 + $0x34] sm:$0xf] %vm1277, %v1034
        %v1309 = vld [vmem:[#allocation3 + $0x38] sm:$0x1]
        %v1310 = vsel %vm1280, %v1035, %v1309
        %1311 = vst [vmem:[#allocation3 + $0x38] sm:$0x1] %v1310
        %v1312 = vld [vmem:[#allocation3 + $0x3c] sm:$0xf]
        %v1313 = vsel %vm1273, %v1042, %v1312
        %1314 = vst [vmem:[#allocation3 + $0x3c] sm:$0xf] %v1313
        %1315 = vst.msk [vmem:[#allocation3 + $0x40] sm:$0xf] %vm1277, %v1051
        %v1316 = vld [vmem:[#allocation3 + $0x44] sm:$0x1]
        %v1317 = vsel %vm1280, %v1052, %v1316
        %1318 = vst [vmem:[#allocation3 + $0x44] sm:$0x1] %v1317
        %v1319 = vld [vmem:[#allocation3 + $0x48] sm:$0xf]
        %v1320 = vsel %vm1273, %v1059, %v1319
        %1321 = vst [vmem:[#allocation3 + $0x48] sm:$0xf] %v1320
        %1322 = vst.msk [vmem:[#allocation3 + $0x4c] sm:$0xf] %vm1277, %v1068
        %v1323 = vld [vmem:[#allocation3 + $0x50] sm:$0x1]
        %v1324 = vsel %vm1280, %v1069, %v1323
        %1325 = vst [vmem:[#allocation3 + $0x50] sm:$0x1] %v1324
        %v1326 = vld [vmem:[#allocation3 + $0x54] sm:$0xf]
        %v1327 = vsel %vm1273, %v1076, %v1326
        %1328 = vst [vmem:[#allocation3 + $0x54] sm:$0xf] %v1327
        %1329 = vst.msk [vmem:[#allocation3 + $0x58] sm:$0xf] %vm1277, %v1085
        %v1330 = vld [vmem:[#allocation3 + $0x5c] sm:$0x1]
        %v1331 = vsel %vm1280, %v1086, %v1330
        %1332 = vst [vmem:[#allocation3 + $0x5c] sm:$0x1] %v1331
        %v1333 = vld [vmem:[#allocation3 + $0x60] sm:$0xf]
        %v1334 = vsel %vm1273, %v1093, %v1333
        %1335 = vst [vmem:[#allocation3 + $0x60] sm:$0xf] %v1334
        %1336 = vst.msk [vmem:[#allocation3 + $0x64] sm:$0xf] %vm1277, %v1102
        %v1337 = vld [vmem:[#allocation3 + $0x68] sm:$0x1]
        %v1338 = vsel %vm1280, %v1103, %v1337
        %1339 = vst [vmem:[#allocation3 + $0x68] sm:$0x1] %v1338
        %v1340 = vld [vmem:[#allocation3 + $0x6c] sm:$0xf]
        %v1341 = vsel %vm1273, %v1110, %v1340
        %1342 = vst [vmem:[#allocation3 + $0x6c] sm:$0xf] %v1341
        %1343 = vst.msk [vmem:[#allocation3 + $0x70] sm:$0xf] %vm1277, %v1119
        %v1344 = vld [vmem:[#allocation3 + $0x74] sm:$0x1]
        %v1345 = vsel %vm1280, %v1120, %v1344
        %1346 = vst [vmem:[#allocation3 + $0x74] sm:$0x1] %v1345
        %v1347 = vld [vmem:[#allocation3 + $0x78] sm:$0xf]
        %v1348 = vsel %vm1273, %v1127, %v1347
        %1349 = vst [vmem:[#allocation3 + $0x78] sm:$0xf] %v1348
        %1350 = vst.msk [vmem:[#allocation3 + $0x7c] sm:$0xf] %vm1277, %v1136
        %v1351 = vld [vmem:[#allocation3 + $0x80] sm:$0x1]
        %v1352 = vsel %vm1280, %v1137, %v1351
        %1353 = vst [vmem:[#allocation3 + $0x80] sm:$0x1] %v1352
        %v1354 = vld [vmem:[#allocation3 + $0x84] sm:$0xf]
        %v1355 = vsel %vm1273, %v1144, %v1354
        %1356 = vst [vmem:[#allocation3 + $0x84] sm:$0xf] %v1355
        %1357 = vst.msk [vmem:[#allocation3 + $0x88] sm:$0xf] %vm1277, %v1153
        %v1358 = vld [vmem:[#allocation3 + $0x8c] sm:$0x1]
        %v1359 = vsel %vm1280, %v1154, %v1358
        %1360 = vst [vmem:[#allocation3 + $0x8c] sm:$0x1] %v1359
        %v1361 = vld [vmem:[#allocation3 + $0x90] sm:$0xf]
        %v1362 = vsel %vm1273, %v1161, %v1361
        %1363 = vst [vmem:[#allocation3 + $0x90] sm:$0xf] %v1362
        %1364 = vst.msk [vmem:[#allocation3 + $0x94] sm:$0xf] %vm1277, %v1170
        %v1365 = vld [vmem:[#allocation3 + $0x98] sm:$0x1]
        %v1366 = vsel %vm1280, %v1171, %v1365
        %1367 = vst [vmem:[#allocation3 + $0x98] sm:$0x1] %v1366
        %v1368 = vld [vmem:[#allocation3 + $0x9c] sm:$0xf]
        %v1369 = vsel %vm1273, %v1178, %v1368
        %1370 = vst [vmem:[#allocation3 + $0x9c] sm:$0xf] %v1369
        %1371 = vst.msk [vmem:[#allocation3 + $0xa0] sm:$0xf] %vm1277, %v1187
        %v1372 = vld [vmem:[#allocation3 + $0xa4] sm:$0x1]
        %v1373 = vsel %vm1280, %v1188, %v1372
        %1374 = vst [vmem:[#allocation3 + $0xa4] sm:$0x1] %v1373
        %v1375 = vld [vmem:[#allocation3 + $0xa8] sm:$0xf]
        %v1376 = vsel %vm1273, %v1195, %v1375
        %1377 = vst [vmem:[#allocation3 + $0xa8] sm:$0xf] %v1376
        %1378 = vst.msk [vmem:[#allocation3 + $0xac] sm:$0xf] %vm1277, %v1204
        %v1379 = vld [vmem:[#allocation3 + $0xb0] sm:$0x1]
        %v1380 = vsel %vm1280, %v1205, %v1379
        %1381 = vst [vmem:[#allocation3 + $0xb0] sm:$0x1] %v1380
        %v1382 = vld [vmem:[#allocation3 + $0xb4] sm:$0xf]
        %v1383 = vsel %vm1273, %v1212, %v1382
        %1384 = vst [vmem:[#allocation3 + $0xb4] sm:$0xf] %v1383
        %1385 = vst.msk [vmem:[#allocation3 + $0xb8] sm:$0xf] %vm1277, %v1221
        %v1386 = vld [vmem:[#allocation3 + $0xbc] sm:$0x1]
        %v1387 = vsel %vm1280, %v1222, %v1386
        %1388 = vst [vmem:[#allocation3 + $0xbc] sm:$0x1] %v1387
        %v1389 = vld [vmem:[#allocation3] sm:$0x1]
        %v1390 = vsel %vm1280, 0, %v1389
        %1391 = vst [vmem:[#allocation3] sm:$0x1] %v1390
        %v1392 = vld [vmem:[#allocation3 + $0xc] sm:$0x1]
        %v1393 = vsel %vm1280, 0, %v1392
        %1394 = vst [vmem:[#allocation3 + $0xc] sm:$0x1] %v1393
        %v1395 = vld [vmem:[#allocation3 + $0x18] sm:$0x1]
        %v1396 = vsel %vm1280, 0, %v1395
        %1397 = vst [vmem:[#allocation3 + $0x18] sm:$0x1] %v1396
        %v1398 = vld [vmem:[#allocation3 + $0x24] sm:$0x1]
        %v1399 = vsel %vm1280, 0, %v1398
        %1400 = vst [vmem:[#allocation3 + $0x24] sm:$0x1] %v1399
        %v1401 = vld [vmem:[#allocation3 + $0x30] sm:$0x1]
        %v1402 = vsel %vm1280, 0, %v1401
        %1403 = vst [vmem:[#allocation3 + $0x30] sm:$0x1] %v1402
        %v1404 = vld [vmem:[#allocation3 + $0x3c] sm:$0x1]
        %v1405 = vsel %vm1280, 0, %v1404
        %1406 = vst [vmem:[#allocation3 + $0x3c] sm:$0x1] %v1405
        %v1407 = vld [vmem:[#allocation3 + $0x48] sm:$0x1]
        %v1408 = vsel %vm1280, 0, %v1407
        %1409 = vst [vmem:[#allocation3 + $0x48] sm:$0x1] %v1408
        %v1410 = vld [vmem:[#allocation3 + $0x54] sm:$0x1]
        %v1411 = vsel %vm1280, 0, %v1410
        %1412 = vst [vmem:[#allocation3 + $0x54] sm:$0x1] %v1411
        %v1413 = vld [vmem:[#allocation3 + $0x60] sm:$0x1]
        %v1414 = vsel %vm1280, 0, %v1413
        %1415 = vst [vmem:[#allocation3 + $0x60] sm:$0x1] %v1414
        %v1416 = vld [vmem:[#allocation3 + $0x6c] sm:$0x1]
        %v1417 = vsel %vm1280, 0, %v1416
        %1418 = vst [vmem:[#allocation3 + $0x6c] sm:$0x1] %v1417
        %v1419 = vld [vmem:[#allocation3 + $0x78] sm:$0x1]
        %v1420 = vsel %vm1280, 0, %v1419
        %1421 = vst [vmem:[#allocation3 + $0x78] sm:$0x1] %v1420
        %v1422 = vld [vmem:[#allocation3 + $0x84] sm:$0x1]
        %v1423 = vsel %vm1280, 0, %v1422
        %1424 = vst [vmem:[#allocation3 + $0x84] sm:$0x1] %v1423
        %v1425 = vld [vmem:[#allocation3 + $0x90] sm:$0x1]
        %v1426 = vsel %vm1280, 0, %v1425
        %1427 = vst [vmem:[#allocation3 + $0x90] sm:$0x1] %v1426
        %v1428 = vld [vmem:[#allocation3 + $0x9c] sm:$0x1]
        %v1429 = vsel %vm1280, 0, %v1428
        %1430 = vst [vmem:[#allocation3 + $0x9c] sm:$0x1] %v1429
        %v1431 = vld [vmem:[#allocation3 + $0xa8] sm:$0x1]
        %v1432 = vsel %vm1280, 0, %v1431
        %1433 = vst [vmem:[#allocation3 + $0xa8] sm:$0x1] %v1432
        %v1434 = vld [vmem:[#allocation3 + $0xb4] sm:$0x1]
        %v1435 = vsel %vm1280, 0, %v1434
        %1436 = vst [vmem:[#allocation3 + $0xb4] sm:$0x1] %v1435
        %vm1437 = vmand %vm1279, %vm1272
        %v1438 = vld [vmem:[#allocation3 + $0x8] sm:$0x1]
        %v1439 = vsel %vm1437, 0, %v1438
        %1440 = vst [vmem:[#allocation3 + $0x8] sm:$0x1] %v1439
        %v1441 = vld [vmem:[#allocation3 + $0x14] sm:$0x1]
        %v1442 = vsel %vm1437, 0, %v1441
        %1443 = vst [vmem:[#allocation3 + $0x14] sm:$0x1] %v1442
        %v1444 = vld [vmem:[#allocation3 + $0x20] sm:$0x1]
        %v1445 = vsel %vm1437, 0, %v1444
        %1446 = vst [vmem:[#allocation3 + $0x20] sm:$0x1] %v1445
        %v1447 = vld [vmem:[#allocation3 + $0x2c] sm:$0x1]
        %v1448 = vsel %vm1437, 0, %v1447
        %1449 = vst [vmem:[#allocation3 + $0x2c] sm:$0x1] %v1448
        %v1450 = vld [vmem:[#allocation3 + $0x38] sm:$0x1]
        %v1451 = vsel %vm1437, 0, %v1450
        %1452 = vst [vmem:[#allocation3 + $0x38] sm:$0x1] %v1451
        %v1453 = vld [vmem:[#allocation3 + $0x44] sm:$0x1]
        %v1454 = vsel %vm1437, 0, %v1453
        %1455 = vst [vmem:[#allocation3 + $0x44] sm:$0x1] %v1454
        %v1456 = vld [vmem:[#allocation3 + $0x50] sm:$0x1]
        %v1457 = vsel %vm1437, 0, %v1456
        %1458 = vst [vmem:[#allocation3 + $0x50] sm:$0x1] %v1457
        %v1459 = vld [vmem:[#allocation3 + $0x5c] sm:$0x1]
        %v1460 = vsel %vm1437, 0, %v1459
        %1461 = vst [vmem:[#allocation3 + $0x5c] sm:$0x1] %v1460
        %v1462 = vld [vmem:[#allocation3 + $0x68] sm:$0x1]
        %v1463 = vsel %vm1437, 0, %v1462
        %1464 = vst [vmem:[#allocation3 + $0x68] sm:$0x1] %v1463
        %v1465 = vld [vmem:[#allocation3 + $0x74] sm:$0x1]
        %v1466 = vsel %vm1437, 0, %v1465
        %1467 = vst [vmem:[#allocation3 + $0x74] sm:$0x1] %v1466
        %v1468 = vld [vmem:[#allocation3 + $0x80] sm:$0x1]
        %v1469 = vsel %vm1437, 0, %v1468
        %1470 = vst [vmem:[#allocation3 + $0x80] sm:$0x1] %v1469
        %v1471 = vld [vmem:[#allocation3 + $0x8c] sm:$0x1]
        %v1472 = vsel %vm1437, 0, %v1471
        %1473 = vst [vmem:[#allocation3 + $0x8c] sm:$0x1] %v1472
        %v1474 = vld [vmem:[#allocation3 + $0x98] sm:$0x1]
        %v1475 = vsel %vm1437, 0, %v1474
        %1476 = vst [vmem:[#allocation3 + $0x98] sm:$0x1] %v1475
        %v1477 = vld [vmem:[#allocation3 + $0xa4] sm:$0x1]
        %v1478 = vsel %vm1437, 0, %v1477
        %1479 = vst [vmem:[#allocation3 + $0xa4] sm:$0x1] %v1478
        %v1480 = vld [vmem:[#allocation3 + $0xb0] sm:$0x1]
        %v1481 = vsel %vm1437, 0, %v1480
        %1482 = vst [vmem:[#allocation3 + $0xb0] sm:$0x1] %v1481
        %v1483 = vld [vmem:[#allocation3 + $0xbc] sm:$0x1]
        %v1484 = vsel %vm1437, 0, %v1483
        %1485 = vst [vmem:[#allocation3 + $0xbc] sm:$0x1] %v1484
        %v1486 = vld [vmem:[#allocation3] sm:$0xf]
        %v1487 = vld [vmem:[#allocation3 + $0x4] sm:$0xf]
        %v1488 = vld [vmem:[#allocation3 + $0xc] sm:$0xf]
        %v1489 = vld [vmem:[#allocation3 + $0x10] sm:$0xf]
        %v1490 = vld [vmem:[#allocation3 + $0x18] sm:$0xf]
        %v1491 = vld [vmem:[#allocation3 + $0x1c] sm:$0xf]
        %v1492 = vld [vmem:[#allocation3 + $0x24] sm:$0xf]
        %v1493 = vld [vmem:[#allocation3 + $0x28] sm:$0xf]
        %v1494 = vld [vmem:[#allocation3 + $0x30] sm:$0xf]
        %v1495 = vld [vmem:[#allocation3 + $0x34] sm:$0xf]
        %v1496 = vld [vmem:[#allocation3 + $0x3c] sm:$0xf]
        %v1497 = vld [vmem:[#allocation3 + $0x40] sm:$0xf]
        %v1498 = vld [vmem:[#allocation3 + $0x48] sm:$0xf]
        %v1499 = vld [vmem:[#allocation3 + $0x4c] sm:$0xf]
        %v1500 = vld [vmem:[#allocation3 + $0x54] sm:$0xf]
        %v1501 = vld [vmem:[#allocation3 + $0x58] sm:$0xf]
        %v1502 = vld [vmem:[#allocation3 + $0x60] sm:$0xf]
        %v1503 = vld [vmem:[#allocation3 + $0x64] sm:$0xf]
        %v1504 = vld [vmem:[#allocation3 + $0x6c] sm:$0xf]
        %v1505 = vld [vmem:[#allocation3 + $0x70] sm:$0xf]
        %v1506 = vld [vmem:[#allocation3 + $0x78] sm:$0xf]
        %v1507 = vld [vmem:[#allocation3 + $0x7c] sm:$0xf]
        %v1508 = vld [vmem:[#allocation3 + $0x84] sm:$0xf]
        %v1509 = vld [vmem:[#allocation3 + $0x88] sm:$0xf]
        %v1510 = vld [vmem:[#allocation3 + $0x90] sm:$0xf]
        %v1511 = vld [vmem:[#allocation3 + $0x94] sm:$0xf]
        %v1512 = vld [vmem:[#allocation3 + $0x9c] sm:$0xf]
        %v1513 = vld [vmem:[#allocation3 + $0xa0] sm:$0xf]
        %v1514 = vld [vmem:[#allocation3 + $0xa8] sm:$0xf]
        %v1515 = vld [vmem:[#allocation3 + $0xac] sm:$0xf]
        %v1516 = vld [vmem:[#allocation3 + $0xb4] sm:$0xf]
        %v1517 = vld [vmem:[#allocation3 + $0xb8] sm:$0xf]
        %v1518 = vld [vmem:[#allocation3] sm:$0xe]
        %v1519 = vld [vmem:[#allocation3 + $0x8] sm:$0x1]
        %v1520 = vld [vmem:[#allocation3 + $0xc] sm:$0xe]
        %v1521 = vld [vmem:[#allocation3 + $0x14] sm:$0x1]
        %v1522 = vld [vmem:[#allocation3 + $0x18] sm:$0xe]
        %v1523 = vld [vmem:[#allocation3 + $0x20] sm:$0x1]
        %v1524 = vld [vmem:[#allocation3 + $0x24] sm:$0xe]
        %v1525 = vld [vmem:[#allocation3 + $0x2c] sm:$0x1]
        %v1526 = vld [vmem:[#allocation3 + $0x30] sm:$0xe]
        %v1527 = vld [vmem:[#allocation3 + $0x38] sm:$0x1]
        %v1528 = vld [vmem:[#allocation3 + $0x3c] sm:$0xe]
        %v1529 = vld [vmem:[#allocation3 + $0x44] sm:$0x1]
        %v1530 = vld [vmem:[#allocation3 + $0x48] sm:$0xe]
        %v1531 = vld [vmem:[#allocation3 + $0x50] sm:$0x1]
        %v1532 = vld [vmem:[#allocation3 + $0x54] sm:$0xe]
        %v1533 = vld [vmem:[#allocation3 + $0x5c] sm:$0x1]
        %v1534 = vld [vmem:[#allocation3 + $0x60] sm:$0xe]
        %v1535 = vld [vmem:[#allocation3 + $0x68] sm:$0x1]
        %v1536 = vld [vmem:[#allocation3 + $0x6c] sm:$0xe]
        %v1537 = vld [vmem:[#allocation3 + $0x74] sm:$0x1]
        %v1538 = vld [vmem:[#allocation3 + $0x78] sm:$0xe]
        %v1539 = vld [vmem:[#allocation3 + $0x80] sm:$0x1]
        %v1540 = vld [vmem:[#allocation3 + $0x84] sm:$0xe]
        %v1541 = vld [vmem:[#allocation3 + $0x8c] sm:$0x1]
        %v1542 = vld [vmem:[#allocation3 + $0x90] sm:$0xe]
        %v1543 = vld [vmem:[#allocation3 + $0x98] sm:$0x1]
        %v1544 = vld [vmem:[#allocation3 + $0x9c] sm:$0xe]
        %v1545 = vld [vmem:[#allocation3 + $0xa4] sm:$0x1]
        %v1546 = vld [vmem:[#allocation3 + $0xa8] sm:$0xe]
        %v1547 = vld [vmem:[#allocation3 + $0xb0] sm:$0x1]
        %v1548 = vld [vmem:[#allocation3 + $0xb4] sm:$0xe]
        %v1549 = vld [vmem:[#allocation3 + $0xbc] sm:$0x1]
        %v1582 = vunpack.c.l.b16 %v1486
        %v1583 = vunpack.c.l.b16 %v1487
        %v1584 = vunpack.c.l.b16 %v1488
        %v1585 = vunpack.c.l.b16 %v1489
        %v1586 = vunpack.c.l.b16 %v1490
        %v1587 = vunpack.c.l.b16 %v1491
        %v1588 = vunpack.c.l.b16 %v1492
        %v1589 = vunpack.c.l.b16 %v1493
        %v1590 = vunpack.c.l.b16 %v1494
        %v1591 = vunpack.c.l.b16 %v1495
        %v1592 = vunpack.c.l.b16 %v1496
        %v1593 = vunpack.c.l.b16 %v1497
        %v1594 = vunpack.c.l.b16 %v1498
        %v1595 = vunpack.c.l.b16 %v1499
        %v1596 = vunpack.c.l.b16 %v1500
        %v1597 = vunpack.c.l.b16 %v1501
        %v1598 = vunpack.c.l.b16 %v1502
        %v1599 = vunpack.c.l.b16 %v1503
        %v1600 = vunpack.c.l.b16 %v1504
        %v1601 = vunpack.c.l.b16 %v1505
        %v1602 = vunpack.c.l.b16 %v1506
        %v1603 = vunpack.c.l.b16 %v1507
        %v1604 = vunpack.c.l.b16 %v1508
        %v1605 = vunpack.c.l.b16 %v1509
        %v1606 = vunpack.c.l.b16 %v1510
        %v1607 = vunpack.c.l.b16 %v1511
        %v1608 = vunpack.c.l.b16 %v1512
        %v1609 = vunpack.c.l.b16 %v1513
        %v1610 = vunpack.c.l.b16 %v1514
        %v1611 = vunpack.c.l.b16 %v1515
        %v1612 = vunpack.c.l.b16 %v1516
        %v1613 = vunpack.c.l.b16 %v1517
        %v1614 = vpack.c.b16 %v1583, %v1582
        %v1615 = vpack.c.b16 %v1585, %v1584
        %v1616 = vpack.c.b16 %v1587, %v1586
        %v1617 = vpack.c.b16 %v1589, %v1588
        %v1618 = vpack.c.b16 %v1591, %v1590
        %v1619 = vpack.c.b16 %v1593, %v1592
        %v1620 = vpack.c.b16 %v1595, %v1594
        %v1621 = vpack.c.b16 %v1597, %v1596
        %v1622 = vpack.c.b16 %v1599, %v1598
        %v1623 = vpack.c.b16 %v1601, %v1600
        %v1624 = vpack.c.b16 %v1603, %v1602
        %v1625 = vpack.c.b16 %v1605, %v1604
        %v1626 = vpack.c.b16 %v1607, %v1606
        %v1627 = vpack.c.b16 %v1609, %v1608
        %v1628 = vpack.c.b16 %v1611, %v1610
        %v1629 = vpack.c.b16 %v1613, %v1612
        %v1662 = vunpack.c.l.b16 %v916
        %v1663 = vunpack.c.l.b16 %v917
        %v1664 = vunpack.c.l.b16 %v918
        %v1665 = vunpack.c.l.b16 %v919
        %v1666 = vunpack.c.l.b16 %v920
        %v1667 = vunpack.c.l.b16 %v921
        %v1668 = vunpack.c.l.b16 %v922
        %v1669 = vunpack.c.l.b16 %v923
        %v1670 = vunpack.c.l.b16 %v924
        %v1671 = vunpack.c.l.b16 %v925
        %v1672 = vunpack.c.l.b16 %v926
        %v1673 = vunpack.c.l.b16 %v927
        %v1674 = vunpack.c.l.b16 %v928
        %v1675 = vunpack.c.l.b16 %v929
        %v1676 = vunpack.c.l.b16 %v930
        %v1677 = vunpack.c.l.b16 %v931
        %v1678 = vunpack.c.l.b16 %v932
        %v1679 = vunpack.c.l.b16 %v933
        %v1680 = vunpack.c.l.b16 %v934
        %v1681 = vunpack.c.l.b16 %v935
        %v1682 = vunpack.c.l.b16 %v936
        %v1683 = vunpack.c.l.b16 %v937
        %v1684 = vunpack.c.l.b16 %v938
        %v1685 = vunpack.c.l.b16 %v939
        %v1686 = vunpack.c.l.b16 %v940
        %v1687 = vunpack.c.l.b16 %v941
        %v1688 = vunpack.c.l.b16 %v942
        %v1689 = vunpack.c.l.b16 %v943
        %v1690 = vunpack.c.l.b16 %v944
        %v1691 = vunpack.c.l.b16 %v945
        %v1692 = vunpack.c.l.b16 %v946
        %v1693 = vunpack.c.l.b16 %v947
        %v1694 = vpack.c.b16 %v1663, %v1662
        %v1695 = vpack.c.b16 %v1665, %v1664
        %v1696 = vpack.c.b16 %v1667, %v1666
        %v1697 = vpack.c.b16 %v1669, %v1668
        %v1698 = vpack.c.b16 %v1671, %v1670
        %v1699 = vpack.c.b16 %v1673, %v1672
        %v1700 = vpack.c.b16 %v1675, %v1674
        %v1701 = vpack.c.b16 %v1677, %v1676
        %v1702 = vpack.c.b16 %v1679, %v1678
        %v1703 = vpack.c.b16 %v1681, %v1680
        %v1704 = vpack.c.b16 %v1683, %v1682
        %v1705 = vpack.c.b16 %v1685, %v1684
        %v1706 = vpack.c.b16 %v1687, %v1686
        %v1707 = vpack.c.b16 %v1689, %v1688
        %v1708 = vpack.c.b16 %v1691, %v1690
        %v1709 = vpack.c.b16 %v1693, %v1692
        %1710 = vrot.lane.b32.xlu0 %v1694, 32
        %v1711 = vpop.permute.xlu0 %1710
        %1712 = vrot.lane.b32.xlu0 %v1695, 32
        %v1713 = vpop.permute.xlu0 %1712
        %1714 = vrot.lane.b32.xlu0 %v1696, 32
        %v1715 = vpop.permute.xlu0 %1714
        %1716 = vrot.lane.b32.xlu0 %v1697, 32
        %v1717 = vpop.permute.xlu0 %1716
        %1718 = vrot.lane.b32.xlu0 %v1698, 32
        %v1719 = vpop.permute.xlu0 %1718
        %1720 = vrot.lane.b32.xlu0 %v1699, 32
        %v1721 = vpop.permute.xlu0 %1720
        %1722 = vrot.lane.b32.xlu0 %v1700, 32
        %v1723 = vpop.permute.xlu0 %1722
        %1724 = vrot.lane.b32.xlu0 %v1701, 32
        %v1725 = vpop.permute.xlu0 %1724
        %1726 = vrot.lane.b32.xlu0 %v1702, 32
        %v1727 = vpop.permute.xlu0 %1726
        %1728 = vrot.lane.b32.xlu0 %v1703, 32
        %v1729 = vpop.permute.xlu0 %1728
        %1730 = vrot.lane.b32.xlu0 %v1704, 32
        %v1731 = vpop.permute.xlu0 %1730
        %1732 = vrot.lane.b32.xlu0 %v1705, 32
        %v1733 = vpop.permute.xlu0 %1732
        %1734 = vrot.lane.b32.xlu0 %v1706, 32
        %v1735 = vpop.permute.xlu0 %1734
        %1736 = vrot.lane.b32.xlu0 %v1707, 32
        %v1737 = vpop.permute.xlu0 %1736
        %1738 = vrot.lane.b32.xlu0 %v1708, 32
        %v1739 = vpop.permute.xlu0 %1738
        %1740 = vrot.lane.b32.xlu0 %v1709, 32
        %v1741 = vpop.permute.xlu0 %1740
        %v1774 = vunpack.c.l.b16 %v1518
        %v1775 = vunpack.c.l.b16 %v1519
        %v1776 = vunpack.c.l.b16 %v1520
        %v1777 = vunpack.c.l.b16 %v1521
        %v1778 = vunpack.c.l.b16 %v1522
        %v1779 = vunpack.c.l.b16 %v1523
        %v1780 = vunpack.c.l.b16 %v1524
        %v1781 = vunpack.c.l.b16 %v1525
        %v1782 = vunpack.c.l.b16 %v1526
        %v1783 = vunpack.c.l.b16 %v1527
        %v1784 = vunpack.c.l.b16 %v1528
        %v1785 = vunpack.c.l.b16 %v1529
        %v1786 = vunpack.c.l.b16 %v1530
        %v1787 = vunpack.c.l.b16 %v1531
        %v1788 = vunpack.c.l.b16 %v1532
        %v1789 = vunpack.c.l.b16 %v1533
        %v1790 = vunpack.c.l.b16 %v1534
        %v1791 = vunpack.c.l.b16 %v1535
        %v1792 = vunpack.c.l.b16 %v1536
        %v1793 = vunpack.c.l.b16 %v1537
        %v1794 = vunpack.c.l.b16 %v1538
        %v1795 = vunpack.c.l.b16 %v1539
        %v1796 = vunpack.c.l.b16 %v1540
        %v1797 = vunpack.c.l.b16 %v1541
        %v1798 = vunpack.c.l.b16 %v1542
        %v1799 = vunpack.c.l.b16 %v1543
        %v1800 = vunpack.c.l.b16 %v1544
        %v1801 = vunpack.c.l.b16 %v1545
        %v1802 = vunpack.c.l.b16 %v1546
        %v1803 = vunpack.c.l.b16 %v1547
        %v1804 = vunpack.c.l.b16 %v1548
        %v1805 = vunpack.c.l.b16 %v1549
        %v1806 = vpack.c.b16 %v1583, %v1774
        %v1807 = vpack.c.b16 %v1775, %v1775
        %v1808 = vpack.c.b16 %v1585, %v1776
        %v1809 = vpack.c.b16 %v1777, %v1777
        %v1810 = vpack.c.b16 %v1587, %v1778
        %v1811 = vpack.c.b16 %v1779, %v1779
        %v1812 = vpack.c.b16 %v1589, %v1780
        %v1813 = vpack.c.b16 %v1781, %v1781
        %v1814 = vpack.c.b16 %v1591, %v1782
        %v1815 = vpack.c.b16 %v1783, %v1783
        %v1816 = vpack.c.b16 %v1593, %v1784
        %v1817 = vpack.c.b16 %v1785, %v1785
        %v1818 = vpack.c.b16 %v1595, %v1786
        %v1819 = vpack.c.b16 %v1787, %v1787
        %v1820 = vpack.c.b16 %v1597, %v1788
        %v1821 = vpack.c.b16 %v1789, %v1789
        %v1822 = vpack.c.b16 %v1599, %v1790
        %v1823 = vpack.c.b16 %v1791, %v1791
        %v1824 = vpack.c.b16 %v1601, %v1792
        %v1825 = vpack.c.b16 %v1793, %v1793
        %v1826 = vpack.c.b16 %v1603, %v1794
        %v1827 = vpack.c.b16 %v1795, %v1795
        %v1828 = vpack.c.b16 %v1605, %v1796
        %v1829 = vpack.c.b16 %v1797, %v1797
        %v1830 = vpack.c.b16 %v1607, %v1798
        %v1831 = vpack.c.b16 %v1799, %v1799
        %v1832 = vpack.c.b16 %v1609, %v1800
        %v1833 = vpack.c.b16 %v1801, %v1801
        %v1834 = vpack.c.b16 %v1611, %v1802
        %v1835 = vpack.c.b16 %v1803, %v1803
        %v1836 = vpack.c.b16 %v1613, %v1804
        %v1837 = vpack.c.b16 %v1805, %v1805
        %vm1838 = vcmask 1046528
        %v1839 = vrot.slane %v1806, 1
        %v1840 = vrot.slane %v1807, 1
        %v1841 = vsel %vm1838, %v1839, %v1840
        %v1842 = vrot.slane %v1808, 1
        %v1843 = vrot.slane %v1809, 1
        %v1844 = vsel %vm1838, %v1842, %v1843
        %v1845 = vrot.slane %v1810, 1
        %v1846 = vrot.slane %v1811, 1
        %v1847 = vsel %vm1838, %v1845, %v1846
        %v1848 = vrot.slane %v1812, 1
        %v1849 = vrot.slane %v1813, 1
        %v1850 = vsel %vm1838, %v1848, %v1849
        %v1851 = vrot.slane %v1814, 1
        %v1852 = vrot.slane %v1815, 1
        %v1853 = vsel %vm1838, %v1851, %v1852
        %v1854 = vrot.slane %v1816, 1
        %v1855 = vrot.slane %v1817, 1
        %v1856 = vsel %vm1838, %v1854, %v1855
        %v1857 = vrot.slane %v1818, 1
        %v1858 = vrot.slane %v1819, 1
        %v1859 = vsel %vm1838, %v1857, %v1858
        %v1860 = vrot.slane %v1820, 1
        %v1861 = vrot.slane %v1821, 1
        %v1862 = vsel %vm1838, %v1860, %v1861
        %v1863 = vrot.slane %v1822, 1
        %v1864 = vrot.slane %v1823, 1
        %v1865 = vsel %vm1838, %v1863, %v1864
        %v1866 = vrot.slane %v1824, 1
        %v1867 = vrot.slane %v1825, 1
        %v1868 = vsel %vm1838, %v1866, %v1867
        %v1869 = vrot.slane %v1826, 1
        %v1870 = vrot.slane %v1827, 1
        %v1871 = vsel %vm1838, %v1869, %v1870
        %v1872 = vrot.slane %v1828, 1
        %v1873 = vrot.slane %v1829, 1
        %v1874 = vsel %vm1838, %v1872, %v1873
        %v1875 = vrot.slane %v1830, 1
        %v1876 = vrot.slane %v1831, 1
        %v1877 = vsel %vm1838, %v1875, %v1876
        %v1878 = vrot.slane %v1832, 1
        %v1879 = vrot.slane %v1833, 1
        %v1880 = vsel %vm1838, %v1878, %v1879
        %v1881 = vrot.slane %v1834, 1
        %v1882 = vrot.slane %v1835, 1
        %v1883 = vsel %vm1838, %v1881, %v1882
        %v1884 = vrot.slane %v1836, 1
        %v1885 = vrot.slane %v1837, 1
        %v1886 = vsel %vm1838, %v1884, %v1885
        %1887 = vrot.lane.b32.xlu0 %v1841, 64
        %v1888 = vpop.permute.xlu0 %1887
        %1889 = vrot.lane.b32.xlu0 %v1844, 64
        %v1890 = vpop.permute.xlu0 %1889
        %1891 = vrot.lane.b32.xlu0 %v1847, 64
        %v1892 = vpop.permute.xlu0 %1891
        %1893 = vrot.lane.b32.xlu0 %v1850, 64
        %v1894 = vpop.permute.xlu0 %1893
        %1895 = vrot.lane.b32.xlu0 %v1853, 64
        %v1896 = vpop.permute.xlu0 %1895
        %1897 = vrot.lane.b32.xlu0 %v1856, 64
        %v1898 = vpop.permute.xlu0 %1897
        %1899 = vrot.lane.b32.xlu0 %v1859, 64
        %v1900 = vpop.permute.xlu0 %1899
        %1901 = vrot.lane.b32.xlu0 %v1862, 64
        %v1902 = vpop.permute.xlu0 %1901
        %1903 = vrot.lane.b32.xlu0 %v1865, 64
        %v1904 = vpop.permute.xlu0 %1903
        %1905 = vrot.lane.b32.xlu0 %v1868, 64
        %v1906 = vpop.permute.xlu0 %1905
        %1907 = vrot.lane.b32.xlu0 %v1871, 64
        %v1908 = vpop.permute.xlu0 %1907
        %1909 = vrot.lane.b32.xlu0 %v1874, 64
        %v1910 = vpop.permute.xlu0 %1909
        %1911 = vrot.lane.b32.xlu0 %v1877, 64
        %v1912 = vpop.permute.xlu0 %1911
        %1913 = vrot.lane.b32.xlu0 %v1880, 64
        %v1914 = vpop.permute.xlu0 %1913
        %1915 = vrot.lane.b32.xlu0 %v1883, 64
        %v1916 = vpop.permute.xlu0 %1915
        %1917 = vrot.lane.b32.xlu0 %v1886, 64
        %v1918 = vpop.permute.xlu0 %1917
        %v1921 = vsel %vm744, %v1614, %v1711
        %v1924 = vsel %vm744, %v1615, %v1713
        %v1927 = vsel %vm744, %v1616, %v1715
        %v1930 = vsel %vm744, %v1617, %v1717
        %v1933 = vsel %vm744, %v1618, %v1719
        %v1936 = vsel %vm744, %v1619, %v1721
        %v1939 = vsel %vm744, %v1620, %v1723
        %v1942 = vsel %vm744, %v1621, %v1725
        %v1945 = vsel %vm744, %v1622, %v1727
        %v1948 = vsel %vm744, %v1623, %v1729
        %v1951 = vsel %vm744, %v1624, %v1731
        %v1954 = vsel %vm744, %v1625, %v1733
        %v1957 = vsel %vm744, %v1626, %v1735
        %v1960 = vsel %vm744, %v1627, %v1737
        %v1963 = vsel %vm744, %v1628, %v1739
        %v1966 = vsel %vm744, %v1629, %v1741
        %vm1967 = vcmask 523264
        %v1969 = vsel %vm1967, %v1921, %v1888
        %v1971 = vsel %vm1967, %v1924, %v1890
        %v1973 = vsel %vm1967, %v1927, %v1892
        %v1975 = vsel %vm1967, %v1930, %v1894
        %v1977 = vsel %vm1967, %v1933, %v1896
        %v1979 = vsel %vm1967, %v1936, %v1898
        %v1981 = vsel %vm1967, %v1939, %v1900
        %v1983 = vsel %vm1967, %v1942, %v1902
        %v1985 = vsel %vm1967, %v1945, %v1904
        %v1987 = vsel %vm1967, %v1948, %v1906
        %v1989 = vsel %vm1967, %v1951, %v1908
        %v1991 = vsel %vm1967, %v1954, %v1910
        %v1993 = vsel %vm1967, %v1957, %v1912
        %v1995 = vsel %vm1967, %v1960, %v1914
        %v1997 = vsel %vm1967, %v1963, %v1916
        %v1999 = vsel %vm1967, %v1966, %v1918
        %v2016 = vunpack.c.l.b16 %v1969
        %v2017 = vunpack.c.h.b16 %v1969
        %v2018 = vunpack.c.l.b16 %v1971
        %v2019 = vunpack.c.h.b16 %v1971
        %v2020 = vunpack.c.l.b16 %v1973
        %v2021 = vunpack.c.h.b16 %v1973
        %v2022 = vunpack.c.l.b16 %v1975
        %v2023 = vunpack.c.h.b16 %v1975
        %v2024 = vunpack.c.l.b16 %v1977
        %v2025 = vunpack.c.h.b16 %v1977
        %v2026 = vunpack.c.l.b16 %v1979
        %v2027 = vunpack.c.h.b16 %v1979
        %v2028 = vunpack.c.l.b16 %v1981
        %v2029 = vunpack.c.h.b16 %v1981
        %v2030 = vunpack.c.l.b16 %v1983
        %v2031 = vunpack.c.h.b16 %v1983
        %v2032 = vunpack.c.l.b16 %v1985
        %v2033 = vunpack.c.h.b16 %v1985
        %v2034 = vunpack.c.l.b16 %v1987
        %v2035 = vunpack.c.h.b16 %v1987
        %v2036 = vunpack.c.l.b16 %v1989
        %v2037 = vunpack.c.h.b16 %v1989
        %v2038 = vunpack.c.l.b16 %v1991
        %v2039 = vunpack.c.h.b16 %v1991
        %v2040 = vunpack.c.l.b16 %v1993
        %v2041 = vunpack.c.h.b16 %v1993
        %v2042 = vunpack.c.l.b16 %v1995
        %v2043 = vunpack.c.h.b16 %v1995
        %v2044 = vunpack.c.l.b16 %v1997
        %v2045 = vunpack.c.h.b16 %v1997
        %v2046 = vunpack.c.l.b16 %v1999
        %v2047 = vunpack.c.h.b16 %v1999
        %v2048 = vpack.c.b16 %v2016, %v2016
        %v2049 = vpack.c.b16 %v2017, %v2017
        %v2050 = vpack.c.b16 %v2018, %v2018
        %v2051 = vpack.c.b16 %v2019, %v2019
        %v2052 = vpack.c.b16 %v2020, %v2020
        %v2053 = vpack.c.b16 %v2021, %v2021
        %v2054 = vpack.c.b16 %v2022, %v2022
        %v2055 = vpack.c.b16 %v2023, %v2023
        %v2056 = vpack.c.b16 %v2024, %v2024
        %v2057 = vpack.c.b16 %v2025, %v2025
        %v2058 = vpack.c.b16 %v2026, %v2026
        %v2059 = vpack.c.b16 %v2027, %v2027
        %v2060 = vpack.c.b16 %v2028, %v2028
        %v2061 = vpack.c.b16 %v2029, %v2029
        %v2062 = vpack.c.b16 %v2030, %v2030
        %v2063 = vpack.c.b16 %v2031, %v2031
        %v2064 = vpack.c.b16 %v2032, %v2032
        %v2065 = vpack.c.b16 %v2033, %v2033
        %v2066 = vpack.c.b16 %v2034, %v2034
        %v2067 = vpack.c.b16 %v2035, %v2035
        %v2068 = vpack.c.b16 %v2036, %v2036
        %v2069 = vpack.c.b16 %v2037, %v2037
        %v2070 = vpack.c.b16 %v2038, %v2038
        %v2071 = vpack.c.b16 %v2039, %v2039
        %v2072 = vpack.c.b16 %v2040, %v2040
        %v2073 = vpack.c.b16 %v2041, %v2041
        %v2074 = vpack.c.b16 %v2042, %v2042
        %v2075 = vpack.c.b16 %v2043, %v2043
        %v2076 = vpack.c.b16 %v2044, %v2044
        %v2077 = vpack.c.b16 %v2045, %v2045
        %v2078 = vpack.c.b16 %v2046, %v2046
        %v2079 = vpack.c.b16 %v2047, %v2047
        %s2112 = scalar_lea.vmem [#allocation4], 8
        %vm2113 = vcmask 781312
        %2114 = vst.msk [vmem:[%s2112] sm:$0xf] %vm2113, %v2048
        %2115 = vst.msk [vmem:[%s2112 + $0x4] sm:$0xf] %vm2113, %v2049
        %2116 = vst.msk [vmem:[%s2112 + $0x8] sm:$0xf] %vm2113, %v2050
        %2117 = vst.msk [vmem:[%s2112 + $0xc] sm:$0xf] %vm2113, %v2051
        %2118 = vst.msk [vmem:[%s2112 + $0x10] sm:$0xf] %vm2113, %v2052
        %2119 = vst.msk [vmem:[%s2112 + $0x14] sm:$0xf] %vm2113, %v2053
        %2120 = vst.msk [vmem:[%s2112 + $0x18] sm:$0xf] %vm2113, %v2054
        %2121 = vst.msk [vmem:[%s2112 + $0x1c] sm:$0xf] %vm2113, %v2055
        %2122 = vst.msk [vmem:[%s2112 + $0x20] sm:$0xf] %vm2113, %v2056
        %2123 = vst.msk [vmem:[%s2112 + $0x24] sm:$0xf] %vm2113, %v2057
        %2124 = vst.msk [vmem:[%s2112 + $0x28] sm:$0xf] %vm2113, %v2058
        %2125 = vst.msk [vmem:[%s2112 + $0x2c] sm:$0xf] %vm2113, %v2059
        %2126 = vst.msk [vmem:[%s2112 + $0x30] sm:$0xf] %vm2113, %v2060
        %2127 = vst.msk [vmem:[%s2112 + $0x34] sm:$0xf] %vm2113, %v2061
        %2128 = vst.msk [vmem:[%s2112 + $0x38] sm:$0xf] %vm2113, %v2062
        %2129 = vst.msk [vmem:[%s2112 + $0x3c] sm:$0xf] %vm2113, %v2063
        %2130 = vst.msk [vmem:[%s2112 + $0x40] sm:$0xf] %vm2113, %v2064
        %2131 = vst.msk [vmem:[%s2112 + $0x44] sm:$0xf] %vm2113, %v2065
        %2132 = vst.msk [vmem:[%s2112 + $0x48] sm:$0xf] %vm2113, %v2066
        %2133 = vst.msk [vmem:[%s2112 + $0x4c] sm:$0xf] %vm2113, %v2067
        %2134 = vst.msk [vmem:[%s2112 + $0x50] sm:$0xf] %vm2113, %v2068
        %2135 = vst.msk [vmem:[%s2112 + $0x54] sm:$0xf] %vm2113, %v2069
        %2136 = vst.msk [vmem:[%s2112 + $0x58] sm:$0xf] %vm2113, %v2070
        %2137 = vst.msk [vmem:[%s2112 + $0x5c] sm:$0xf] %vm2113, %v2071
        %2138 = vst.msk [vmem:[%s2112 + $0x60] sm:$0xf] %vm2113, %v2072
        %2139 = vst.msk [vmem:[%s2112 + $0x64] sm:$0xf] %vm2113, %v2073
        %2140 = vst.msk [vmem:[%s2112 + $0x68] sm:$0xf] %vm2113, %v2074
        %2141 = vst.msk [vmem:[%s2112 + $0x6c] sm:$0xf] %vm2113, %v2075
        %2142 = vst.msk [vmem:[%s2112 + $0x70] sm:$0xf] %vm2113, %v2076
        %2143 = vst.msk [vmem:[%s2112 + $0x74] sm:$0xf] %vm2113, %v2077
        %2144 = vst.msk [vmem:[%s2112 + $0x78] sm:$0xf] %vm2113, %v2078
        %2145 = vst.msk [vmem:[%s2112 + $0x7c] sm:$0xf] %vm2113, %v2079
        %2146 = vst.msk [vmem:[#allocation4] sm:$0xf] %vm2113, 0
        %2147 = vst.msk [vmem:[#allocation4 + $0x4] sm:$0xf] %vm2113, 0
        %s2148 = scalar_lea.vmem [#allocation4], 136
        %2149 = vst.msk [vmem:[%s2148] sm:$0xf] %vm2113, 0
        %2150 = vst.msk [vmem:[%s2148 + $0x4] sm:$0xf] %vm2113, 0
        %v2151 = vld [vmem:[#allocation4] sm:$0xf]
        %v2152 = vld [vmem:[#allocation4 + $0x4] sm:$0xf]
        %v2153 = vld [vmem:[#allocation4 + $0x8] sm:$0xf]
        %v2154 = vld [vmem:[#allocation4 + $0xc] sm:$0xf]
        %v2155 = vld [vmem:[#allocation4 + $0x10] sm:$0xf]
        %v2156 = vld [vmem:[#allocation4 + $0x14] sm:$0xf]
        %v2157 = vld [vmem:[#allocation4 + $0x18] sm:$0xf]
        %v2158 = vld [vmem:[#allocation4 + $0x1c] sm:$0xf]
        %v2159 = vld [vmem:[#allocation4 + $0x20] sm:$0xf]
        %v2160 = vld [vmem:[#allocation4 + $0x24] sm:$0xf]
        %v2161 = vld [vmem:[#allocation4 + $0x28] sm:$0xf]
        %v2162 = vld [vmem:[#allocation4 + $0x2c] sm:$0xf]
        %v2163 = vld [vmem:[#allocation4 + $0x30] sm:$0xf]
        %v2164 = vld [vmem:[#allocation4 + $0x34] sm:$0xf]
        %v2165 = vld [vmem:[#allocation4 + $0x38] sm:$0xf]
        %v2166 = vld [vmem:[#allocation4 + $0x3c] sm:$0xf]
        %v2167 = vld [vmem:[#allocation4 + $0x40] sm:$0xf]
        %v2168 = vld [vmem:[#allocation4 + $0x44] sm:$0xf]
        %v2169 = vld [vmem:[#allocation4 + $0x48] sm:$0xf]
        %v2170 = vld [vmem:[#allocation4 + $0x4c] sm:$0xf]
        %v2171 = vld [vmem:[#allocation4 + $0x50] sm:$0xf]
        %v2172 = vld [vmem:[#allocation4 + $0x54] sm:$0xf]
        %v2173 = vld [vmem:[#allocation4 + $0x58] sm:$0xf]
        %v2174 = vld [vmem:[#allocation4 + $0x5c] sm:$0xf]
        %v2175 = vld [vmem:[#allocation4 + $0x60] sm:$0xf]
        %v2176 = vld [vmem:[#allocation4 + $0x64] sm:$0xf]
        %v2177 = vld [vmem:[#allocation4 + $0x68] sm:$0xf]
        %v2178 = vld [vmem:[#allocation4 + $0x6c] sm:$0xf]
        %v2179 = vld [vmem:[#allocation4 + $0x70] sm:$0xf]
        %v2180 = vld [vmem:[#allocation4 + $0x74] sm:$0xf]
        %v2181 = vld [vmem:[#allocation4 + $0x78] sm:$0xf]
        %v2182 = vld [vmem:[#allocation4 + $0x7c] sm:$0xf]
        %v2183 = vld [vmem:[%s6] sm:$0xf]
        %v2184 = vld [vmem:[%s6 + $0x4] sm:$0xf]
        %v2185 = vld [vmem:[%s6 + $0x8] sm:$0xf]
        %v2186 = vld [vmem:[%s6 + $0xc] sm:$0xf]
        %v2187 = vld [vmem:[%s6 + $0x10] sm:$0xf]
        %v2188 = vld [vmem:[%s6 + $0x14] sm:$0xf]
        %v2189 = vld [vmem:[%s6 + $0x18] sm:$0xf]
        %v2190 = vld [vmem:[%s6 + $0x1c] sm:$0xf]
        %v2191 = vld [vmem:[%s6 + $0x20] sm:$0xf]
        %v2192 = vld [vmem:[%s6 + $0x24] sm:$0xf]
        %v2193 = vld [vmem:[%s6 + $0x28] sm:$0xf]
        %v2194 = vld [vmem:[%s6 + $0x2c] sm:$0xf]
        %v2227 = vunpack.c.l.b16 %v2151
        %v2228 = vunpack.c.l.b16 %v2152
        %v2229 = vunpack.c.l.b16 %v2153
        %v2230 = vunpack.c.l.b16 %v2154
        %v2231 = vunpack.c.l.b16 %v2155
        %v2232 = vunpack.c.l.b16 %v2156
        %v2233 = vunpack.c.l.b16 %v2157
        %v2234 = vunpack.c.l.b16 %v2158
        %v2235 = vunpack.c.l.b16 %v2159
        %v2236 = vunpack.c.l.b16 %v2160
        %v2237 = vunpack.c.l.b16 %v2161
        %v2238 = vunpack.c.l.b16 %v2162
        %v2239 = vunpack.c.l.b16 %v2163
        %v2240 = vunpack.c.l.b16 %v2164
        %v2241 = vunpack.c.l.b16 %v2165
        %v2242 = vunpack.c.l.b16 %v2166
        %v2243 = vunpack.c.l.b16 %v2167
        %v2244 = vunpack.c.l.b16 %v2168
        %v2245 = vunpack.c.l.b16 %v2169
        %v2246 = vunpack.c.l.b16 %v2170
        %v2247 = vunpack.c.l.b16 %v2171
        %v2248 = vunpack.c.l.b16 %v2172
        %v2249 = vunpack.c.l.b16 %v2173
        %v2250 = vunpack.c.l.b16 %v2174
        %v2251 = vunpack.c.l.b16 %v2175
        %v2252 = vunpack.c.l.b16 %v2176
        %v2253 = vunpack.c.l.b16 %v2177
        %v2254 = vunpack.c.l.b16 %v2178
        %v2255 = vunpack.c.l.b16 %v2179
        %v2256 = vunpack.c.l.b16 %v2180
        %v2257 = vunpack.c.l.b16 %v2181
        %v2258 = vunpack.c.l.b16 %v2182
        %v2259 = vpack.c.b16 %v2228, %v2227
        %v2260 = vpack.c.b16 %v2230, %v2229
        %v2261 = vpack.c.b16 %v2232, %v2231
        %v2262 = vpack.c.b16 %v2234, %v2233
        %v2263 = vpack.c.b16 %v2236, %v2235
        %v2264 = vpack.c.b16 %v2238, %v2237
        %v2265 = vpack.c.b16 %v2240, %v2239
        %v2266 = vpack.c.b16 %v2242, %v2241
        %v2267 = vpack.c.b16 %v2244, %v2243
        %v2268 = vpack.c.b16 %v2246, %v2245
        %v2269 = vpack.c.b16 %v2248, %v2247
        %v2270 = vpack.c.b16 %v2250, %v2249
        %v2271 = vpack.c.b16 %v2252, %v2251
        %v2272 = vpack.c.b16 %v2254, %v2253
        %v2273 = vpack.c.b16 %v2256, %v2255
        %v2274 = vpack.c.b16 %v2258, %v2257
        %v2287 = vunpack.c.l.b16 %v2183
        %v2288 = vunpack.c.l.b16 %v2184
        %v2289 = vunpack.c.l.b16 %v2185
        %v2290 = vunpack.c.l.b16 %v2186
        %v2291 = vunpack.c.l.b16 %v2187
        %v2292 = vunpack.c.l.b16 %v2188
        %v2293 = vunpack.c.l.b16 %v2189
        %v2294 = vunpack.c.l.b16 %v2190
        %v2295 = vunpack.c.l.b16 %v2191
        %v2296 = vunpack.c.l.b16 %v2192
        %v2297 = vunpack.c.l.b16 %v2193
        %v2298 = vunpack.c.l.b16 %v2194
        %v2299 = vpack.c.b16 %v2288, %v2287
        %v2300 = vpack.c.b16 %v2290, %v2289
        %v2301 = vpack.c.b16 %v2292, %v2291
        %v2302 = vpack.c.b16 %v2294, %v2293
        %v2303 = vpack.c.b16 %v2296, %v2295
        %v2304 = vpack.c.b16 %v2298, %v2297
        %vm2311 = vcmask 785408
        %v2313 = vsel %vm2311, %v2259, 0
        %v2316 = vsel %vm2311, %v2260, 0
        %v2319 = vsel %vm2311, %v2261, 0
        %v2322 = vsel %vm2311, %v2262, 0
        %v2325 = vsel %vm2311, %v2263, 0
        %v2328 = vsel %vm2311, %v2264, 0
        %v2331 = vsel %vm2311, %v2265, 0
        %v2334 = vsel %vm2311, %v2266, 0
        %v2337 = vsel %vm2311, %v2267, 0
        %v2340 = vsel %vm2311, %v2268, 0
        %v2343 = vsel %vm2311, %v2269, 0
        %v2346 = vsel %vm2311, %v2270, 0
        %v2349 = vsel %vm2311, %v2271, 0
        %v2352 = vsel %vm2311, %v2272, 0
        %v2355 = vsel %vm2311, %v2273, 0
        %v2358 = vsel %vm2311, %v2274, 0
        %2360 = vmatpush.bf16.msra.mxu0 0
        %2361 = vmatpush.bf16.msra.mxu0 0
        %2362 = vmatpush.bf16.msra.mxu0 %v2304
        %2363 = vmatpush.bf16.msra.mxu0 %v2303
        %2364 = vmatpush.bf16.msra.mxu0 %v2302
        %2365 = vmatpush.bf16.msra.mxu0 %v2301
        %2366 = vmatpush.bf16.msra.mxu0 %v2300
        %2367 = vmatpush.bf16.msra.mxu0 %v2299
        %2368 = vmatmul.bf16.gmra.mxu0 %v2313
        %v2369 = vpop.f32.mrf.mxu0
        %v2370 = vadd.f32 0.0, %v2369
        %v2371 = vpop.f32.mrf.mxu0
        %v2372 = vadd.f32 0.0, %v2371
        %2373 = vmatmul.bf16.gmra.mxu0 %v2316
        %v2374 = vpop.f32.mrf.mxu0
        %v2375 = vadd.f32 0.0, %v2374
        %v2376 = vpop.f32.mrf.mxu0
        %v2377 = vadd.f32 0.0, %v2376
        %2378 = vmatmul.bf16.gmra.mxu0 %v2319
        %v2379 = vpop.f32.mrf.mxu0
        %v2380 = vadd.f32 0.0, %v2379
        %v2381 = vpop.f32.mrf.mxu0
        %v2382 = vadd.f32 0.0, %v2381
        %2383 = vmatmul.bf16.gmra.mxu0 %v2322
        %v2384 = vpop.f32.mrf.mxu0
        %v2385 = vadd.f32 0.0, %v2384
        %v2386 = vpop.f32.mrf.mxu0
        %v2387 = vadd.f32 0.0, %v2386
        %2388 = vmatmul.bf16.gmra.mxu0 %v2325
        %v2389 = vpop.f32.mrf.mxu0
        %v2390 = vadd.f32 0.0, %v2389
        %v2391 = vpop.f32.mrf.mxu0
        %v2392 = vadd.f32 0.0, %v2391
        %2393 = vmatmul.bf16.gmra.mxu0 %v2328
        %v2394 = vpop.f32.mrf.mxu0
        %v2395 = vadd.f32 0.0, %v2394
        %v2396 = vpop.f32.mrf.mxu0
        %v2397 = vadd.f32 0.0, %v2396
        %2398 = vmatmul.bf16.gmra.mxu0 %v2331
        %v2399 = vpop.f32.mrf.mxu0
        %v2400 = vadd.f32 0.0, %v2399
        %v2401 = vpop.f32.mrf.mxu0
        %v2402 = vadd.f32 0.0, %v2401
        %2403 = vmatmul.bf16.gmra.mxu0 %v2334
        %v2404 = vpop.f32.mrf.mxu0
        %v2405 = vadd.f32 0.0, %v2404
        %v2406 = vpop.f32.mrf.mxu0
        %v2407 = vadd.f32 0.0, %v2406
        %2408 = vmatmul.bf16.gmra.mxu0 %v2337
        %v2409 = vpop.f32.mrf.mxu0
        %v2410 = vadd.f32 0.0, %v2409
        %v2411 = vpop.f32.mrf.mxu0
        %v2412 = vadd.f32 0.0, %v2411
        %2413 = vmatmul.bf16.gmra.mxu0 %v2340
        %v2414 = vpop.f32.mrf.mxu0
        %v2415 = vadd.f32 0.0, %v2414
        %v2416 = vpop.f32.mrf.mxu0
        %v2417 = vadd.f32 0.0, %v2416
        %2418 = vmatmul.bf16.gmra.mxu0 %v2343
        %v2419 = vpop.f32.mrf.mxu0
        %v2420 = vadd.f32 0.0, %v2419
        %v2421 = vpop.f32.mrf.mxu0
        %v2422 = vadd.f32 0.0, %v2421
        %2423 = vmatmul.bf16.gmra.mxu0 %v2346
        %v2424 = vpop.f32.mrf.mxu0
        %v2425 = vadd.f32 0.0, %v2424
        %v2426 = vpop.f32.mrf.mxu0
        %v2427 = vadd.f32 0.0, %v2426
        %2428 = vmatmul.bf16.gmra.mxu0 %v2349
        %v2429 = vpop.f32.mrf.mxu0
        %v2430 = vadd.f32 0.0, %v2429
        %v2431 = vpop.f32.mrf.mxu0
        %v2432 = vadd.f32 0.0, %v2431
        %2433 = vmatmul.bf16.gmra.mxu0 %v2352
        %v2434 = vpop.f32.mrf.mxu0
        %v2435 = vadd.f32 0.0, %v2434
        %v2436 = vpop.f32.mrf.mxu0
        %v2437 = vadd.f32 0.0, %v2436
        %2438 = vmatmul.bf16.gmra.mxu0 %v2355
        %v2439 = vpop.f32.mrf.mxu0
        %v2440 = vadd.f32 0.0, %v2439
        %v2441 = vpop.f32.mrf.mxu0
        %v2442 = vadd.f32 0.0, %v2441
        %2443 = vmatmul.bf16.gmra.mxu0 %v2358
        %v2444 = vpop.f32.mrf.mxu0
        %v2445 = vadd.f32 0.0, %v2444
        %v2446 = vpop.f32.mrf.mxu0
        %v2447 = vadd.f32 0.0, %v2446
        %2448 = vdwg.mxu0
        %2449 = vst.msk [vmem:[#allocation5] sm:$0xff] %vm570, %v2370
        %2450 = vst.msk [vmem:[#allocation5 + $0x8] sm:$0xff] %vm570, %v2372
        %2451 = vst.msk [vmem:[#allocation5 + $0x10] sm:$0xff] %vm570, %v2375
        %2452 = vst.msk [vmem:[#allocation5 + $0x18] sm:$0xff] %vm570, %v2377
        %2453 = vst.msk [vmem:[#allocation5 + $0x20] sm:$0xff] %vm570, %v2380
        %2454 = vst.msk [vmem:[#allocation5 + $0x28] sm:$0xff] %vm570, %v2382
        %2455 = vst.msk [vmem:[#allocation5 + $0x30] sm:$0xff] %vm570, %v2385
        %2456 = vst.msk [vmem:[#allocation5 + $0x38] sm:$0xff] %vm570, %v2387
        %2457 = vst.msk [vmem:[#allocation5 + $0x40] sm:$0xff] %vm570, %v2390
        %2458 = vst.msk [vmem:[#allocation5 + $0x48] sm:$0xff] %vm570, %v2392
        %2459 = vst.msk [vmem:[#allocation5 + $0x50] sm:$0xff] %vm570, %v2395
        %2460 = vst.msk [vmem:[#allocation5 + $0x58] sm:$0xff] %vm570, %v2397
        %2461 = vst.msk [vmem:[#allocation5 + $0x60] sm:$0xff] %vm570, %v2400
        %2462 = vst.msk [vmem:[#allocation5 + $0x68] sm:$0xff] %vm570, %v2402
        %2463 = vst.msk [vmem:[#allocation5 + $0x70] sm:$0xff] %vm570, %v2405
        %2464 = vst.msk [vmem:[#allocation5 + $0x78] sm:$0xff] %vm570, %v2407
        %2465 = vst.msk [vmem:[#allocation5 + $0x80] sm:$0xff] %vm570, %v2410
        %2466 = vst.msk [vmem:[#allocation5 + $0x88] sm:$0xff] %vm570, %v2412
        %2467 = vst.msk [vmem:[#allocation5 + $0x90] sm:$0xff] %vm570, %v2415
        %2468 = vst.msk [vmem:[#allocation5 + $0x98] sm:$0xff] %vm570, %v2417
        %2469 = vst.msk [vmem:[#allocation5 + $0xa0] sm:$0xff] %vm570, %v2420
        %2470 = vst.msk [vmem:[#allocation5 + $0xa8] sm:$0xff] %vm570, %v2422
        %2471 = vst.msk [vmem:[#allocation5 + $0xb0] sm:$0xff] %vm570, %v2425
        %2472 = vst.msk [vmem:[#allocation5 + $0xb8] sm:$0xff] %vm570, %v2427
        %2473 = vst.msk [vmem:[#allocation5 + $0xc0] sm:$0xff] %vm570, %v2430
        %2474 = vst.msk [vmem:[#allocation5 + $0xc8] sm:$0xff] %vm570, %v2432
        %2475 = vst.msk [vmem:[#allocation5 + $0xd0] sm:$0xff] %vm570, %v2435
        %2476 = vst.msk [vmem:[#allocation5 + $0xd8] sm:$0xff] %vm570, %v2437
        %2477 = vst.msk [vmem:[#allocation5 + $0xe0] sm:$0xff] %vm570, %v2440
        %2478 = vst.msk [vmem:[#allocation5 + $0xe8] sm:$0xff] %vm570, %v2442
        %2479 = vst.msk [vmem:[#allocation5 + $0xf0] sm:$0xff] %vm570, %v2445
        %2480 = vst.msk [vmem:[#allocation5 + $0xf8] sm:$0xff] %vm570, %v2447
        %v2481 = vld [vmem:[%s2112] sm:$0xf]
        %v2482 = vld [vmem:[%s2112 + $0x4] sm:$0xf]
        %v2483 = vld [vmem:[%s2112 + $0x8] sm:$0xf]
        %v2484 = vld [vmem:[%s2112 + $0xc] sm:$0xf]
        %v2485 = vld [vmem:[%s2112 + $0x10] sm:$0xf]
        %v2486 = vld [vmem:[%s2112 + $0x14] sm:$0xf]
        %v2487 = vld [vmem:[%s2112 + $0x18] sm:$0xf]
        %v2488 = vld [vmem:[%s2112 + $0x1c] sm:$0xf]
        %v2489 = vld [vmem:[%s2112 + $0x20] sm:$0xf]
        %v2490 = vld [vmem:[%s2112 + $0x24] sm:$0xf]
        %v2491 = vld [vmem:[%s2112 + $0x28] sm:$0xf]
        %v2492 = vld [vmem:[%s2112 + $0x2c] sm:$0xf]
        %v2493 = vld [vmem:[%s2112 + $0x30] sm:$0xf]
        %v2494 = vld [vmem:[%s2112 + $0x34] sm:$0xf]
        %v2495 = vld [vmem:[%s2112 + $0x38] sm:$0xf]
        %v2496 = vld [vmem:[%s2112 + $0x3c] sm:$0xf]
        %v2497 = vld [vmem:[%s2112 + $0x40] sm:$0xf]
        %v2498 = vld [vmem:[%s2112 + $0x44] sm:$0xf]
        %v2499 = vld [vmem:[%s2112 + $0x48] sm:$0xf]
        %v2500 = vld [vmem:[%s2112 + $0x4c] sm:$0xf]
        %v2501 = vld [vmem:[%s2112 + $0x50] sm:$0xf]
        %v2502 = vld [vmem:[%s2112 + $0x54] sm:$0xf]
        %v2503 = vld [vmem:[%s2112 + $0x58] sm:$0xf]
        %v2504 = vld [vmem:[%s2112 + $0x5c] sm:$0xf]
        %v2505 = vld [vmem:[%s2112 + $0x60] sm:$0xf]
        %v2506 = vld [vmem:[%s2112 + $0x64] sm:$0xf]
        %v2507 = vld [vmem:[%s2112 + $0x68] sm:$0xf]
        %v2508 = vld [vmem:[%s2112 + $0x6c] sm:$0xf]
        %v2509 = vld [vmem:[%s2112 + $0x70] sm:$0xf]
        %v2510 = vld [vmem:[%s2112 + $0x74] sm:$0xf]
        %v2511 = vld [vmem:[%s2112 + $0x78] sm:$0xf]
        %v2512 = vld [vmem:[%s2112 + $0x7c] sm:$0xf]
        %s2513 = scalar_lea.vmem %s6, 48
        %v2514 = vld [vmem:[%s2513] sm:$0xf]
        %v2515 = vld [vmem:[%s2513 + $0x4] sm:$0xf]
        %v2516 = vld [vmem:[%s2513 + $0x8] sm:$0xf]
        %v2517 = vld [vmem:[%s2513 + $0xc] sm:$0xf]
        %v2518 = vld [vmem:[%s2513 + $0x10] sm:$0xf]
        %v2519 = vld [vmem:[%s2513 + $0x14] sm:$0xf]
        %v2520 = vld [vmem:[%s2513 + $0x18] sm:$0xf]
        %v2521 = vld [vmem:[%s2513 + $0x1c] sm:$0xf]
        %v2522 = vld [vmem:[%s2513 + $0x20] sm:$0xf]
        %v2523 = vld [vmem:[%s2513 + $0x24] sm:$0xf]
        %v2524 = vld [vmem:[%s2513 + $0x28] sm:$0xf]
        %v2525 = vld [vmem:[%s2513 + $0x2c] sm:$0xf]
        %v2558 = vunpack.c.l.b16 %v2481
        %v2559 = vunpack.c.l.b16 %v2482
        %v2560 = vunpack.c.l.b16 %v2483
        %v2561 = vunpack.c.l.b16 %v2484
        %v2562 = vunpack.c.l.b16 %v2485
        %v2563 = vunpack.c.l.b16 %v2486
        %v2564 = vunpack.c.l.b16 %v2487
        %v2565 = vunpack.c.l.b16 %v2488
        %v2566 = vunpack.c.l.b16 %v2489
        %v2567 = vunpack.c.l.b16 %v2490
        %v2568 = vunpack.c.l.b16 %v2491
        %v2569 = vunpack.c.l.b16 %v2492
        %v2570 = vunpack.c.l.b16 %v2493
        %v2571 = vunpack.c.l.b16 %v2494
        %v2572 = vunpack.c.l.b16 %v2495
        %v2573 = vunpack.c.l.b16 %v2496
        %v2574 = vunpack.c.l.b16 %v2497
        %v2575 = vunpack.c.l.b16 %v2498
        %v2576 = vunpack.c.l.b16 %v2499
        %v2577 = vunpack.c.l.b16 %v2500
        %v2578 = vunpack.c.l.b16 %v2501
        %v2579 = vunpack.c.l.b16 %v2502
        %v2580 = vunpack.c.l.b16 %v2503
        %v2581 = vunpack.c.l.b16 %v2504
        %v2582 = vunpack.c.l.b16 %v2505
        %v2583 = vunpack.c.l.b16 %v2506
        %v2584 = vunpack.c.l.b16 %v2507
        %v2585 = vunpack.c.l.b16 %v2508
        %v2586 = vunpack.c.l.b16 %v2509
        %v2587 = vunpack.c.l.b16 %v2510
        %v2588 = vunpack.c.l.b16 %v2511
        %v2589 = vunpack.c.l.b16 %v2512
        %v2590 = vpack.c.b16 %v2559, %v2558
        %v2591 = vpack.c.b16 %v2561, %v2560
        %v2592 = vpack.c.b16 %v2563, %v2562
        %v2593 = vpack.c.b16 %v2565, %v2564
        %v2594 = vpack.c.b16 %v2567, %v2566
        %v2595 = vpack.c.b16 %v2569, %v2568
        %v2596 = vpack.c.b16 %v2571, %v2570
        %v2597 = vpack.c.b16 %v2573, %v2572
        %v2598 = vpack.c.b16 %v2575, %v2574
        %v2599 = vpack.c.b16 %v2577, %v2576
        %v2600 = vpack.c.b16 %v2579, %v2578
        %v2601 = vpack.c.b16 %v2581, %v2580
        %v2602 = vpack.c.b16 %v2583, %v2582
        %v2603 = vpack.c.b16 %v2585, %v2584
        %v2604 = vpack.c.b16 %v2587, %v2586
        %v2605 = vpack.c.b16 %v2589, %v2588
        %v2618 = vunpack.c.l.b16 %v2514
        %v2619 = vunpack.c.l.b16 %v2515
        %v2620 = vunpack.c.l.b16 %v2516
        %v2621 = vunpack.c.l.b16 %v2517
        %v2622 = vunpack.c.l.b16 %v2518
        %v2623 = vunpack.c.l.b16 %v2519
        %v2624 = vunpack.c.l.b16 %v2520
        %v2625 = vunpack.c.l.b16 %v2521
        %v2626 = vunpack.c.l.b16 %v2522
        %v2627 = vunpack.c.l.b16 %v2523
        %v2628 = vunpack.c.l.b16 %v2524
        %v2629 = vunpack.c.l.b16 %v2525
        %v2630 = vpack.c.b16 %v2619, %v2618
        %v2631 = vpack.c.b16 %v2621, %v2620
        %v2632 = vpack.c.b16 %v2623, %v2622
        %v2633 = vpack.c.b16 %v2625, %v2624
        %v2634 = vpack.c.b16 %v2627, %v2626
        %v2635 = vpack.c.b16 %v2629, %v2628
        %v2643 = vsel %vm2311, %v2590, 0
        %v2646 = vsel %vm2311, %v2591, 0
        %v2649 = vsel %vm2311, %v2592, 0
        %v2652 = vsel %vm2311, %v2593, 0
        %v2655 = vsel %vm2311, %v2594, 0
        %v2658 = vsel %vm2311, %v2595, 0
        %v2661 = vsel %vm2311, %v2596, 0
        %v2664 = vsel %vm2311, %v2597, 0
        %v2667 = vsel %vm2311, %v2598, 0
        %v2670 = vsel %vm2311, %v2599, 0
        %v2673 = vsel %vm2311, %v2600, 0
        %v2676 = vsel %vm2311, %v2601, 0
        %v2679 = vsel %vm2311, %v2602, 0
        %v2682 = vsel %vm2311, %v2603, 0
        %v2685 = vsel %vm2311, %v2604, 0
        %v2688 = vsel %vm2311, %v2605, 0
        %2690 = vmatpush.bf16.msra.mxu0 0
        %2691 = vmatpush.bf16.msra.mxu0 0
        %2692 = vmatpush.bf16.msra.mxu0 %v2635
        %2693 = vmatpush.bf16.msra.mxu0 %v2634
        %2694 = vmatpush.bf16.msra.mxu0 %v2633
        %2695 = vmatpush.bf16.msra.mxu0 %v2632
        %2696 = vmatpush.bf16.msra.mxu0 %v2631
        %2697 = vmatpush.bf16.msra.mxu0 %v2630
        %2698 = vmatmul.bf16.gmra.mxu0 %v2643
        %v2699 = vpop.f32.mrf.mxu0
        %v2700 = vadd.f32 0.0, %v2699
        %v2701 = vpop.f32.mrf.mxu0
        %v2702 = vadd.f32 0.0, %v2701
        %2703 = vmatmul.bf16.gmra.mxu0 %v2646
        %v2704 = vpop.f32.mrf.mxu0
        %v2705 = vadd.f32 0.0, %v2704
        %v2706 = vpop.f32.mrf.mxu0
        %v2707 = vadd.f32 0.0, %v2706
        %2708 = vmatmul.bf16.gmra.mxu0 %v2649
        %v2709 = vpop.f32.mrf.mxu0
        %v2710 = vadd.f32 0.0, %v2709
        %v2711 = vpop.f32.mrf.mxu0
        %v2712 = vadd.f32 0.0, %v2711
        %2713 = vmatmul.bf16.gmra.mxu0 %v2652
        %v2714 = vpop.f32.mrf.mxu0
        %v2715 = vadd.f32 0.0, %v2714
        %v2716 = vpop.f32.mrf.mxu0
        %v2717 = vadd.f32 0.0, %v2716
        %2718 = vmatmul.bf16.gmra.mxu0 %v2655
        %v2719 = vpop.f32.mrf.mxu0
        %v2720 = vadd.f32 0.0, %v2719
        %v2721 = vpop.f32.mrf.mxu0
        %v2722 = vadd.f32 0.0, %v2721
        %2723 = vmatmul.bf16.gmra.mxu0 %v2658
        %v2724 = vpop.f32.mrf.mxu0
        %v2725 = vadd.f32 0.0, %v2724
        %v2726 = vpop.f32.mrf.mxu0
        %v2727 = vadd.f32 0.0, %v2726
        %2728 = vmatmul.bf16.gmra.mxu0 %v2661
        %v2729 = vpop.f32.mrf.mxu0
        %v2730 = vadd.f32 0.0, %v2729
        %v2731 = vpop.f32.mrf.mxu0
        %v2732 = vadd.f32 0.0, %v2731
        %2733 = vmatmul.bf16.gmra.mxu0 %v2664
        %v2734 = vpop.f32.mrf.mxu0
        %v2735 = vadd.f32 0.0, %v2734
        %v2736 = vpop.f32.mrf.mxu0
        %v2737 = vadd.f32 0.0, %v2736
        %2738 = vmatmul.bf16.gmra.mxu0 %v2667
        %v2739 = vpop.f32.mrf.mxu0
        %v2740 = vadd.f32 0.0, %v2739
        %v2741 = vpop.f32.mrf.mxu0
        %v2742 = vadd.f32 0.0, %v2741
        %2743 = vmatmul.bf16.gmra.mxu0 %v2670
        %v2744 = vpop.f32.mrf.mxu0
        %v2745 = vadd.f32 0.0, %v2744
        %v2746 = vpop.f32.mrf.mxu0
        %v2747 = vadd.f32 0.0, %v2746
        %2748 = vmatmul.bf16.gmra.mxu0 %v2673
        %v2749 = vpop.f32.mrf.mxu0
        %v2750 = vadd.f32 0.0, %v2749
        %v2751 = vpop.f32.mrf.mxu0
        %v2752 = vadd.f32 0.0, %v2751
        %2753 = vmatmul.bf16.gmra.mxu0 %v2676
        %v2754 = vpop.f32.mrf.mxu0
        %v2755 = vadd.f32 0.0, %v2754
        %v2756 = vpop.f32.mrf.mxu0
        %v2757 = vadd.f32 0.0, %v2756
        %2758 = vmatmul.bf16.gmra.mxu0 %v2679
        %v2759 = vpop.f32.mrf.mxu0
        %v2760 = vadd.f32 0.0, %v2759
        %v2761 = vpop.f32.mrf.mxu0
        %v2762 = vadd.f32 0.0, %v2761
        %2763 = vmatmul.bf16.gmra.mxu0 %v2682
        %v2764 = vpop.f32.mrf.mxu0
        %v2765 = vadd.f32 0.0, %v2764
        %v2766 = vpop.f32.mrf.mxu0
        %v2767 = vadd.f32 0.0, %v2766
        %2768 = vmatmul.bf16.gmra.mxu0 %v2685
        %v2769 = vpop.f32.mrf.mxu0
        %v2770 = vadd.f32 0.0, %v2769
        %v2771 = vpop.f32.mrf.mxu0
        %v2772 = vadd.f32 0.0, %v2771
        %2773 = vmatmul.bf16.gmra.mxu0 %v2688
        %v2774 = vpop.f32.mrf.mxu0
        %v2775 = vadd.f32 0.0, %v2774
        %v2776 = vpop.f32.mrf.mxu0
        %v2777 = vadd.f32 0.0, %v2776
        %2778 = vdwg.mxu0
        %v2779 = vld [vmem:[#allocation5] sm:$0xff]
        %v2780 = vld [vmem:[#allocation5 + $0x8] sm:$0xff]
        %v2781 = vld [vmem:[#allocation5 + $0x10] sm:$0xff]
        %v2782 = vld [vmem:[#allocation5 + $0x18] sm:$0xff]
        %v2783 = vld [vmem:[#allocation5 + $0x20] sm:$0xff]
        %v2784 = vld [vmem:[#allocation5 + $0x28] sm:$0xff]
        %v2785 = vld [vmem:[#allocation5 + $0x30] sm:$0xff]
        %v2786 = vld [vmem:[#allocation5 + $0x38] sm:$0xff]
        %v2787 = vld [vmem:[#allocation5 + $0x40] sm:$0xff]
        %v2788 = vld [vmem:[#allocation5 + $0x48] sm:$0xff]
        %v2789 = vld [vmem:[#allocation5 + $0x50] sm:$0xff]
        %v2790 = vld [vmem:[#allocation5 + $0x58] sm:$0xff]
        %v2791 = vld [vmem:[#allocation5 + $0x60] sm:$0xff]
        %v2792 = vld [vmem:[#allocation5 + $0x68] sm:$0xff]
        %v2793 = vld [vmem:[#allocation5 + $0x70] sm:$0xff]
        %v2794 = vld [vmem:[#allocation5 + $0x78] sm:$0xff]
        %v2795 = vld [vmem:[#allocation5 + $0x80] sm:$0xff]
        %v2796 = vld [vmem:[#allocation5 + $0x88] sm:$0xff]
        %v2797 = vld [vmem:[#allocation5 + $0x90] sm:$0xff]
        %v2798 = vld [vmem:[#allocation5 + $0x98] sm:$0xff]
        %v2799 = vld [vmem:[#allocation5 + $0xa0] sm:$0xff]
        %v2800 = vld [vmem:[#allocation5 + $0xa8] sm:$0xff]
        %v2801 = vld [vmem:[#allocation5 + $0xb0] sm:$0xff]
        %v2802 = vld [vmem:[#allocation5 + $0xb8] sm:$0xff]
        %v2803 = vld [vmem:[#allocation5 + $0xc0] sm:$0xff]
        %v2804 = vld [vmem:[#allocation5 + $0xc8] sm:$0xff]
        %v2805 = vld [vmem:[#allocation5 + $0xd0] sm:$0xff]
        %v2806 = vld [vmem:[#allocation5 + $0xd8] sm:$0xff]
        %v2807 = vld [vmem:[#allocation5 + $0xe0] sm:$0xff]
        %v2808 = vld [vmem:[#allocation5 + $0xe8] sm:$0xff]
        %v2809 = vld [vmem:[#allocation5 + $0xf0] sm:$0xff]
        %v2810 = vld [vmem:[#allocation5 + $0xf8] sm:$0xff]
        %v2811 = vadd.f32 %v2779, %v2700
        %v2812 = vadd.f32 %v2780, %v2702
        %v2813 = vadd.f32 %v2781, %v2705
        %v2814 = vadd.f32 %v2782, %v2707
        %v2815 = vadd.f32 %v2783, %v2710
        %v2816 = vadd.f32 %v2784, %v2712
        %v2817 = vadd.f32 %v2785, %v2715
        %v2818 = vadd.f32 %v2786, %v2717
        %v2819 = vadd.f32 %v2787, %v2720
        %v2820 = vadd.f32 %v2788, %v2722
        %v2821 = vadd.f32 %v2789, %v2725
        %v2822 = vadd.f32 %v2790, %v2727
        %v2823 = vadd.f32 %v2791, %v2730
        %v2824 = vadd.f32 %v2792, %v2732
        %v2825 = vadd.f32 %v2793, %v2735
        %v2826 = vadd.f32 %v2794, %v2737
        %v2827 = vadd.f32 %v2795, %v2740
        %v2828 = vadd.f32 %v2796, %v2742
        %v2829 = vadd.f32 %v2797, %v2745
        %v2830 = vadd.f32 %v2798, %v2747
        %v2831 = vadd.f32 %v2799, %v2750
        %v2832 = vadd.f32 %v2800, %v2752
        %v2833 = vadd.f32 %v2801, %v2755
        %v2834 = vadd.f32 %v2802, %v2757
        %v2835 = vadd.f32 %v2803, %v2760
        %v2836 = vadd.f32 %v2804, %v2762
        %v2837 = vadd.f32 %v2805, %v2765
        %v2838 = vadd.f32 %v2806, %v2767
        %v2839 = vadd.f32 %v2807, %v2770
        %v2840 = vadd.f32 %v2808, %v2772
        %v2841 = vadd.f32 %v2809, %v2775
        %v2842 = vadd.f32 %v2810, %v2777
        %2843 = vst.msk [vmem:[#allocation5] sm:$0xff] %vm570, %v2811
        %2844 = vst.msk [vmem:[#allocation5 + $0x8] sm:$0xff] %vm570, %v2812
        %2845 = vst.msk [vmem:[#allocation5 + $0x10] sm:$0xff] %vm570, %v2813
        %2846 = vst.msk [vmem:[#allocation5 + $0x18] sm:$0xff] %vm570, %v2814
        %2847 = vst.msk [vmem:[#allocation5 + $0x20] sm:$0xff] %vm570, %v2815
        %2848 = vst.msk [vmem:[#allocation5 + $0x28] sm:$0xff] %vm570, %v2816
        %2849 = vst.msk [vmem:[#allocation5 + $0x30] sm:$0xff] %vm570, %v2817
        %2850 = vst.msk [vmem:[#allocation5 + $0x38] sm:$0xff] %vm570, %v2818
        %2851 = vst.msk [vmem:[#allocation5 + $0x40] sm:$0xff] %vm570, %v2819
        %2852 = vst.msk [vmem:[#allocation5 + $0x48] sm:$0xff] %vm570, %v2820
        %2853 = vst.msk [vmem:[#allocation5 + $0x50] sm:$0xff] %vm570, %v2821
        %2854 = vst.msk [vmem:[#allocation5 + $0x58] sm:$0xff] %vm570, %v2822
        %2855 = vst.msk [vmem:[#allocation5 + $0x60] sm:$0xff] %vm570, %v2823
        %2856 = vst.msk [vmem:[#allocation5 + $0x68] sm:$0xff] %vm570, %v2824
        %2857 = vst.msk [vmem:[#allocation5 + $0x70] sm:$0xff] %vm570, %v2825
        %2858 = vst.msk [vmem:[#allocation5 + $0x78] sm:$0xff] %vm570, %v2826
        %2859 = vst.msk [vmem:[#allocation5 + $0x80] sm:$0xff] %vm570, %v2827
        %2860 = vst.msk [vmem:[#allocation5 + $0x88] sm:$0xff] %vm570, %v2828
        %2861 = vst.msk [vmem:[#allocation5 + $0x90] sm:$0xff] %vm570, %v2829
        %2862 = vst.msk [vmem:[#allocation5 + $0x98] sm:$0xff] %vm570, %v2830
        %2863 = vst.msk [vmem:[#allocation5 + $0xa0] sm:$0xff] %vm570, %v2831
        %2864 = vst.msk [vmem:[#allocation5 + $0xa8] sm:$0xff] %vm570, %v2832
        %2865 = vst.msk [vmem:[#allocation5 + $0xb0] sm:$0xff] %vm570, %v2833
        %2866 = vst.msk [vmem:[#allocation5 + $0xb8] sm:$0xff] %vm570, %v2834
        %2867 = vst.msk [vmem:[#allocation5 + $0xc0] sm:$0xff] %vm570, %v2835
        %2868 = vst.msk [vmem:[#allocation5 + $0xc8] sm:$0xff] %vm570, %v2836
        %2869 = vst.msk [vmem:[#allocation5 + $0xd0] sm:$0xff] %vm570, %v2837
        %2870 = vst.msk [vmem:[#allocation5 + $0xd8] sm:$0xff] %vm570, %v2838
        %2871 = vst.msk [vmem:[#allocation5 + $0xe0] sm:$0xff] %vm570, %v2839
        %2872 = vst.msk [vmem:[#allocation5 + $0xe8] sm:$0xff] %vm570, %v2840
        %2873 = vst.msk [vmem:[#allocation5 + $0xf0] sm:$0xff] %vm570, %v2841
        %2874 = vst.msk [vmem:[#allocation5 + $0xf8] sm:$0xff] %vm570, %v2842
        %s2875 = scalar_lea.vmem [#allocation4], 16
        %v2876 = vld [vmem:[%s2875] sm:$0xf]
        %v2877 = vld [vmem:[%s2875 + $0x4] sm:$0xf]
        %v2878 = vld [vmem:[%s2875 + $0x8] sm:$0xf]
        %v2879 = vld [vmem:[%s2875 + $0xc] sm:$0xf]
        %v2880 = vld [vmem:[%s2875 + $0x10] sm:$0xf]
        %v2881 = vld [vmem:[%s2875 + $0x14] sm:$0xf]
        %v2882 = vld [vmem:[%s2875 + $0x18] sm:$0xf]
        %v2883 = vld [vmem:[%s2875 + $0x1c] sm:$0xf]
        %v2884 = vld [vmem:[%s2875 + $0x20] sm:$0xf]
        %v2885 = vld [vmem:[%s2875 + $0x24] sm:$0xf]
        %v2886 = vld [vmem:[%s2875 + $0x28] sm:$0xf]
        %v2887 = vld [vmem:[%s2875 + $0x2c] sm:$0xf]
        %v2888 = vld [vmem:[%s2875 + $0x30] sm:$0xf]
        %v2889 = vld [vmem:[%s2875 + $0x34] sm:$0xf]
        %v2890 = vld [vmem:[%s2875 + $0x38] sm:$0xf]
        %v2891 = vld [vmem:[%s2875 + $0x3c] sm:$0xf]
        %v2892 = vld [vmem:[%s2875 + $0x40] sm:$0xf]
        %v2893 = vld [vmem:[%s2875 + $0x44] sm:$0xf]
        %v2894 = vld [vmem:[%s2875 + $0x48] sm:$0xf]
        %v2895 = vld [vmem:[%s2875 + $0x4c] sm:$0xf]
        %v2896 = vld [vmem:[%s2875 + $0x50] sm:$0xf]
        %v2897 = vld [vmem:[%s2875 + $0x54] sm:$0xf]
        %v2898 = vld [vmem:[%s2875 + $0x58] sm:$0xf]
        %v2899 = vld [vmem:[%s2875 + $0x5c] sm:$0xf]
        %v2900 = vld [vmem:[%s2875 + $0x60] sm:$0xf]
        %v2901 = vld [vmem:[%s2875 + $0x64] sm:$0xf]
        %v2902 = vld [vmem:[%s2875 + $0x68] sm:$0xf]
        %v2903 = vld [vmem:[%s2875 + $0x6c] sm:$0xf]
        %v2904 = vld [vmem:[%s2875 + $0x70] sm:$0xf]
        %v2905 = vld [vmem:[%s2875 + $0x74] sm:$0xf]
        %v2906 = vld [vmem:[%s2875 + $0x78] sm:$0xf]
        %v2907 = vld [vmem:[%s2875 + $0x7c] sm:$0xf]
        %s2908 = scalar_lea.vmem %s6, 96
        %v2909 = vld [vmem:[%s2908] sm:$0xf]
        %v2910 = vld [vmem:[%s2908 + $0x4] sm:$0xf]
        %v2911 = vld [vmem:[%s2908 + $0x8] sm:$0xf]
        %v2912 = vld [vmem:[%s2908 + $0xc] sm:$0xf]
        %v2913 = vld [vmem:[%s2908 + $0x10] sm:$0xf]
        %v2914 = vld [vmem:[%s2908 + $0x14] sm:$0xf]
        %v2915 = vld [vmem:[%s2908 + $0x18] sm:$0xf]
        %v2916 = vld [vmem:[%s2908 + $0x1c] sm:$0xf]
        %v2917 = vld [vmem:[%s2908 + $0x20] sm:$0xf]
        %v2918 = vld [vmem:[%s2908 + $0x24] sm:$0xf]
        %v2919 = vld [vmem:[%s2908 + $0x28] sm:$0xf]
        %v2920 = vld [vmem:[%s2908 + $0x2c] sm:$0xf]
        %v2953 = vunpack.c.l.b16 %v2876
        %v2954 = vunpack.c.l.b16 %v2877
        %v2955 = vunpack.c.l.b16 %v2878
        %v2956 = vunpack.c.l.b16 %v2879
        %v2957 = vunpack.c.l.b16 %v2880
        %v2958 = vunpack.c.l.b16 %v2881
        %v2959 = vunpack.c.l.b16 %v2882
        %v2960 = vunpack.c.l.b16 %v2883
        %v2961 = vunpack.c.l.b16 %v2884
        %v2962 = vunpack.c.l.b16 %v2885
        %v2963 = vunpack.c.l.b16 %v2886
        %v2964 = vunpack.c.l.b16 %v2887
        %v2965 = vunpack.c.l.b16 %v2888
        %v2966 = vunpack.c.l.b16 %v2889
        %v2967 = vunpack.c.l.b16 %v2890
        %v2968 = vunpack.c.l.b16 %v2891
        %v2969 = vunpack.c.l.b16 %v2892
        %v2970 = vunpack.c.l.b16 %v2893
        %v2971 = vunpack.c.l.b16 %v2894
        %v2972 = vunpack.c.l.b16 %v2895
        %v2973 = vunpack.c.l.b16 %v2896
        %v2974 = vunpack.c.l.b16 %v2897
        %v2975 = vunpack.c.l.b16 %v2898
        %v2976 = vunpack.c.l.b16 %v2899
        %v2977 = vunpack.c.l.b16 %v2900
        %v2978 = vunpack.c.l.b16 %v2901
        %v2979 = vunpack.c.l.b16 %v2902
        %v2980 = vunpack.c.l.b16 %v2903
        %v2981 = vunpack.c.l.b16 %v2904
        %v2982 = vunpack.c.l.b16 %v2905
        %v2983 = vunpack.c.l.b16 %v2906
        %v2984 = vunpack.c.l.b16 %v2907
        %v2985 = vpack.c.b16 %v2954, %v2953
        %v2986 = vpack.c.b16 %v2956, %v2955
        %v2987 = vpack.c.b16 %v2958, %v2957
        %v2988 = vpack.c.b16 %v2960, %v2959
        %v2989 = vpack.c.b16 %v2962, %v2961
        %v2990 = vpack.c.b16 %v2964, %v2963
        %v2991 = vpack.c.b16 %v2966, %v2965
        %v2992 = vpack.c.b16 %v2968, %v2967
        %v2993 = vpack.c.b16 %v2970, %v2969
        %v2994 = vpack.c.b16 %v2972, %v2971
        %v2995 = vpack.c.b16 %v2974, %v2973
        %v2996 = vpack.c.b16 %v2976, %v2975
        %v2997 = vpack.c.b16 %v2978, %v2977
        %v2998 = vpack.c.b16 %v2980, %v2979
        %v2999 = vpack.c.b16 %v2982, %v2981
        %v3000 = vpack.c.b16 %v2984, %v2983
        %v3013 = vunpack.c.l.b16 %v2909
        %v3014 = vunpack.c.l.b16 %v2910
        %v3015 = vunpack.c.l.b16 %v2911
        %v3016 = vunpack.c.l.b16 %v2912
        %v3017 = vunpack.c.l.b16 %v2913
        %v3018 = vunpack.c.l.b16 %v2914
        %v3019 = vunpack.c.l.b16 %v2915
        %v3020 = vunpack.c.l.b16 %v2916
        %v3021 = vunpack.c.l.b16 %v2917
        %v3022 = vunpack.c.l.b16 %v2918
        %v3023 = vunpack.c.l.b16 %v2919
        %v3024 = vunpack.c.l.b16 %v2920
        %v3025 = vpack.c.b16 %v3014, %v3013
        %v3026 = vpack.c.b16 %v3016, %v3015
        %v3027 = vpack.c.b16 %v3018, %v3017
        %v3028 = vpack.c.b16 %v3020, %v3019
        %v3029 = vpack.c.b16 %v3022, %v3021
        %v3030 = vpack.c.b16 %v3024, %v3023
        %v3038 = vsel %vm2311, %v2985, 0
        %v3041 = vsel %vm2311, %v2986, 0
        %v3044 = vsel %vm2311, %v2987, 0
        %v3047 = vsel %vm2311, %v2988, 0
        %v3050 = vsel %vm2311, %v2989, 0
        %v3053 = vsel %vm2311, %v2990, 0
        %v3056 = vsel %vm2311, %v2991, 0
        %v3059 = vsel %vm2311, %v2992, 0
        %v3062 = vsel %vm2311, %v2993, 0
        %v3065 = vsel %vm2311, %v2994, 0
        %v3068 = vsel %vm2311, %v2995, 0
        %v3071 = vsel %vm2311, %v2996, 0
        %v3074 = vsel %vm2311, %v2997, 0
        %v3077 = vsel %vm2311, %v2998, 0
        %v3080 = vsel %vm2311, %v2999, 0
        %v3083 = vsel %vm2311, %v3000, 0
        %3085 = vmatpush.bf16.msra.mxu0 0
        %3086 = vmatpush.bf16.msra.mxu0 0
        %3087 = vmatpush.bf16.msra.mxu0 %v3030
        %3088 = vmatpush.bf16.msra.mxu0 %v3029
        %3089 = vmatpush.bf16.msra.mxu0 %v3028
        %3090 = vmatpush.bf16.msra.mxu0 %v3027
        %3091 = vmatpush.bf16.msra.mxu0 %v3026
        %3092 = vmatpush.bf16.msra.mxu0 %v3025
        %3093 = vmatmul.bf16.gmra.mxu0 %v3038
        %v3094 = vpop.f32.mrf.mxu0
        %v3095 = vadd.f32 0.0, %v3094
        %v3096 = vpop.f32.mrf.mxu0
        %v3097 = vadd.f32 0.0, %v3096
        %3098 = vmatmul.bf16.gmra.mxu0 %v3041
        %v3099 = vpop.f32.mrf.mxu0
        %v3100 = vadd.f32 0.0, %v3099
        %v3101 = vpop.f32.mrf.mxu0
        %v3102 = vadd.f32 0.0, %v3101
        %3103 = vmatmul.bf16.gmra.mxu0 %v3044
        %v3104 = vpop.f32.mrf.mxu0
        %v3105 = vadd.f32 0.0, %v3104
        %v3106 = vpop.f32.mrf.mxu0
        %v3107 = vadd.f32 0.0, %v3106
        %3108 = vmatmul.bf16.gmra.mxu0 %v3047
        %v3109 = vpop.f32.mrf.mxu0
        %v3110 = vadd.f32 0.0, %v3109
        %v3111 = vpop.f32.mrf.mxu0
        %v3112 = vadd.f32 0.0, %v3111
        %3113 = vmatmul.bf16.gmra.mxu0 %v3050
        %v3114 = vpop.f32.mrf.mxu0
        %v3115 = vadd.f32 0.0, %v3114
        %v3116 = vpop.f32.mrf.mxu0
        %v3117 = vadd.f32 0.0, %v3116
        %3118 = vmatmul.bf16.gmra.mxu0 %v3053
        %v3119 = vpop.f32.mrf.mxu0
        %v3120 = vadd.f32 0.0, %v3119
        %v3121 = vpop.f32.mrf.mxu0
        %v3122 = vadd.f32 0.0, %v3121
        %3123 = vmatmul.bf16.gmra.mxu0 %v3056
        %v3124 = vpop.f32.mrf.mxu0
        %v3125 = vadd.f32 0.0, %v3124
        %v3126 = vpop.f32.mrf.mxu0
        %v3127 = vadd.f32 0.0, %v3126
        %3128 = vmatmul.bf16.gmra.mxu0 %v3059
        %v3129 = vpop.f32.mrf.mxu0
        %v3130 = vadd.f32 0.0, %v3129
        %v3131 = vpop.f32.mrf.mxu0
        %v3132 = vadd.f32 0.0, %v3131
        %3133 = vmatmul.bf16.gmra.mxu0 %v3062
        %v3134 = vpop.f32.mrf.mxu0
        %v3135 = vadd.f32 0.0, %v3134
        %v3136 = vpop.f32.mrf.mxu0
        %v3137 = vadd.f32 0.0, %v3136
        %3138 = vmatmul.bf16.gmra.mxu0 %v3065
        %v3139 = vpop.f32.mrf.mxu0
        %v3140 = vadd.f32 0.0, %v3139
        %v3141 = vpop.f32.mrf.mxu0
        %v3142 = vadd.f32 0.0, %v3141
        %3143 = vmatmul.bf16.gmra.mxu0 %v3068
        %v3144 = vpop.f32.mrf.mxu0
        %v3145 = vadd.f32 0.0, %v3144
        %v3146 = vpop.f32.mrf.mxu0
        %v3147 = vadd.f32 0.0, %v3146
        %3148 = vmatmul.bf16.gmra.mxu0 %v3071
        %v3149 = vpop.f32.mrf.mxu0
        %v3150 = vadd.f32 0.0, %v3149
        %v3151 = vpop.f32.mrf.mxu0
        %v3152 = vadd.f32 0.0, %v3151
        %3153 = vmatmul.bf16.gmra.mxu0 %v3074
        %v3154 = vpop.f32.mrf.mxu0
        %v3155 = vadd.f32 0.0, %v3154
        %v3156 = vpop.f32.mrf.mxu0
        %v3157 = vadd.f32 0.0, %v3156
        %3158 = vmatmul.bf16.gmra.mxu0 %v3077
        %v3159 = vpop.f32.mrf.mxu0
        %v3160 = vadd.f32 0.0, %v3159
        %v3161 = vpop.f32.mrf.mxu0
        %v3162 = vadd.f32 0.0, %v3161
        %3163 = vmatmul.bf16.gmra.mxu0 %v3080
        %v3164 = vpop.f32.mrf.mxu0
        %v3165 = vadd.f32 0.0, %v3164
        %v3166 = vpop.f32.mrf.mxu0
        %v3167 = vadd.f32 0.0, %v3166
        %3168 = vmatmul.bf16.gmra.mxu0 %v3083
        %v3169 = vpop.f32.mrf.mxu0
        %v3170 = vadd.f32 0.0, %v3169
        %v3171 = vpop.f32.mrf.mxu0
        %v3172 = vadd.f32 0.0, %v3171
        %3173 = vdwg.mxu0
        %v3174 = vld [vmem:[#allocation5] sm:$0xff]
        %v3175 = vld [vmem:[#allocation5 + $0x8] sm:$0xff]
        %v3176 = vld [vmem:[#allocation5 + $0x10] sm:$0xff]
        %v3177 = vld [vmem:[#allocation5 + $0x18] sm:$0xff]
        %v3178 = vld [vmem:[#allocation5 + $0x20] sm:$0xff]
        %v3179 = vld [vmem:[#allocation5 + $0x28] sm:$0xff]
        %v3180 = vld [vmem:[#allocation5 + $0x30] sm:$0xff]
        %v3181 = vld [vmem:[#allocation5 + $0x38] sm:$0xff]
        %v3182 = vld [vmem:[#allocation5 + $0x40] sm:$0xff]
        %v3183 = vld [vmem:[#allocation5 + $0x48] sm:$0xff]
        %v3184 = vld [vmem:[#allocation5 + $0x50] sm:$0xff]
        %v3185 = vld [vmem:[#allocation5 + $0x58] sm:$0xff]
        %v3186 = vld [vmem:[#allocation5 + $0x60] sm:$0xff]
        %v3187 = vld [vmem:[#allocation5 + $0x68] sm:$0xff]
        %v3188 = vld [vmem:[#allocation5 + $0x70] sm:$0xff]
        %v3189 = vld [vmem:[#allocation5 + $0x78] sm:$0xff]
        %v3190 = vld [vmem:[#allocation5 + $0x80] sm:$0xff]
        %v3191 = vld [vmem:[#allocation5 + $0x88] sm:$0xff]
        %v3192 = vld [vmem:[#allocation5 + $0x90] sm:$0xff]
        %v3193 = vld [vmem:[#allocation5 + $0x98] sm:$0xff]
        %v3194 = vld [vmem:[#allocation5 + $0xa0] sm:$0xff]
        %v3195 = vld [vmem:[#allocation5 + $0xa8] sm:$0xff]
        %v3196 = vld [vmem:[#allocation5 + $0xb0] sm:$0xff]
        %v3197 = vld [vmem:[#allocation5 + $0xb8] sm:$0xff]
        %v3198 = vld [vmem:[#allocation5 + $0xc0] sm:$0xff]
        %v3199 = vld [vmem:[#allocation5 + $0xc8] sm:$0xff]
        %v3200 = vld [vmem:[#allocation5 + $0xd0] sm:$0xff]
        %v3201 = vld [vmem:[#allocation5 + $0xd8] sm:$0xff]
        %v3202 = vld [vmem:[#allocation5 + $0xe0] sm:$0xff]
        %v3203 = vld [vmem:[#allocation5 + $0xe8] sm:$0xff]
        %v3204 = vld [vmem:[#allocation5 + $0xf0] sm:$0xff]
        %v3205 = vld [vmem:[#allocation5 + $0xf8] sm:$0xff]
        %v3206 = vadd.f32 %v3174, %v3095
        %v3207 = vadd.f32 %v3175, %v3097
        %v3208 = vadd.f32 %v3176, %v3100
        %v3209 = vadd.f32 %v3177, %v3102
        %v3210 = vadd.f32 %v3178, %v3105
        %v3211 = vadd.f32 %v3179, %v3107
        %v3212 = vadd.f32 %v3180, %v3110
        %v3213 = vadd.f32 %v3181, %v3112
        %v3214 = vadd.f32 %v3182, %v3115
        %v3215 = vadd.f32 %v3183, %v3117
        %v3216 = vadd.f32 %v3184, %v3120
        %v3217 = vadd.f32 %v3185, %v3122
        %v3218 = vadd.f32 %v3186, %v3125
        %v3219 = vadd.f32 %v3187, %v3127
        %v3220 = vadd.f32 %v3188, %v3130
        %v3221 = vadd.f32 %v3189, %v3132
        %v3222 = vadd.f32 %v3190, %v3135
        %v3223 = vadd.f32 %v3191, %v3137
        %v3224 = vadd.f32 %v3192, %v3140
        %v3225 = vadd.f32 %v3193, %v3142
        %v3226 = vadd.f32 %v3194, %v3145
        %v3227 = vadd.f32 %v3195, %v3147
        %v3228 = vadd.f32 %v3196, %v3150
        %v3229 = vadd.f32 %v3197, %v3152
        %v3230 = vadd.f32 %v3198, %v3155
        %v3231 = vadd.f32 %v3199, %v3157
        %v3232 = vadd.f32 %v3200, %v3160
        %v3233 = vadd.f32 %v3201, %v3162
        %v3234 = vadd.f32 %v3202, %v3165
        %v3235 = vadd.f32 %v3203, %v3167
        %v3236 = vadd.f32 %v3204, %v3170
        %v3237 = vadd.f32 %v3205, %v3172
        %3238 = vst.msk [vmem:[#allocation5] sm:$0xff] %vm570, %v3206
        %3239 = vst.msk [vmem:[#allocation5 + $0x8] sm:$0xff] %vm570, %v3207
        %3240 = vst.msk [vmem:[#allocation5 + $0x10] sm:$0xff] %vm570, %v3208
        %3241 = vst.msk [vmem:[#allocation5 + $0x18] sm:$0xff] %vm570, %v3209
        %3242 = vst.msk [vmem:[#allocation5 + $0x20] sm:$0xff] %vm570, %v3210
        %3243 = vst.msk [vmem:[#allocation5 + $0x28] sm:$0xff] %vm570, %v3211
        %3244 = vst.msk [vmem:[#allocation5 + $0x30] sm:$0xff] %vm570, %v3212
        %3245 = vst.msk [vmem:[#allocation5 + $0x38] sm:$0xff] %vm570, %v3213
        %3246 = vst.msk [vmem:[#allocation5 + $0x40] sm:$0xff] %vm570, %v3214
        %3247 = vst.msk [vmem:[#allocation5 + $0x48] sm:$0xff] %vm570, %v3215
        %3248 = vst.msk [vmem:[#allocation5 + $0x50] sm:$0xff] %vm570, %v3216
        %3249 = vst.msk [vmem:[#allocation5 + $0x58] sm:$0xff] %vm570, %v3217
        %3250 = vst.msk [vmem:[#allocation5 + $0x60] sm:$0xff] %vm570, %v3218
        %3251 = vst.msk [vmem:[#allocation5 + $0x68] sm:$0xff] %vm570, %v3219
        %3252 = vst.msk [vmem:[#allocation5 + $0x70] sm:$0xff] %vm570, %v3220
        %3253 = vst.msk [vmem:[#allocation5 + $0x78] sm:$0xff] %vm570, %v3221
        %3254 = vst.msk [vmem:[#allocation5 + $0x80] sm:$0xff] %vm570, %v3222
        %3255 = vst.msk [vmem:[#allocation5 + $0x88] sm:$0xff] %vm570, %v3223
        %3256 = vst.msk [vmem:[#allocation5 + $0x90] sm:$0xff] %vm570, %v3224
        %3257 = vst.msk [vmem:[#allocation5 + $0x98] sm:$0xff] %vm570, %v3225
        %3258 = vst.msk [vmem:[#allocation5 + $0xa0] sm:$0xff] %vm570, %v3226
        %3259 = vst.msk [vmem:[#allocation5 + $0xa8] sm:$0xff] %vm570, %v3227
        %3260 = vst.msk [vmem:[#allocation5 + $0xb0] sm:$0xff] %vm570, %v3228
        %3261 = vst.msk [vmem:[#allocation5 + $0xb8] sm:$0xff] %vm570, %v3229
        %3262 = vst.msk [vmem:[#allocation5 + $0xc0] sm:$0xff] %vm570, %v3230
        %3263 = vst.msk [vmem:[#allocation5 + $0xc8] sm:$0xff] %vm570, %v3231
        %3264 = vst.msk [vmem:[#allocation5 + $0xd0] sm:$0xff] %vm570, %v3232
        %3265 = vst.msk [vmem:[#allocation5 + $0xd8] sm:$0xff] %vm570, %v3233
        %3266 = vst.msk [vmem:[#allocation5 + $0xe0] sm:$0xff] %vm570, %v3234
        %3267 = vst.msk [vmem:[#allocation5 + $0xe8] sm:$0xff] %vm570, %v3235
        %3268 = vst.msk [vmem:[#allocation5 + $0xf0] sm:$0xff] %vm570, %v3236
        %3269 = vst.msk [vmem:[#allocation5 + $0xf8] sm:$0xff] %vm570, %v3237
        %v3270 = vld [vmem:[#allocation5] sm:$0xff]
        %v3271 = vld [vmem:[#allocation5 + $0x8] sm:$0xff]
        %v3272 = vld [vmem:[#allocation5 + $0x10] sm:$0xff]
        %v3273 = vld [vmem:[#allocation5 + $0x18] sm:$0xff]
        %v3274 = vld [vmem:[#allocation5 + $0x20] sm:$0xff]
        %v3275 = vld [vmem:[#allocation5 + $0x28] sm:$0xff]
        %v3276 = vld [vmem:[#allocation5 + $0x30] sm:$0xff]
        %v3277 = vld [vmem:[#allocation5 + $0x38] sm:$0xff]
        %v3278 = vld [vmem:[#allocation5 + $0x40] sm:$0xff]
        %v3279 = vld [vmem:[#allocation5 + $0x48] sm:$0xff]
        %v3280 = vld [vmem:[#allocation5 + $0x50] sm:$0xff]
        %v3281 = vld [vmem:[#allocation5 + $0x58] sm:$0xff]
        %v3282 = vld [vmem:[#allocation5 + $0x60] sm:$0xff]
        %v3283 = vld [vmem:[#allocation5 + $0x68] sm:$0xff]
        %v3284 = vld [vmem:[#allocation5 + $0x70] sm:$0xff]
        %v3285 = vld [vmem:[#allocation5 + $0x78] sm:$0xff]
        %v3286 = vld [vmem:[#allocation5 + $0x80] sm:$0xff]
        %v3287 = vld [vmem:[#allocation5 + $0x88] sm:$0xff]
        %v3288 = vld [vmem:[#allocation5 + $0x90] sm:$0xff]
        %v3289 = vld [vmem:[#allocation5 + $0x98] sm:$0xff]
        %v3290 = vld [vmem:[#allocation5 + $0xa0] sm:$0xff]
        %v3291 = vld [vmem:[#allocation5 + $0xa8] sm:$0xff]
        %v3292 = vld [vmem:[#allocation5 + $0xb0] sm:$0xff]
        %v3293 = vld [vmem:[#allocation5 + $0xb8] sm:$0xff]
        %v3294 = vld [vmem:[#allocation5 + $0xc0] sm:$0xff]
        %v3295 = vld [vmem:[#allocation5 + $0xc8] sm:$0xff]
        %v3296 = vld [vmem:[#allocation5 + $0xd0] sm:$0xff]
        %v3297 = vld [vmem:[#allocation5 + $0xd8] sm:$0xff]
        %v3298 = vld [vmem:[#allocation5 + $0xe0] sm:$0xff]
        %v3299 = vld [vmem:[#allocation5 + $0xe8] sm:$0xff]
        %v3300 = vld [vmem:[#allocation5 + $0xf0] sm:$0xff]
        %v3301 = vld [vmem:[#allocation5 + $0xf8] sm:$0xff]
        %3302 = vst.msk [vmem:[%s346] sm:$0xff] %vm570, %v3270
        %3303 = vst.msk [vmem:[%s346 + $0x8] sm:$0xff] %vm570, %v3271
        %3304 = vst.msk [vmem:[%s346 + $0x10] sm:$0xff] %vm570, %v3272
        %3305 = vst.msk [vmem:[%s346 + $0x18] sm:$0xff] %vm570, %v3273
        %3306 = vst.msk [vmem:[%s346 + $0x20] sm:$0xff] %vm570, %v3274
        %3307 = vst.msk [vmem:[%s346 + $0x28] sm:$0xff] %vm570, %v3275
        %3308 = vst.msk [vmem:[%s346 + $0x30] sm:$0xff] %vm570, %v3276
        %3309 = vst.msk [vmem:[%s346 + $0x38] sm:$0xff] %vm570, %v3277
        %3310 = vst.msk [vmem:[%s346 + $0x40] sm:$0xff] %vm570, %v3278
        %3311 = vst.msk [vmem:[%s346 + $0x48] sm:$0xff] %vm570, %v3279
        %3312 = vst.msk [vmem:[%s346 + $0x50] sm:$0xff] %vm570, %v3280
        %3313 = vst.msk [vmem:[%s346 + $0x58] sm:$0xff] %vm570, %v3281
        %3314 = vst.msk [vmem:[%s346 + $0x60] sm:$0xff] %vm570, %v3282
        %3315 = vst.msk [vmem:[%s346 + $0x68] sm:$0xff] %vm570, %v3283
        %3316 = vst.msk [vmem:[%s346 + $0x70] sm:$0xff] %vm570, %v3284
        %3317 = vst.msk [vmem:[%s346 + $0x78] sm:$0xff] %vm570, %v3285
        %3318 = vst.msk [vmem:[%s346 + $0x80] sm:$0xff] %vm570, %v3286
        %3319 = vst.msk [vmem:[%s346 + $0x88] sm:$0xff] %vm570, %v3287
        %3320 = vst.msk [vmem:[%s346 + $0x90] sm:$0xff] %vm570, %v3288
        %3321 = vst.msk [vmem:[%s346 + $0x98] sm:$0xff] %vm570, %v3289
        %3322 = vst.msk [vmem:[%s346 + $0xa0] sm:$0xff] %vm570, %v3290
        %3323 = vst.msk [vmem:[%s346 + $0xa8] sm:$0xff] %vm570, %v3291
        %3324 = vst.msk [vmem:[%s346 + $0xb0] sm:$0xff] %vm570, %v3292
        %3325 = vst.msk [vmem:[%s346 + $0xb8] sm:$0xff] %vm570, %v3293
        %3326 = vst.msk [vmem:[%s346 + $0xc0] sm:$0xff] %vm570, %v3294
        %3327 = vst.msk [vmem:[%s346 + $0xc8] sm:$0xff] %vm570, %v3295
        %3328 = vst.msk [vmem:[%s346 + $0xd0] sm:$0xff] %vm570, %v3296
        %3329 = vst.msk [vmem:[%s346 + $0xd8] sm:$0xff] %vm570, %v3297
        %3330 = vst.msk [vmem:[%s346 + $0xe0] sm:$0xff] %vm570, %v3298
        %3331 = vst.msk [vmem:[%s346 + $0xe8] sm:$0xff] %vm570, %v3299
        %3332 = vst.msk [vmem:[%s346 + $0xf0] sm:$0xff] %vm570, %v3300
        %3333 = vst.msk [vmem:[%s346 + $0xf8] sm:$0xff] %vm570, %v3301
      $region56: #{tpu_custom_call.1} parent=47 // pred_fallthru
        _
      %p3334 = scmp.lt.s32.totalorder %s22, 1
      %s3335 = scalar_select %p3334, %s22, 1
      %s3336 = smul.addr %s3335, 32
      %s3337 = smul.addr %s3336, 8
      %s3338 = scalar_lea.vmem %s7, %s3337
      // Predicated region
      $region57: #{tpu_custom_call.1} parent=47 // pred_check
        %p3339 = pneg %p217
      $region58: #{tpu_custom_call.1} parent=47 // pred_check_branch
        %3341 = sbr.rel (%p3339) target = $region60
      $region59: #{tpu_custom_call.1} parent=47 // pred_region
        _
      $region60: #{tpu_custom_call.1} parent=47 // pred_fallthru
        _
    $region48: #{tpu_custom_call.1} parent=5 // pred_fallthru
      _
    %p3342 = scmp.le.s32.totalorder 2, %s13
    // Predicated region
    $region61: #{tpu_custom_call.1} parent=5 // pred_check
      %p3343 = pneg %p3342
    $region62: #{tpu_custom_call.1} parent=5 // pred_check_branch
      %3345 = sbr.rel (%p3343) target = $region64
    $region63: #{tpu_custom_call.1} parent=5 // pred_region
      %s3346 = ssub.s32 %s13, 2
      // Predicated region
      $region65: #{tpu_custom_call.1} parent=63 // pred_check
        %p3347 = pneg %p223
      $region66: #{tpu_custom_call.1} parent=63 // pred_check_branch
        %3349 = sbr.rel (%p3347) target = $region68
      $region67: #{tpu_custom_call.1} parent=63 // pred_region
        %p3350 = scmp.lt.s32.totalorder %s24, 1
        %s3351 = scalar_select %p3350, %s24, 1
        %s3352 = smul.addr %s3351, 32
        %s3353 = smul.addr %s3352, 8
        %s3354 = scalar_lea.vmem %s7, %s3353
      $region68: #{tpu_custom_call.1} parent=63 // pred_fallthru
        _
    $region64: #{tpu_custom_call.1} parent=5 // pred_fallthru
      _
  $region6: #{tpu_custom_call.1} parent=0 // loop_footer
    %s17 = sadd.s32 1, %s13
  $region7: #{tpu_custom_call.1} parent=0 // loop_footer_branch
    %12 = sbr.rel target = $region3
  $region8: #{tpu_custom_call.1} parent=0 // loop_exit
    _

</llo_original>
